<compile_context>
chip_gen: v7x
topology: tpu7x:2x2x1
jax: 0.10.0
libtpu: 0.0.40
codegen_flags: <defaults>
</compile_context>

<pallas_src>
import functools

import jax
import jax.numpy as jnp
from jax.experimental import pallas as pl
from jax.experimental.pallas import tpu as pltpu

BN_EPS = 1e-5


def _round_up(x, m):
    return (x + m - 1) // m * m


def _vmem_budget_bytes():
    """Generation-aware VMEM budget: ~3/4 of physical (48 MiB v7x, 96 MiB v5e/v6e)."""
    cap = 64 * 1024 * 1024
    try:
        info = pltpu.get_tpu_info()
        cap = int(getattr(info, "vmem_capacity_bytes", cap))
    except Exception:
        pass
    return max(16 * 1024 * 1024, (cap * 3) // 4)


def _step_vmem_bytes(th, wo, cin, cout_pad):
    """Conservative per-grid-step VMEM footprint model (cin/cout aware)."""
    band = 2 * (6 * cin * th * (wo + 1) * 2)   # bf16 band block, double buffered
    wgt = 2 * (9 * cout_pad * cin * 2)         # bf16 weights, double buffered
    outb = 2 * (cout_pad * th * wo * 4)        # f32 output block, double buffered
    acc = cout_pad * th * wo * 4               # f32 conv accumulator
    taps = 3 * (cin * th * wo * 2)             # live bf16 tap copies (estimate)
    return band + wgt + outb + acc + taps + (2 << 20)


def _pick_tile_rows(ho, wo, cin, cout_pad, n, budget):
    """Largest legal output-row tile that fits the VMEM budget.

    Legality: th == ho (single tile) or (th % 8 == 0 and (th*wo) % 128 == 0), so
    that block dims are (8,128)-friendly and the output stores stay lane-dense.
    """
    cands = [ho]
    t = 8
    while t < ho:
        if (t * wo) % 128 == 0:
            cands.append(t)
        t += 8
    cands = sorted(set(cands), reverse=True)
    fitting = [t for t in cands if _step_vmem_bytes(t, wo, cin, cout_pad) <= budget]
    if not fitting:
        return cands[-1]  # best effort: smallest legal tile

    def key(t):
        n_t = -(-ho // t)
        waste = n_t * t - ho      # padded rows (prefer none)
        return (waste, -t)        # then prefer the biggest tile

    if n == 1:
        # Guarantee >= 2 grid steps so both v7x TensorCores get work (no-op on v5e/v6e).
        multi = [t for t in fitting if -(-ho // t) >= 2]
        if multi:
            return min(multi, key=key)
    return min(fitting, key=key)


def _conv_tile(band_ref, w_ref, cin, th, wo):
    """3x3 stride-2 conv of one output-row tile via 9 accumulated per-tap MXU dots.

    band_ref block: [1, 6*cin, th, wo+1] bf16; group g = 2*kh + pw holds
                    x_pad[2i+kh, 2j+pw] at position (i, j).
    w_ref    block: [9, cout_pad, cin] bf16, tap index k = 3*kh + kw.
    Returns the bias-free conv output [cout_pad, th*wo] in f32 (pixels on lanes).
    """
    acc = None
    for kh in range(3):
        for kw in range(3):
            g = 2 * kh + (kw % 2)          # (row-tap, column-parity) group
            c0 = kw // 2                   # unit column offset inside the group
            tap = band_ref[0, g * cin:(g + 1) * cin, :, c0:c0 + wo]   # [cin, th, wo]
            tap = tap.reshape(cin, th * wo)
            part = jnp.dot(w_ref[3 * kh + kw], tap,
                           preferred_element_type=jnp.float32)
            acc = part if acc is None else acc + part
    return acc


def _stats_kernel(band_ref, w_ref, s_ref, *, cin, th, wo):
    """Pass 1: per-tile per-channel sum and sum-of-squares of the conv output."""
    y = _conv_tile(band_ref, w_ref, cin, th, wo)                 # [cout_pad, th*wo]
    s1 = jnp.sum(y, axis=1, keepdims=True)                       # [cout_pad, 1]
    # TODO(synk): switch to a shifted / Welford-style combine if f32 sum-of-squares
    # ever becomes a precision concern for very large N*Ho*Wo.
    s2 = jnp.sum(y * y, axis=1, keepdims=True)
    s_ref[0, 0, :, :] = jnp.concatenate([s1, s2], axis=1)        # [cout_pad, 2]


def _norm_kernel(band_ref, w_ref, scale_ref, shift_ref, o_ref, *, cin, th, wo, cout):
    """Pass 2: recompute conv, fused BN scale/shift + ReLU, lane-dense NCHW-flat store."""
    y = _conv_tile(band_ref, w_ref, cin, th, wo)                 # [cout_pad, th*wo]
    out = jnp.maximum(y * scale_ref[...] + shift_ref[...], 0.0)
    o_ref[0, :, :] = out[:cout, :]


@functools.partial(jax.jit, static_argnames=("ksize", "stride", "pad", "tile_rows"))
def encoder_forward(x, weight, bias, gamma, beta, *,
                    ksize=3, stride=2, pad=1, tile_rows=None):
    """x: [N, Cin, H, W]; weight: [Cout, Cin, 3, 3] (PyTorch layout).  Returns NCHW f32."""
    if ksize != 3 or stride != 2 or pad != 1:
        raise NotImplementedError("specialized for Conv2d(kernel_size=3, stride=2, padding=1)")
    del bias  # cancels exactly under training-mode BatchNorm mean subtraction

    n, cin, h, w = x.shape
    cout = weight.shape[0]
    ho = (h + 2 * pad - ksize) // stride + 1
    wo = (w + 2 * pad - ksize) // stride + 1
    cout_pad = _round_up(cout, 8)   # sublane alignment only (no MXU-width padding)

    # ---- wrapper: build the bf16 (kh, column-parity) tap groups directly --------
    # pad + strided slice + concat + cast fuse under jit; poly is the only
    # materialized intermediate (~1.5x input elements in bf16 = ~0.75x f32 bytes).
    xb = x.astype(jnp.bfloat16)
    xp = jnp.pad(xb, ((0, 0), (0, 0), (pad, pad), (pad, pad)))
    groups = []
    for kh in range(3):
        for pw in range(2):
            sub = xp[:, :, kh:kh + 2 * (ho - 1) + 1:2, pw:pw + 2 * wo + 1:2]
            sub = sub[:, :, :ho, :wo + 1]
            sub = jnp.pad(sub, ((0, 0), (0, 0),
                                (0, ho - sub.shape[2]),
                                (0, wo + 1 - sub.shape[3])))
            groups.append(sub)
    poly = jnp.concatenate(groups, axis=1)          # [N, 6*Cin, Ho, Wo+1] bf16

    budget = _vmem_budget_bytes()
    if tile_rows is not None:
        th = int(tile_rows)
    else:
        th = _pick_tile_rows(ho, wo, cin, cout_pad, n, budget)
    ho_pad = _round_up(ho, th)
    n_t = ho_pad // th
    if ho_pad != ho:
        # Zero rows -> conv output 0 there -> contributes 0 to BN sums (exact stats).
        poly = jnp.pad(poly, ((0, 0), (0, 0), (0, ho_pad - ho), (0, 0)))

    # Weights: [Cout, Cin, 3, 3] -> [9, Cout_pad, Cin] bf16 (tap index = 3*kh + kw).
    w9 = jnp.transpose(weight.astype(jnp.float32), (2, 3, 0, 1)).reshape(9, cout, cin)
    w9 = jnp.pad(w9, ((0, 0), (0, cout_pad - cout), (0, 0))).astype(jnp.bfloat16)

    grid = (n, n_t)
    band_spec = pl.BlockSpec((1, 6 * cin, th, wo + 1), lambda i, t: (i, 0, t, 0))
    w_spec = pl.BlockSpec((9, cout_pad, cin), lambda i, t: (0, 0, 0))
    compiler_params = pltpu.CompilerParams(
        dimension_semantics=("parallel", "parallel"),
        vmem_limit_bytes=int(budget))

    # ---- pass 1: per-tile per-channel sums (global training-mode BN stats) ------
    stats = pl.pallas_call(
        functools.partial(_stats_kernel, cin=cin, th=th, wo=wo),
        out_shape=jax.ShapeDtypeStruct((n, n_t, cout_pad, 2), jnp.float32),
        grid=grid,
        in_specs=[band_spec, w_spec],
        out_specs=pl.BlockSpec((1, 1, cout_pad, 2), lambda i, t: (i, t, 0, 0)),
        compiler_params=compiler_params,
    )(poly, w9)

    m_total = jnp.float32(n * ho * wo)
    s1 = jnp.sum(stats[..., 0], axis=(0, 1))            # [Cout_pad]
    s2 = jnp.sum(stats[..., 1], axis=(0, 1))
    mean = s1 / m_total
    var = jnp.maximum(s2 / m_total - mean * mean, 0.0)   # biased var (PyTorch BN normalization)

    def _col(v):
        v = v.astype(jnp.float32).reshape(-1)
        return jnp.pad(v, (0, cout_pad - cout)).reshape(cout_pad, 1)

    scale = _col(gamma) * jax.lax.rsqrt(var.reshape(cout_pad, 1) + BN_EPS)
    shift = _col(beta) - mean.reshape(cout_pad, 1) * scale

    # ---- pass 2: recompute conv, fused normalize + ReLU, lane-dense NCHW store ---
    out_flat = pl.pallas_call(
        functools.partial(_norm_kernel, cin=cin, th=th, wo=wo, cout=cout),
        out_shape=jax.ShapeDtypeStruct((n, cout, ho_pad * wo), jnp.float32),
        grid=grid,
        in_specs=[band_spec, w_spec,
                  pl.BlockSpec((cout_pad, 1), lambda i, t: (0, 0)),
                  pl.BlockSpec((cout_pad, 1), lambda i, t: (0, 0))],
        out_specs=pl.BlockSpec((1, cout, th * wo), lambda i, t: (i, 0, t)),
        compiler_params=compiler_params,
    )(poly, w9, scale, shift)

    out = out_flat.reshape(n, cout, ho_pad, wo)          # free reshape, already NCHW
    if ho_pad != ho:
        out = out[:, :, :ho, :]
    return out


def _reference_forward(x_nchw, weight, bias, gamma, beta, *, stride, pad):
    """Pure-JAX f32 reference (conv + training-mode BN + ReLU) for validation."""
    y = jax.lax.conv_general_dilated(
        x_nchw.astype(jnp.float32),
        weight.astype(jnp.float32),
        window_strides=(stride, stride),
        padding=[(pad, pad), (pad, pad)],
        dimension_numbers=("NCHW", "OIHW", "NCHW"),
    ) + bias.reshape(1, -1, 1, 1)
    mean = jnp.mean(y, axis=(0, 2, 3), keepdims=True)
    var = jnp.mean((y - mean) ** 2, axis=(0, 2, 3), keepdims=True)
    y_hat = (y - mean) * jax.lax.rsqrt(var + BN_EPS)
    out = y_hat * gamma.reshape(1, -1, 1, 1) + beta.reshape(1, -1, 1, 1)
    return jnp.maximum(out, 0.0)


if __name__ == "__main__":
    key = jax.random.PRNGKey(0)

    def run_case(n, cin, cout, hw, tile_rows=None):
        k = jax.random.fold_in(key, cin * 1000 + cout)
        kx, kw, kb = jax.random.split(k, 3)
        x = jax.random.normal(kx, (n, cin, hw, hw), dtype=jnp.float32)
        fan_in = cin * 9
        bound = 1.0 / (fan_in ** 0.5)
        conv_w = jax.random.uniform(kw, (cout, cin, 3, 3), jnp.float32, -bound, bound)
        conv_b = jax.random.uniform(kb, (cout,), jnp.float32, -bound, bound)
        bn_gamma = jnp.ones((cout,), jnp.float32)    # BatchNorm2d default init
        bn_beta = jnp.zeros((cout,), jnp.float32)

        out = encoder_forward(x, conv_w, conv_b, bn_gamma, bn_beta, tile_rows=tile_rows)
        out = jax.block_until_ready(out)

        ref = _reference_forward(x, conv_w, conv_b, bn_gamma, bn_beta, stride=2, pad=1)
        assert out.shape == (n, cout, hw // 2, hw // 2), out.shape
        err = float(jnp.max(jnp.abs(out - ref)))
        # bf16-streamed conv vs an all-f32 reference -> a few 1e-3 relative error.
        assert bool(jnp.allclose(out, ref, atol=3e-2, rtol=3e-2)), (
            "mismatch vs reference, max abs err = %e" % err)

    # Encoder(in_channels=4, out_channels=8) on a 2x4x16x16 batch (single row tile).
    run_case(2, 4, 8, 16)
    # Batch-1, non-multiple-of-8 cout, forced row tiling (exercises the (n, n_t) grid).
    run_case(1, 3, 5, 64, tile_rows=8)

    print("KERNEL_OK")
</pallas_src>

<mosaic_0001>
module attributes {stable_mosaic.version = 11 : i64} {
  func.func @_stats_kernel(%arg0: i32, %arg1: i32, %arg2: memref<1x24x8x9xbf16, #tpu.memory_space<vmem>>, %arg3: memref<9x8x4xbf16, #tpu.memory_space<vmem>>, %arg4: memref<1x1x8x2xf32, #tpu.memory_space<vmem>>) attributes {dimension_semantics = [#tpu.dimension_semantics<parallel>, #tpu.dimension_semantics<parallel>], iteration_bounds = array<i64: 2, 1>, scalar_prefetch = 0 : i64, scratch_operands = 0 : i64, tpu.core_type = #tpu.core_type<tc>, window_params = [{transform_indices = @transform_0, window_bounds = array<i64: 1, 24, 8, 9>}, {pipeline_mode = #tpu.pipeline_mode<synchronous>, transform_indices = @transform_1, window_bounds = array<i64: 9, 8, 4>}, {transform_indices = @transform_2, window_bounds = array<i64: 1, 1, 8, 2>}]} {
    %c0 = arith.constant 0 : index
    %c0_0 = arith.constant 0 : index
    %c0_1 = arith.constant 0 : index
    %c0_2 = arith.constant 0 : index
    %0 = vector.load %arg2[%c0, %c0_0, %c0_1, %c0_2] : memref<1x24x8x9xbf16, #tpu.memory_space<vmem>>, vector<1x4x8x8xbf16>
    %1 = vector.shape_cast %0 : vector<1x4x8x8xbf16> to vector<4x8x8xbf16>
    %2 = vector.shape_cast %1 : vector<4x8x8xbf16> to vector<4x64xbf16>
    %c0_3 = arith.constant 0 : index
    %c0_4 = arith.constant 0 : index
    %c0_5 = arith.constant 0 : index
    %3 = vector.load %arg3[%c0_3, %c0_4, %c0_5] : memref<9x8x4xbf16, #tpu.memory_space<vmem>>, vector<1x8x4xbf16>
    %4 = vector.shape_cast %3 : vector<1x8x4xbf16> to vector<8x4xbf16>
    %cst = arith.constant dense<0.000000e+00> : vector<8x64xf32>
    %5 = tpu.matmul %4, %2, %cst {dimension_numbers = #tpu.dot_dimension_numbers<[1], [0], [0], [1], [0, 0, 1, 1], [], []>} : vector<8x4xbf16>, vector<4x64xbf16>, vector<8x64xf32> -> vector<8x64xf32>
    %c0_6 = arith.constant 0 : index
    %c4 = arith.constant 4 : index
    %c0_7 = arith.constant 0 : index
    %c0_8 = arith.constant 0 : index
    %6 = vector.load %arg2[%c0_6, %c4, %c0_7, %c0_8] : memref<1x24x8x9xbf16, #tpu.memory_space<vmem>>, vector<1x4x8x8xbf16>
    %7 = vector.shape_cast %6 : vector<1x4x8x8xbf16> to vector<4x8x8xbf16>
    %8 = vector.shape_cast %7 : vector<4x8x8xbf16> to vector<4x64xbf16>
    %c1 = arith.constant 1 : index
    %c0_9 = arith.constant 0 : index
    %c0_10 = arith.constant 0 : index
    %9 = vector.load %arg3[%c1, %c0_9, %c0_10] : memref<9x8x4xbf16, #tpu.memory_space<vmem>>, vector<1x8x4xbf16>
    %10 = vector.shape_cast %9 : vector<1x8x4xbf16> to vector<8x4xbf16>
    %cst_11 = arith.constant dense<0.000000e+00> : vector<8x64xf32>
    %11 = tpu.matmul %10, %8, %cst_11 {dimension_numbers = #tpu.dot_dimension_numbers<[1], [0], [0], [1], [0, 0, 1, 1], [], []>} : vector<8x4xbf16>, vector<4x64xbf16>, vector<8x64xf32> -> vector<8x64xf32>
    %12 = arith.addf %5, %11 : vector<8x64xf32>
    %c0_12 = arith.constant 0 : index
    %c0_13 = arith.constant 0 : index
    %c0_14 = arith.constant 0 : index
    %c1_15 = arith.constant 1 : index
    %13 = vector.load %arg2[%c0_12, %c0_13, %c0_14, %c1_15] : memref<1x24x8x9xbf16, #tpu.memory_space<vmem>>, vector<1x4x8x8xbf16>
    %14 = vector.shape_cast %13 : vector<1x4x8x8xbf16> to vector<4x8x8xbf16>
    %15 = vector.shape_cast %14 : vector<4x8x8xbf16> to vector<4x64xbf16>
    %c2 = arith.constant 2 : index
    %c0_16 = arith.constant 0 : index
    %c0_17 = arith.constant 0 : index
    %16 = vector.load %arg3[%c2, %c0_16, %c0_17] : memref<9x8x4xbf16, #tpu.memory_space<vmem>>, vector<1x8x4xbf16>
    %17 = vector.shape_cast %16 : vector<1x8x4xbf16> to vector<8x4xbf16>
    %cst_18 = arith.constant dense<0.000000e+00> : vector<8x64xf32>
    %18 = tpu.matmul %17, %15, %cst_18 {dimension_numbers = #tpu.dot_dimension_numbers<[1], [0], [0], [1], [0, 0, 1, 1], [], []>} : vector<8x4xbf16>, vector<4x64xbf16>, vector<8x64xf32> -> vector<8x64xf32>
    %19 = arith.addf %12, %18 : vector<8x64xf32>
    %c0_19 = arith.constant 0 : index
    %c8 = arith.constant 8 : index
    %c0_20 = arith.constant 0 : index
    %c0_21 = arith.constant 0 : index
    %20 = vector.load %arg2[%c0_19, %c8, %c0_20, %c0_21] : memref<1x24x8x9xbf16, #tpu.memory_space<vmem>>, vector<1x4x8x8xbf16>
    %21 = vector.shape_cast %20 : vector<1x4x8x8xbf16> to vector<4x8x8xbf16>
    %22 = vector.shape_cast %21 : vector<4x8x8xbf16> to vector<4x64xbf16>
    %c3 = arith.constant 3 : index
    %c0_22 = arith.constant 0 : index
    %c0_23 = arith.constant 0 : index
    %23 = vector.load %arg3[%c3, %c0_22, %c0_23] : memref<9x8x4xbf16, #tpu.memory_space<vmem>>, vector<1x8x4xbf16>
    %24 = vector.shape_cast %23 : vector<1x8x4xbf16> to vector<8x4xbf16>
    %cst_24 = arith.constant dense<0.000000e+00> : vector<8x64xf32>
    %25 = tpu.matmul %24, %22, %cst_24 {dimension_numbers = #tpu.dot_dimension_numbers<[1], [0], [0], [1], [0, 0, 1, 1], [], []>} : vector<8x4xbf16>, vector<4x64xbf16>, vector<8x64xf32> -> vector<8x64xf32>
    %26 = arith.addf %19, %25 : vector<8x64xf32>
    %c0_25 = arith.constant 0 : index
    %c12 = arith.constant 12 : index
    %c0_26 = arith.constant 0 : index
    %c0_27 = arith.constant 0 : index
    %27 = vector.load %arg2[%c0_25, %c12, %c0_26, %c0_27] : memref<1x24x8x9xbf16, #tpu.memory_space<vmem>>, vector<1x4x8x8xbf16>
    %28 = vector.shape_cast %27 : vector<1x4x8x8xbf16> to vector<4x8x8xbf16>
    %29 = vector.shape_cast %28 : vector<4x8x8xbf16> to vector<4x64xbf16>
    %c4_28 = arith.constant 4 : index
    %c0_29 = arith.constant 0 : index
    %c0_30 = arith.constant 0 : index
    %30 = vector.load %arg3[%c4_28, %c0_29, %c0_30] : memref<9x8x4xbf16, #tpu.memory_space<vmem>>, vector<1x8x4xbf16>
    %31 = vector.shape_cast %30 : vector<1x8x4xbf16> to vector<8x4xbf16>
    %cst_31 = arith.constant dense<0.000000e+00> : vector<8x64xf32>
    %32 = tpu.matmul %31, %29, %cst_31 {dimension_numbers = #tpu.dot_dimension_numbers<[1], [0], [0], [1], [0, 0, 1, 1], [], []>} : vector<8x4xbf16>, vector<4x64xbf16>, vector<8x64xf32> -> vector<8x64xf32>
    %33 = arith.addf %26, %32 : vector<8x64xf32>
    %c0_32 = arith.constant 0 : index
    %c8_33 = arith.constant 8 : index
    %c0_34 = arith.constant 0 : index
    %c1_35 = arith.constant 1 : index
    %34 = vector.load %arg2[%c0_32, %c8_33, %c0_34, %c1_35] : memref<1x24x8x9xbf16, #tpu.memory_space<vmem>>, vector<1x4x8x8xbf16>
    %35 = vector.shape_cast %34 : vector<1x4x8x8xbf16> to vector<4x8x8xbf16>
    %36 = vector.shape_cast %35 : vector<4x8x8xbf16> to vector<4x64xbf16>
    %c5 = arith.constant 5 : index
    %c0_36 = arith.constant 0 : index
    %c0_37 = arith.constant 0 : index
    %37 = vector.load %arg3[%c5, %c0_36, %c0_37] : memref<9x8x4xbf16, #tpu.memory_space<vmem>>, vector<1x8x4xbf16>
    %38 = vector.shape_cast %37 : vector<1x8x4xbf16> to vector<8x4xbf16>
    %cst_38 = arith.constant dense<0.000000e+00> : vector<8x64xf32>
    %39 = tpu.matmul %38, %36, %cst_38 {dimension_numbers = #tpu.dot_dimension_numbers<[1], [0], [0], [1], [0, 0, 1, 1], [], []>} : vector<8x4xbf16>, vector<4x64xbf16>, vector<8x64xf32> -> vector<8x64xf32>
    %40 = arith.addf %33, %39 : vector<8x64xf32>
    %c0_39 = arith.constant 0 : index
    %c16 = arith.constant 16 : index
    %c0_40 = arith.constant 0 : index
    %c0_41 = arith.constant 0 : index
    %41 = vector.load %arg2[%c0_39, %c16, %c0_40, %c0_41] : memref<1x24x8x9xbf16, #tpu.memory_space<vmem>>, vector<1x4x8x8xbf16>
    %42 = vector.shape_cast %41 : vector<1x4x8x8xbf16> to vector<4x8x8xbf16>
    %43 = vector.shape_cast %42 : vector<4x8x8xbf16> to vector<4x64xbf16>
    %c6 = arith.constant 6 : index
    %c0_42 = arith.constant 0 : index
    %c0_43 = arith.constant 0 : index
    %44 = vector.load %arg3[%c6, %c0_42, %c0_43] : memref<9x8x4xbf16, #tpu.memory_space<vmem>>, vector<1x8x4xbf16>
    %45 = vector.shape_cast %44 : vector<1x8x4xbf16> to vector<8x4xbf16>
    %cst_44 = arith.constant dense<0.000000e+00> : vector<8x64xf32>
    %46 = tpu.matmul %45, %43, %cst_44 {dimension_numbers = #tpu.dot_dimension_numbers<[1], [0], [0], [1], [0, 0, 1, 1], [], []>} : vector<8x4xbf16>, vector<4x64xbf16>, vector<8x64xf32> -> vector<8x64xf32>
    %47 = arith.addf %40, %46 : vector<8x64xf32>
    %c0_45 = arith.constant 0 : index
    %c20 = arith.constant 20 : index
    %c0_46 = arith.constant 0 : index
    %c0_47 = arith.constant 0 : index
    %48 = vector.load %arg2[%c0_45, %c20, %c0_46, %c0_47] : memref<1x24x8x9xbf16, #tpu.memory_space<vmem>>, vector<1x4x8x8xbf16>
    %49 = vector.shape_cast %48 : vector<1x4x8x8xbf16> to vector<4x8x8xbf16>
    %50 = vector.shape_cast %49 : vector<4x8x8xbf16> to vector<4x64xbf16>
    %c7 = arith.constant 7 : index
    %c0_48 = arith.constant 0 : index
    %c0_49 = arith.constant 0 : index
    %51 = vector.load %arg3[%c7, %c0_48, %c0_49] : memref<9x8x4xbf16, #tpu.memory_space<vmem>>, vector<1x8x4xbf16>
    %52 = vector.shape_cast %51 : vector<1x8x4xbf16> to vector<8x4xbf16>
    %cst_50 = arith.constant dense<0.000000e+00> : vector<8x64xf32>
    %53 = tpu.matmul %52, %50, %cst_50 {dimension_numbers = #tpu.dot_dimension_numbers<[1], [0], [0], [1], [0, 0, 1, 1], [], []>} : vector<8x4xbf16>, vector<4x64xbf16>, vector<8x64xf32> -> vector<8x64xf32>
    %54 = arith.addf %47, %53 : vector<8x64xf32>
    %c0_51 = arith.constant 0 : index
    %c16_52 = arith.constant 16 : index
    %c0_53 = arith.constant 0 : index
    %c1_54 = arith.constant 1 : index
    %55 = vector.load %arg2[%c0_51, %c16_52, %c0_53, %c1_54] : memref<1x24x8x9xbf16, #tpu.memory_space<vmem>>, vector<1x4x8x8xbf16>
    %56 = vector.shape_cast %55 : vector<1x4x8x8xbf16> to vector<4x8x8xbf16>
    %57 = vector.shape_cast %56 : vector<4x8x8xbf16> to vector<4x64xbf16>
    %c8_55 = arith.constant 8 : index
    %c0_56 = arith.constant 0 : index
    %c0_57 = arith.constant 0 : index
    %58 = vector.load %arg3[%c8_55, %c0_56, %c0_57] : memref<9x8x4xbf16, #tpu.memory_space<vmem>>, vector<1x8x4xbf16>
    %59 = vector.shape_cast %58 : vector<1x8x4xbf16> to vector<8x4xbf16>
    %cst_58 = arith.constant dense<0.000000e+00> : vector<8x64xf32>
    %60 = tpu.matmul %59, %57, %cst_58 {dimension_numbers = #tpu.dot_dimension_numbers<[1], [0], [0], [1], [0, 0, 1, 1], [], []>} : vector<8x4xbf16>, vector<4x64xbf16>, vector<8x64xf32> -> vector<8x64xf32>
    %61 = arith.addf %54, %60 : vector<8x64xf32>
    %cst_59 = arith.constant dense<0.000000e+00> : vector<8xf32>
    %62 = vector.multi_reduction <add>, %61, %cst_59 [1] : vector<8x64xf32> to vector<8xf32>
    %63 = vector.shape_cast %62 : vector<8xf32> to vector<8x1xf32>
    %64 = arith.mulf %61, %61 : vector<8x64xf32>
    %cst_60 = arith.constant dense<0.000000e+00> : vector<8xf32>
    %65 = vector.multi_reduction <add>, %64, %cst_60 [1] : vector<8x64xf32> to vector<8xf32>
    %66 = vector.shape_cast %65 : vector<8xf32> to vector<8x1xf32>
    %67 = tpu.concatenate %63, %66 in 1 : vector<8x1xf32>, vector<8x1xf32> -> vector<8x2xf32>
    %c0_61 = arith.constant 0 : index
    %c0_62 = arith.constant 0 : index
    %c0_63 = arith.constant 0 : index
    %c0_64 = arith.constant 0 : index
    %68 = vector.load %arg4[%c0_61, %c0_62, %c0_63, %c0_64] : memref<1x1x8x2xf32, #tpu.memory_space<vmem>>, vector<1x1x8x2xf32>
    %69 = vector.shape_cast %68 : vector<1x1x8x2xf32> to vector<8x2xf32>
    %70 = vector.shape_cast %67 : vector<8x2xf32> to vector<1x1x8x2xf32>
    tpu.vector_store %arg4[%c0_61, %c0_62, %c0_63, %c0_64], %70 {strides = array<i32>} : memref<1x1x8x2xf32, #tpu.memory_space<vmem>>, vector<1x1x8x2xf32>,
    return
  }
  func.func @transform_0(%arg0: i32, %arg1: i32) -> (i32, i32, i32, i32) {
    %c0_i32 = arith.constant 0 : i32
    %c0_i32_0 = arith.constant 0 : i32
    %c0_i32_1 = arith.constant 0 : i32
    return %arg0, %c0_i32, %arg1, %c0_i32_0 : i32, i32, i32, i32
  }
  func.func @transform_1(%arg0: i32, %arg1: i32) -> (i32, i32, i32) {
    %c0_i32 = arith.constant 0 : i32
    %c0_i32_0 = arith.constant 0 : i32
    %c0_i32_1 = arith.constant 0 : i32
    %c0_i32_2 = arith.constant 0 : i32
    return %c0_i32, %c0_i32_0, %c0_i32_1 : i32, i32, i32
  }
  func.func @transform_2(%arg0: i32, %arg1: i32) -> (i32, i32, i32, i32) {
    %c0_i32 = arith.constant 0 : i32
    %c0_i32_0 = arith.constant 0 : i32
    %c0_i32_1 = arith.constant 0 : i32
    return %arg0, %arg1, %c0_i32, %c0_i32_0 : i32, i32, i32, i32
  }
}

module attributes {stable_mosaic.version = 11 : i64} {
  func.func @_norm_kernel(%arg0: i32, %arg1: i32, %arg2: memref<1x24x8x9xbf16, #tpu.memory_space<vmem>>, %arg3: memref<9x8x4xbf16, #tpu.memory_space<vmem>>, %arg4: memref<8x1xf32, #tpu.memory_space<vmem>>, %arg5: memref<8x1xf32, #tpu.memory_space<vmem>>, %arg6: memref<1x8x64xf32, #tpu.memory_space<vmem>>) attributes {dimension_semantics = [#tpu.dimension_semantics<parallel>, #tpu.dimension_semantics<parallel>], iteration_bounds = array<i64: 2, 1>, scalar_prefetch = 0 : i64, scratch_operands = 0 : i64, tpu.core_type = #tpu.core_type<tc>, window_params = [{transform_indices = @transform_0, window_bounds = array<i64: 1, 24, 8, 9>}, {pipeline_mode = #tpu.pipeline_mode<synchronous>, transform_indices = @transform_1, window_bounds = array<i64: 9, 8, 4>}, {pipeline_mode = #tpu.pipeline_mode<synchronous>, transform_indices = @transform_2, window_bounds = array<i64: 8, 1>}, {pipeline_mode = #tpu.pipeline_mode<synchronous>, transform_indices = @transform_3, window_bounds = array<i64: 8, 1>}, {transform_indices = @transform_4, window_bounds = array<i64: 1, 8, 64>}]} {
    %c0 = arith.constant 0 : index
    %c0_0 = arith.constant 0 : index
    %c0_1 = arith.constant 0 : index
    %c0_2 = arith.constant 0 : index
    %0 = vector.load %arg2[%c0, %c0_0, %c0_1, %c0_2] : memref<1x24x8x9xbf16, #tpu.memory_space<vmem>>, vector<1x4x8x8xbf16>
    %1 = vector.shape_cast %0 : vector<1x4x8x8xbf16> to vector<4x8x8xbf16>
    %2 = vector.shape_cast %1 : vector<4x8x8xbf16> to vector<4x64xbf16>
    %c0_3 = arith.constant 0 : index
    %c0_4 = arith.constant 0 : index
    %c0_5 = arith.constant 0 : index
    %3 = vector.load %arg3[%c0_3, %c0_4, %c0_5] : memref<9x8x4xbf16, #tpu.memory_space<vmem>>, vector<1x8x4xbf16>
    %4 = vector.shape_cast %3 : vector<1x8x4xbf16> to vector<8x4xbf16>
    %cst = arith.constant dense<0.000000e+00> : vector<8x64xf32>
    %5 = tpu.matmul %4, %2, %cst {dimension_numbers = #tpu.dot_dimension_numbers<[1], [0], [0], [1], [0, 0, 1, 1], [], []>} : vector<8x4xbf16>, vector<4x64xbf16>, vector<8x64xf32> -> vector<8x64xf32>
    %c0_6 = arith.constant 0 : index
    %c4 = arith.constant 4 : index
    %c0_7 = arith.constant 0 : index
    %c0_8 = arith.constant 0 : index
    %6 = vector.load %arg2[%c0_6, %c4, %c0_7, %c0_8] : memref<1x24x8x9xbf16, #tpu.memory_space<vmem>>, vector<1x4x8x8xbf16>
    %7 = vector.shape_cast %6 : vector<1x4x8x8xbf16> to vector<4x8x8xbf16>
    %8 = vector.shape_cast %7 : vector<4x8x8xbf16> to vector<4x64xbf16>
    %c1 = arith.constant 1 : index
    %c0_9 = arith.constant 0 : index
    %c0_10 = arith.constant 0 : index
    %9 = vector.load %arg3[%c1, %c0_9, %c0_10] : memref<9x8x4xbf16, #tpu.memory_space<vmem>>, vector<1x8x4xbf16>
    %10 = vector.shape_cast %9 : vector<1x8x4xbf16> to vector<8x4xbf16>
    %cst_11 = arith.constant dense<0.000000e+00> : vector<8x64xf32>
    %11 = tpu.matmul %10, %8, %cst_11 {dimension_numbers = #tpu.dot_dimension_numbers<[1], [0], [0], [1], [0, 0, 1, 1], [], []>} : vector<8x4xbf16>, vector<4x64xbf16>, vector<8x64xf32> -> vector<8x64xf32>
    %12 = arith.addf %5, %11 : vector<8x64xf32>
    %c0_12 = arith.constant 0 : index
    %c0_13 = arith.constant 0 : index
    %c0_14 = arith.constant 0 : index
    %c1_15 = arith.constant 1 : index
    %13 = vector.load %arg2[%c0_12, %c0_13, %c0_14, %c1_15] : memref<1x24x8x9xbf16, #tpu.memory_space<vmem>>, vector<1x4x8x8xbf16>
    %14 = vector.shape_cast %13 : vector<1x4x8x8xbf16> to vector<4x8x8xbf16>
    %15 = vector.shape_cast %14 : vector<4x8x8xbf16> to vector<4x64xbf16>
    %c2 = arith.constant 2 : index
    %c0_16 = arith.constant 0 : index
    %c0_17 = arith.constant 0 : index
    %16 = vector.load %arg3[%c2, %c0_16, %c0_17] : memref<9x8x4xbf16, #tpu.memory_space<vmem>>, vector<1x8x4xbf16>
    %17 = vector.shape_cast %16 : vector<1x8x4xbf16> to vector<8x4xbf16>
    %cst_18 = arith.constant dense<0.000000e+00> : vector<8x64xf32>
    %18 = tpu.matmul %17, %15, %cst_18 {dimension_numbers = #tpu.dot_dimension_numbers<[1], [0], [0], [1], [0, 0, 1, 1], [], []>} : vector<8x4xbf16>, vector<4x64xbf16>, vector<8x64xf32> -> vector<8x64xf32>
    %19 = arith.addf %12, %18 : vector<8x64xf32>
    %c0_19 = arith.constant 0 : index
    %c8 = arith.constant 8 : index
    %c0_20 = arith.constant 0 : index
    %c0_21 = arith.constant 0 : index
    %20 = vector.load %arg2[%c0_19, %c8, %c0_20, %c0_21] : memref<1x24x8x9xbf16, #tpu.memory_space<vmem>>, vector<1x4x8x8xbf16>
    %21 = vector.shape_cast %20 : vector<1x4x8x8xbf16> to vector<4x8x8xbf16>
    %22 = vector.shape_cast %21 : vector<4x8x8xbf16> to vector<4x64xbf16>
    %c3 = arith.constant 3 : index
    %c0_22 = arith.constant 0 : index
    %c0_23 = arith.constant 0 : index
    %23 = vector.load %arg3[%c3, %c0_22, %c0_23] : memref<9x8x4xbf16, #tpu.memory_space<vmem>>, vector<1x8x4xbf16>
    %24 = vector.shape_cast %23 : vector<1x8x4xbf16> to vector<8x4xbf16>
    %cst_24 = arith.constant dense<0.000000e+00> : vector<8x64xf32>
    %25 = tpu.matmul %24, %22, %cst_24 {dimension_numbers = #tpu.dot_dimension_numbers<[1], [0], [0], [1], [0, 0, 1, 1], [], []>} : vector<8x4xbf16>, vector<4x64xbf16>, vector<8x64xf32> -> vector<8x64xf32>
    %26 = arith.addf %19, %25 : vector<8x64xf32>
    %c0_25 = arith.constant 0 : index
    %c12 = arith.constant 12 : index
    %c0_26 = arith.constant 0 : index
    %c0_27 = arith.constant 0 : index
    %27 = vector.load %arg2[%c0_25, %c12, %c0_26, %c0_27] : memref<1x24x8x9xbf16, #tpu.memory_space<vmem>>, vector<1x4x8x8xbf16>
    %28 = vector.shape_cast %27 : vector<1x4x8x8xbf16> to vector<4x8x8xbf16>
    %29 = vector.shape_cast %28 : vector<4x8x8xbf16> to vector<4x64xbf16>
    %c4_28 = arith.constant 4 : index
    %c0_29 = arith.constant 0 : index
    %c0_30 = arith.constant 0 : index
    %30 = vector.load %arg3[%c4_28, %c0_29, %c0_30] : memref<9x8x4xbf16, #tpu.memory_space<vmem>>, vector<1x8x4xbf16>
    %31 = vector.shape_cast %30 : vector<1x8x4xbf16> to vector<8x4xbf16>
    %cst_31 = arith.constant dense<0.000000e+00> : vector<8x64xf32>
    %32 = tpu.matmul %31, %29, %cst_31 {dimension_numbers = #tpu.dot_dimension_numbers<[1], [0], [0], [1], [0, 0, 1, 1], [], []>} : vector<8x4xbf16>, vector<4x64xbf16>, vector<8x64xf32> -> vector<8x64xf32>
    %33 = arith.addf %26, %32 : vector<8x64xf32>
    %c0_32 = arith.constant 0 : index
    %c8_33 = arith.constant 8 : index
    %c0_34 = arith.constant 0 : index
    %c1_35 = arith.constant 1 : index
    %34 = vector.load %arg2[%c0_32, %c8_33, %c0_34, %c1_35] : memref<1x24x8x9xbf16, #tpu.memory_space<vmem>>, vector<1x4x8x8xbf16>
    %35 = vector.shape_cast %34 : vector<1x4x8x8xbf16> to vector<4x8x8xbf16>
    %36 = vector.shape_cast %35 : vector<4x8x8xbf16> to vector<4x64xbf16>
    %c5 = arith.constant 5 : index
    %c0_36 = arith.constant 0 : index
    %c0_37 = arith.constant 0 : index
    %37 = vector.load %arg3[%c5, %c0_36, %c0_37] : memref<9x8x4xbf16, #tpu.memory_space<vmem>>, vector<1x8x4xbf16>
    %38 = vector.shape_cast %37 : vector<1x8x4xbf16> to vector<8x4xbf16>
    %cst_38 = arith.constant dense<0.000000e+00> : vector<8x64xf32>
    %39 = tpu.matmul %38, %36, %cst_38 {dimension_numbers = #tpu.dot_dimension_numbers<[1], [0], [0], [1], [0, 0, 1, 1], [], []>} : vector<8x4xbf16>, vector<4x64xbf16>, vector<8x64xf32> -> vector<8x64xf32>
    %40 = arith.addf %33, %39 : vector<8x64xf32>
    %c0_39 = arith.constant 0 : index
    %c16 = arith.constant 16 : index
    %c0_40 = arith.constant 0 : index
    %c0_41 = arith.constant 0 : index
    %41 = vector.load %arg2[%c0_39, %c16, %c0_40, %c0_41] : memref<1x24x8x9xbf16, #tpu.memory_space<vmem>>, vector<1x4x8x8xbf16>
    %42 = vector.shape_cast %41 : vector<1x4x8x8xbf16> to vector<4x8x8xbf16>
    %43 = vector.shape_cast %42 : vector<4x8x8xbf16> to vector<4x64xbf16>
    %c6 = arith.constant 6 : index
    %c0_42 = arith.constant 0 : index
    %c0_43 = arith.constant 0 : index
    %44 = vector.load %arg3[%c6, %c0_42, %c0_43] : memref<9x8x4xbf16, #tpu.memory_space<vmem>>, vector<1x8x4xbf16>
    %45 = vector.shape_cast %44 : vector<1x8x4xbf16> to vector<8x4xbf16>
    %cst_44 = arith.constant dense<0.000000e+00> : vector<8x64xf32>
    %46 = tpu.matmul %45, %43, %cst_44 {dimension_numbers = #tpu.dot_dimension_numbers<[1], [0], [0], [1], [0, 0, 1, 1], [], []>} : vector<8x4xbf16>, vector<4x64xbf16>, vector<8x64xf32> -> vector<8x64xf32>
    %47 = arith.addf %40, %46 : vector<8x64xf32>
    %c0_45 = arith.constant 0 : index
    %c20 = arith.constant 20 : index
    %c0_46 = arith.constant 0 : index
    %c0_47 = arith.constant 0 : index
    %48 = vector.load %arg2[%c0_45, %c20, %c0_46, %c0_47] : memref<1x24x8x9xbf16, #tpu.memory_space<vmem>>, vector<1x4x8x8xbf16>
    %49 = vector.shape_cast %48 : vector<1x4x8x8xbf16> to vector<4x8x8xbf16>
    %50 = vector.shape_cast %49 : vector<4x8x8xbf16> to vector<4x64xbf16>
    %c7 = arith.constant 7 : index
    %c0_48 = arith.constant 0 : index
    %c0_49 = arith.constant 0 : index
    %51 = vector.load %arg3[%c7, %c0_48, %c0_49] : memref<9x8x4xbf16, #tpu.memory_space<vmem>>, vector<1x8x4xbf16>
    %52 = vector.shape_cast %51 : vector<1x8x4xbf16> to vector<8x4xbf16>
    %cst_50 = arith.constant dense<0.000000e+00> : vector<8x64xf32>
    %53 = tpu.matmul %52, %50, %cst_50 {dimension_numbers = #tpu.dot_dimension_numbers<[1], [0], [0], [1], [0, 0, 1, 1], [], []>} : vector<8x4xbf16>, vector<4x64xbf16>, vector<8x64xf32> -> vector<8x64xf32>
    %54 = arith.addf %47, %53 : vector<8x64xf32>
    %c0_51 = arith.constant 0 : index
    %c16_52 = arith.constant 16 : index
    %c0_53 = arith.constant 0 : index
    %c1_54 = arith.constant 1 : index
    %55 = vector.load %arg2[%c0_51, %c16_52, %c0_53, %c1_54] : memref<1x24x8x9xbf16, #tpu.memory_space<vmem>>, vector<1x4x8x8xbf16>
    %56 = vector.shape_cast %55 : vector<1x4x8x8xbf16> to vector<4x8x8xbf16>
    %57 = vector.shape_cast %56 : vector<4x8x8xbf16> to vector<4x64xbf16>
    %c8_55 = arith.constant 8 : index
    %c0_56 = arith.constant 0 : index
    %c0_57 = arith.constant 0 : index
    %58 = vector.load %arg3[%c8_55, %c0_56, %c0_57] : memref<9x8x4xbf16, #tpu.memory_space<vmem>>, vector<1x8x4xbf16>
    %59 = vector.shape_cast %58 : vector<1x8x4xbf16> to vector<8x4xbf16>
    %cst_58 = arith.constant dense<0.000000e+00> : vector<8x64xf32>
    %60 = tpu.matmul %59, %57, %cst_58 {dimension_numbers = #tpu.dot_dimension_numbers<[1], [0], [0], [1], [0, 0, 1, 1], [], []>} : vector<8x4xbf16>, vector<4x64xbf16>, vector<8x64xf32> -> vector<8x64xf32>
    %61 = arith.addf %54, %60 : vector<8x64xf32>
    %c0_59 = arith.constant 0 : index
    %c0_60 = arith.constant 0 : index
    %62 = vector.load %arg4[%c0_59, %c0_60] : memref<8x1xf32, #tpu.memory_space<vmem>>, vector<8x1xf32>
    %63 = vector.broadcast %62 : vector<8x1xf32> to vector<8x64xf32>
    %64 = arith.mulf %61, %63 : vector<8x64xf32>
    %c0_61 = arith.constant 0 : index
    %c0_62 = arith.constant 0 : index
    %65 = vector.load %arg5[%c0_61, %c0_62] : memref<8x1xf32, #tpu.memory_space<vmem>>, vector<8x1xf32>
    %66 = vector.broadcast %65 : vector<8x1xf32> to vector<8x64xf32>
    %67 = arith.addf %64, %66 : vector<8x64xf32>
    %cst_63 = arith.constant 0.000000e+00 : f32
    %68 = vector.broadcast %cst_63 : f32 to vector<8x64xf32>
    %69 = arith.maximumf %67, %68 : vector<8x64xf32>
    %c0_64 = arith.constant 0 : index
    %c0_65 = arith.constant 0 : index
    %c0_66 = arith.constant 0 : index
    %70 = vector.load %arg6[%c0_64, %c0_65, %c0_66] : memref<1x8x64xf32, #tpu.memory_space<vmem>>, vector<1x8x64xf32>
    %71 = vector.shape_cast %70 : vector<1x8x64xf32> to vector<8x64xf32>
    %72 = vector.shape_cast %69 : vector<8x64xf32> to vector<1x8x64xf32>
    tpu.vector_store %arg6[%c0_64, %c0_65, %c0_66], %72 {strides = array<i32>} : memref<1x8x64xf32, #tpu.memory_space<vmem>>, vector<1x8x64xf32>,
    return
  }
  func.func @transform_0(%arg0: i32, %arg1: i32) -> (i32, i32, i32, i32) {
    %c0_i32 = arith.constant 0 : i32
    %c0_i32_0 = arith.constant 0 : i32
    %c0_i32_1 = arith.constant 0 : i32
    return %arg0, %c0_i32, %arg1, %c0_i32_0 : i32, i32, i32, i32
  }
  func.func @transform_1(%arg0: i32, %arg1: i32) -> (i32, i32, i32) {
    %c0_i32 = arith.constant 0 : i32
    %c0_i32_0 = arith.constant 0 : i32
    %c0_i32_1 = arith.constant 0 : i32
    %c0_i32_2 = arith.constant 0 : i32
    return %c0_i32, %c0_i32_0, %c0_i32_1 : i32, i32, i32
  }
  func.func @transform_2(%arg0: i32, %arg1: i32) -> (i32, i32) {
    %c0_i32 = arith.constant 0 : i32
    %c0_i32_0 = arith.constant 0 : i32
    %c0_i32_1 = arith.constant 0 : i32
    return %c0_i32, %c0_i32_0 : i32, i32
  }
  func.func @transform_3(%arg0: i32, %arg1: i32) -> (i32, i32) {
    %c0_i32 = arith.constant 0 : i32
    %c0_i32_0 = arith.constant 0 : i32
    %c0_i32_1 = arith.constant 0 : i32
    return %c0_i32, %c0_i32_0 : i32, i32
  }
  func.func @transform_4(%arg0: i32, %arg1: i32) -> (i32, i32, i32) {
    %c0_i32 = arith.constant 0 : i32
    %c0_i32_0 = arith.constant 0 : i32
    return %arg0, %c0_i32, %arg1 : i32, i32, i32
  }
}

</mosaic_0001>

<llo_original>
// kernel: encoder_forward.2
$region0: #{encoder_forward.2}
  #allocation0 [shape = 'u32[]', space=smem, size = 0x4, offset = 0x4, fixed_abs, tag = 'smem constant byte address 0x4 - core index']
  #allocation1 [shape = 'u32[144,128]{1,0:T(1,128)}', space=vmem, size = 0x12000, scoped, tag = 'internal scratch']
  %s0 = inlined_call_operand.vmem [shape: bf16[2,24,8,9], index: 0, kind: input, shape index: {}]
  %s1 = inlined_call_operand.vmem [shape: bf16[9,8,4], index: 1, kind: input, shape index: {}]
  %s2 = inlined_call_operand.vmem [shape: f32[2,1,8,2], index: 2, kind: output, shape index: {}]
  %s3 = sld [smem:[#allocation0]]
  $region41: #{encoder_forward.2} parent=0
    _
  %s5 = ssub.s32 1, %s3
  %s6 = scalar_select 0, %s5, %s3
  loop: start=0, step=1, limit=4
  $region2: #{encoder_forward.2} parent=0 // loop_pre_header
    _
  $region3: #{encoder_forward.2} parent=0 // loop_header
    %s8 = sphi 0, %s12
    %p9 = scmp.ge.s32.totalorder %s8, 4
    %s15 = sphi 0, %s27
    %s16 = sphi 0, %s23
    %s17 = sphi 0, %s15
    %s18 = sphi 0, %s16
    %s19 = sphi 0, %s17
    %s20 = sphi 0, %s18
    %s32 = sphi 0, %s34
    %s35 = sphi 0, %s32
    %s36 = sphi 0, %s35
    %s52 = sphi 0, %s36
    %s56 = sphi 0, %s56
    %s58 = sphi 0, %s56
    %s59 = sphi 0, %s58
    %s73 = sphi 0, %s59
    %s81 = sphi 0, %s83
    %s84 = sphi 0, %s81
    %s85 = sphi 0, %s84
    %s101 = sphi 0, %s85
  $region4: #{encoder_forward.2} parent=0 // loop_header_branch
    %11 = sbr.rel (%p9) target = $region8
  $region5: #{encoder_forward.2} parent=0 // loop_body
    %s13 = ssub.s32 %s8, 1
    %s14 = ssub.s32 %s8, 2
    %s21 = sadd.s32 1, %s16
    %p22 = scmp.ge.s32.totalorder %s21, 1
    %s23 = scalar_select %p22, 0, %s21
    %s24 = sadd.s32 1, %s15
    %s25 = scalar_select %p22, %s24, %s15
    %p26 = scmp.ge.s32.totalorder %s25, 2
    %s27 = scalar_select %p26, 0, %s25
    %s28 = ssub.s32 %s15, %s27
    %s29 = ssub.s32 %s16, %s23
    %s30 = sor.u32 %s28, %s29
    %p31 = scmp.eq.s32.totalorder %s30, 0
    %s33 = sadd.s32 %s32, 1
    %s34 = scalar_select %p31, %s32, %s33
    %p37 = pneg %p31
    %p38 = scmp.eq.s32.totalorder %s8, 1
    %p39 = por %p37, %p38
    %p40 = scmp.ne.s32.totalorder %s32, %s35
    %p41 = scmp.eq.s32.totalorder %s8, 0
    %p42 = por %p40, %p41
    %p43 = scmp.ne.s32.totalorder %s32, %s35
    %p44 = scmp.eq.s32.totalorder %s13, 1
    %p45 = por %p43, %p44
    %p46 = scmp.ne.s32.totalorder %s35, %s36
    %p47 = scmp.eq.s32.totalorder %s13, 0
    %p48 = por %p46, %p47
    %p49 = scmp.ne.s32.totalorder %s35, %s36
    %p50 = scmp.eq.s32.totalorder %s14, 1
    %p51 = por %p49, %p50
    %p53 = scmp.ne.s32.totalorder %s36, %s52
    %p54 = scmp.eq.s32.totalorder %s14, 0
    %p55 = por %p53, %p54
    %s57 = sadd.s32 %s56, 1
    %p60 = scmp.eq.s32.totalorder %s8, 1
    %p61 = scmp.ne.s32.totalorder %s56, %s58
    %p62 = scmp.eq.s32.totalorder %s8, 0
    %p63 = por %p61, %p62
    %p64 = scmp.ne.s32.totalorder %s56, %s58
    %p65 = scmp.eq.s32.totalorder %s13, 1
    %p66 = por %p64, %p65
    %p67 = scmp.ne.s32.totalorder %s58, %s59
    %p68 = scmp.eq.s32.totalorder %s13, 0
    %p69 = por %p67, %p68
    %p70 = scmp.ne.s32.totalorder %s58, %s59
    %p71 = scmp.eq.s32.totalorder %s14, 1
    %p72 = por %p70, %p71
    %p74 = scmp.ne.s32.totalorder %s59, %s73
    %p75 = scmp.eq.s32.totalorder %s14, 0
    %p76 = por %p74, %p75
    %s77 = ssub.s32 %s15, %s27
    %s78 = ssub.s32 %s16, %s23
    %s79 = sor.u32 %s77, %s78
    %p80 = scmp.eq.s32.totalorder %s79, 0
    %s82 = sadd.s32 %s81, 1
    %s83 = scalar_select %p80, %s81, %s82
    %p86 = pneg %p80
    %p87 = scmp.eq.s32.totalorder %s8, 1
    %p88 = por %p86, %p87
    %p89 = scmp.ne.s32.totalorder %s81, %s84
    %p90 = scmp.eq.s32.totalorder %s8, 0
    %p91 = por %p89, %p90
    %p92 = scmp.ne.s32.totalorder %s81, %s84
    %p93 = scmp.eq.s32.totalorder %s13, 1
    %p94 = por %p92, %p93
    %p95 = scmp.ne.s32.totalorder %s84, %s85
    %p96 = scmp.eq.s32.totalorder %s13, 0
    %p97 = por %p95, %p96
    %p98 = scmp.ne.s32.totalorder %s84, %s85
    %p99 = scmp.eq.s32.totalorder %s14, 1
    %p100 = por %p98, %p99
    %p102 = scmp.ne.s32.totalorder %s85, %s101
    %p103 = scmp.eq.s32.totalorder %s14, 0
    %p104 = por %p102, %p103
    %p105 = scmp.le.s32.totalorder 1, %s8
    %p106 = scmp.lt.s32.totalorder %s8, 3
    %p107 = pnand %p105, %p106
    %p108 = pneg %p107
    // Predicated region
    $region9: #{encoder_forward.2} parent=5 // pred_check
      _
    $region10: #{encoder_forward.2} parent=5 // pred_check_branch
      %110 = sbr.rel (%p107) target = $region12
    $region11: #{encoder_forward.2} parent=5 // pred_region
      %s111 = ssub.s32 %s8, 1
      // Predicated region
      $region13: #{encoder_forward.2} parent=11 // pred_check
        %p112 = pneg %p69
      $region14: #{encoder_forward.2} parent=11 // pred_check_branch
        %114 = sbr.rel (%p112) target = $region16
      $region15: #{encoder_forward.2} parent=11 // pred_region
        _
      $region16: #{encoder_forward.2} parent=11 // pred_fallthru
        _
    $region12: #{encoder_forward.2} parent=5 // pred_fallthru
      _
    %p115 = scmp.lt.s32.totalorder %s8, 2
    // Predicated region
    $region17: #{encoder_forward.2} parent=5 // pred_check
      %p116 = pneg %p115
    $region18: #{encoder_forward.2} parent=5 // pred_check_branch
      %118 = sbr.rel (%p116) target = $region20
    $region19: #{encoder_forward.2} parent=5 // pred_region
      // Predicated region
      $region21: #{encoder_forward.2} parent=19 // pred_check
        %p119 = pneg %p42
      $region22: #{encoder_forward.2} parent=19 // pred_check_branch
        %121 = sbr.rel (%p119) target = $region24
      $region23: #{encoder_forward.2} parent=19 // pred_region
        %p122 = scmp.lt.s32.totalorder %s15, 1
        %s123 = scalar_select %p122, %s15, 1
        %p124 = scmp.lt.s32.totalorder %s16, 0
        %s125 = scalar_select %p124, %s16, 0
        %s126 = smul.addr %s123, 24
        %s127 = sadd.s32 %s125, %s126
        %s128 = smul.addr %s127, 4
        %s129 = scalar_lea.vmem %s0, %s128
      $region24: #{encoder_forward.2} parent=19 // pred_fallthru
        _
    $region20: #{encoder_forward.2} parent=5 // pred_fallthru
      _
    %p130 = scmp.le.s32.totalorder 1, %s8
    %p131 = scmp.lt.s32.totalorder %s8, 3
    %p132 = pnand %p130, %p131
    %p133 = pneg %p132
    // Predicated region
    $region25: #{encoder_forward.2} parent=5 // pred_check
      _
    $region26: #{encoder_forward.2} parent=5 // pred_check_branch
      %135 = sbr.rel (%p132) target = $region28
    $region27: #{encoder_forward.2} parent=5 // pred_region
      %s136 = ssub.s32 %s8, 1
      %p137 = scmp.lt.s32.totalorder %s17, 1
      %s138 = scalar_select %p137, %s17, 1
      %p139 = scmp.lt.s32.totalorder %s18, 0
      %s140 = scalar_select %p139, %s18, 0
      %s141 = smul.addr %s138, 24
      %s142 = sadd.s32 %s140, %s141
      %s143 = smul.addr %s142, 4
      %s144 = scalar_lea.vmem %s0, %s143
      %p145 = pneg %p48
      %p146 = pneg %p45
      %p147 = pneg %p69
      %p148 = pneg %p66
      %p149 = pneg %p97
      %p150 = pneg %p94
      %p151 = scmp.lt.s32.totalorder %s17, 1
      %s152 = scalar_select %p151, %s17, 1
      %p153 = scmp.lt.s32.totalorder %s18, 0
      %s154 = scalar_select %p153, %s18, 0
      %s155 = sadd.s32 %s154, %s152
      %s156 = smul.addr %s155, 8
      %s157 = scalar_lea.vmem %s2, %s156
      %p158 = scmp.lt.s32.totalorder %s17, 1
      %s159 = scalar_select %p158, %s17, 1
      %p160 = scmp.lt.s32.totalorder %s18, 0
      %s161 = scalar_select %p160, %s18, 0
      %s162 = smul.addr %s159, 24
      %s163 = sadd.s32 %s161, %s162
      %s164 = smul.addr %s163, 4
      %s165 = scalar_lea.vmem %s0, %s164
      %p166 = scmp.lt.s32.totalorder %s17, 1
      %s167 = scalar_select %p166, %s17, 1
      %p168 = scmp.lt.s32.totalorder %s18, 0
      %s169 = scalar_select %p168, %s18, 0
      %s170 = sadd.s32 %s169, %s167
      %s171 = smul.addr %s170, 8
      %s172 = scalar_lea.vmem %s2, %s171
      %v174 = vld [vmem:[%s165] sm:$0xf]
      %v175 = vld [vmem:[%s165 + $0x4] sm:$0xf]
      %v176 = vld [vmem:[%s165 + $0x8] sm:$0xf]
      %v177 = vld [vmem:[%s165 + $0xc] sm:$0xf]
      %v180 = vpack.i.b16 %v175, %v174
      %v181 = vshrl.u32 %v174, 16
      %v182 = vshrl.u32 %v175, 16
      %v183 = vpack.i.b16 %v182, %v181
      %v186 = vpack.i.b16 %v177, %v176
      %v187 = vshrl.u32 %v176, 16
      %v188 = vshrl.u32 %v177, 16
      %v189 = vpack.i.b16 %v188, %v187
      %v192 = vunpack.c.l.s4 1983009808
      %v193 = vunpack.c.0.s8 %v192
      %v194 = vlaneseq
      %v195 = vshrl.u32 %v194, 7
      %v196 = vsub.s32 %v193, %v195
      %v197 = vrot.slane %v180, %v196
      %v200 = vunpack.c.l.s4 1983009808
      %v201 = vunpack.c.0.s8 %v200
      %v202 = vlaneseq
      %v203 = vshrl.u32 %v202, 7
      %v204 = vsub.s32 %v201, %v203
      %v205 = vrot.slane %v186, %v204
      %v206 = vcombine.low %v197, %v205
      %v207 = vcombine.high %v197, %v205
      %v209 = vunpack.c.l.s4 1934713408
      %v210 = vunpack.c.0.s8 %v209
      %v211 = vlaneseq
      %v212 = vshrl.u32 %v211, 7
      %v213 = vsub.s32 %v210, %v212
      %v214 = vrot.slane %v206, %v213
      %v216 = vunpack.c.l.s4 1934713408
      %v217 = vunpack.c.0.s8 %v216
      %v218 = vlaneseq
      %v219 = vshrl.u32 %v218, 7
      %v220 = vsub.s32 %v217, %v219
      %v221 = vrot.slane %v207, %v220
      %v222 = vcombine.high %v214, 0
      %v223 = vcombine.high %v221, 0
      %v226 = vunpack.c.l.s4 1983009808
      %v227 = vunpack.c.0.s8 %v226
      %v228 = vlaneseq
      %v229 = vshrl.u32 %v228, 7
      %v230 = vsub.s32 %v227, %v229
      %v231 = vrot.slane %v183, %v230
      %v234 = vunpack.c.l.s4 1983009808
      %v235 = vunpack.c.0.s8 %v234
      %v236 = vlaneseq
      %v237 = vshrl.u32 %v236, 7
      %v238 = vsub.s32 %v235, %v237
      %v239 = vrot.slane %v189, %v238
      %v240 = vcombine.low %v231, %v239
      %v241 = vcombine.high %v231, %v239
      %v243 = vunpack.c.l.s4 1934713408
      %v244 = vunpack.c.0.s8 %v243
      %v245 = vlaneseq
      %v246 = vshrl.u32 %v245, 7
      %v247 = vsub.s32 %v244, %v246
      %v248 = vrot.slane %v240, %v247
      %v250 = vunpack.c.l.s4 1934713408
      %v251 = vunpack.c.0.s8 %v250
      %v252 = vlaneseq
      %v253 = vshrl.u32 %v252, 7
      %v254 = vsub.s32 %v251, %v253
      %v255 = vrot.slane %v241, %v254
      %v256 = vcombine.high %v248, 0
      %v257 = vcombine.high %v255, 0
      %v259 = vunpack.c.l.b16 %v248
      %v260 = vpack.c.b16 %v259, %v259
      %261 = vrot.lane.b32.xlu0 %v260, 8
      %v262 = vpop.permute.xlu0 %261
      %v264 = vunpack.c.l.b16 %v222
      %v265 = vpack.c.b16 %v264, %v264
      %266 = vrot.lane.b32.xlu0 %v265, 16
      %v267 = vpop.permute.xlu0 %266
      %v269 = vunpack.c.l.b16 %v256
      %v270 = vpack.c.b16 %v269, %v269
      %271 = vrot.lane.b32.xlu0 %v270, 24
      %v272 = vpop.permute.xlu0 %271
      %v274 = vunpack.c.l.b16 %v221
      %v275 = vpack.c.b16 %v274, %v274
      %276 = vrot.lane.b32.xlu0 %v275, 32
      %v277 = vpop.permute.xlu0 %276
      %v279 = vunpack.c.l.b16 %v255
      %v280 = vpack.c.b16 %v279, %v279
      %281 = vrot.lane.b32.xlu0 %v280, 40
      %v282 = vpop.permute.xlu0 %281
      %v284 = vunpack.c.l.b16 %v223
      %v285 = vpack.c.b16 %v284, %v284
      %286 = vrot.lane.b32.xlu0 %v285, 48
      %v287 = vpop.permute.xlu0 %286
      %v289 = vunpack.c.l.b16 %v257
      %v290 = vpack.c.b16 %v289, %v289
      %291 = vrot.lane.b32.xlu0 %v290, 56
      %v292 = vpop.permute.xlu0 %291
      %vm293 = vcmask 64512
      %v296 = vsel %vm293, %v214, %v262
      %vm297 = vcmask 130048
      %v299 = vsel %vm297, %v296, %v267
      %vm300 = vcmask 195584
      %v302 = vsel %vm300, %v299, %v272
      %vm303 = vcmask 261120
      %v305 = vsel %vm303, %v302, %v277
      %vm306 = vcmask 326656
      %v308 = vsel %vm306, %v305, %v282
      %vm309 = vcmask 392192
      %v311 = vsel %vm309, %v308, %v287
      %vm312 = vcmask 457728
      %v314 = vsel %vm312, %v311, %v292
      %v315 = vld [vmem:[%s1] sm:$0xf]
      %s316 = scalar_lea.vmem %s165, 16
      %v317 = vld [vmem:[%s316] sm:$0xf]
      %v318 = vld [vmem:[%s316 + $0x4] sm:$0xf]
      %v319 = vld [vmem:[%s316 + $0x8] sm:$0xf]
      %v320 = vld [vmem:[%s316 + $0xc] sm:$0xf]
      %v323 = vpack.i.b16 %v318, %v317
      %v324 = vshrl.u32 %v317, 16
      %v325 = vshrl.u32 %v318, 16
      %v326 = vpack.i.b16 %v325, %v324
      %v329 = vpack.i.b16 %v320, %v319
      %v330 = vshrl.u32 %v319, 16
      %v331 = vshrl.u32 %v320, 16
      %v332 = vpack.i.b16 %v331, %v330
      %v335 = vunpack.c.l.s4 1983009808
      %v336 = vunpack.c.0.s8 %v335
      %v337 = vlaneseq
      %v338 = vshrl.u32 %v337, 7
      %v339 = vsub.s32 %v336, %v338
      %v340 = vrot.slane %v323, %v339
      %v343 = vunpack.c.l.s4 1983009808
      %v344 = vunpack.c.0.s8 %v343
      %v345 = vlaneseq
      %v346 = vshrl.u32 %v345, 7
      %v347 = vsub.s32 %v344, %v346
      %v348 = vrot.slane %v329, %v347
      %v349 = vcombine.low %v340, %v348
      %v350 = vcombine.high %v340, %v348
      %v352 = vunpack.c.l.s4 1934713408
      %v353 = vunpack.c.0.s8 %v352
      %v354 = vlaneseq
      %v355 = vshrl.u32 %v354, 7
      %v356 = vsub.s32 %v353, %v355
      %v357 = vrot.slane %v349, %v356
      %v359 = vunpack.c.l.s4 1934713408
      %v360 = vunpack.c.0.s8 %v359
      %v361 = vlaneseq
      %v362 = vshrl.u32 %v361, 7
      %v363 = vsub.s32 %v360, %v362
      %v364 = vrot.slane %v350, %v363
      %v365 = vcombine.high %v357, 0
      %v366 = vcombine.high %v364, 0
      %v369 = vunpack.c.l.s4 1983009808
      %v370 = vunpack.c.0.s8 %v369
      %v371 = vlaneseq
      %v372 = vshrl.u32 %v371, 7
      %v373 = vsub.s32 %v370, %v372
      %v374 = vrot.slane %v326, %v373
      %v377 = vunpack.c.l.s4 1983009808
      %v378 = vunpack.c.0.s8 %v377
      %v379 = vlaneseq
      %v380 = vshrl.u32 %v379, 7
      %v381 = vsub.s32 %v378, %v380
      %v382 = vrot.slane %v332, %v381
      %v383 = vcombine.low %v374, %v382
      %v384 = vcombine.high %v374, %v382
      %v386 = vunpack.c.l.s4 1934713408
      %v387 = vunpack.c.0.s8 %v386
      %v388 = vlaneseq
      %v389 = vshrl.u32 %v388, 7
      %v390 = vsub.s32 %v387, %v389
      %v391 = vrot.slane %v383, %v390
      %v393 = vunpack.c.l.s4 1934713408
      %v394 = vunpack.c.0.s8 %v393
      %v395 = vlaneseq
      %v396 = vshrl.u32 %v395, 7
      %v397 = vsub.s32 %v394, %v396
      %v398 = vrot.slane %v384, %v397
      %v399 = vcombine.high %v391, 0
      %v400 = vcombine.high %v398, 0
      %v402 = vunpack.c.l.b16 %v391
      %v403 = vpack.c.b16 %v402, %v402
      %404 = vrot.lane.b32.xlu0 %v403, 8
      %v405 = vpop.permute.xlu0 %404
      %v407 = vunpack.c.l.b16 %v365
      %v408 = vpack.c.b16 %v407, %v407
      %409 = vrot.lane.b32.xlu0 %v408, 16
      %v410 = vpop.permute.xlu0 %409
      %v412 = vunpack.c.l.b16 %v399
      %v413 = vpack.c.b16 %v412, %v412
      %414 = vrot.lane.b32.xlu0 %v413, 24
      %v415 = vpop.permute.xlu0 %414
      %v417 = vunpack.c.l.b16 %v364
      %v418 = vpack.c.b16 %v417, %v417
      %419 = vrot.lane.b32.xlu0 %v418, 32
      %v420 = vpop.permute.xlu0 %419
      %v422 = vunpack.c.l.b16 %v398
      %v423 = vpack.c.b16 %v422, %v422
      %424 = vrot.lane.b32.xlu0 %v423, 40
      %v425 = vpop.permute.xlu0 %424
      %v427 = vunpack.c.l.b16 %v366
      %v428 = vpack.c.b16 %v427, %v427
      %429 = vrot.lane.b32.xlu0 %v428, 48
      %v430 = vpop.permute.xlu0 %429
      %v432 = vunpack.c.l.b16 %v400
      %v433 = vpack.c.b16 %v432, %v432
      %434 = vrot.lane.b32.xlu0 %v433, 56
      %v435 = vpop.permute.xlu0 %434
      %v438 = vsel %vm293, %v357, %v405
      %v440 = vsel %vm297, %v438, %v410
      %v442 = vsel %vm300, %v440, %v415
      %v444 = vsel %vm303, %v442, %v420
      %v446 = vsel %vm306, %v444, %v425
      %v448 = vsel %vm309, %v446, %v430
      %v450 = vsel %vm312, %v448, %v435
      %s451 = scalar_lea.vmem %s1, 4
      %v452 = vld [vmem:[%s451] sm:$0xf]
      %vm453 = vcmask 31744
      %v455 = vsel %vm453, %v452, 0
      %vm457 = vcmask 1041408
      %v458 = vsel %vm457, %v450, 0
      %460 = vmatprep.subr.bf16.mxu0 0
      %461 = vmatpush1.bf16.msra.mxu0 %v458
      %462 = vmatprep.subr.bf16.mxu0 0
      %463 = vmatpush1.bf16.msra.mxu0 0
      %464 = vmatprep.subr.bf16.mxu0 0
      %465 = vmatpush1.bf16.msra.mxu0 0
      %466 = vmatprep.subr.bf16.mxu0 0
      %467 = vmatpush1.bf16.msra.mxu0 0
      %468 = vmatprep.subr.bf16.mxu0 0
      %469 = vmatpush1.bf16.msra.mxu0 0
      %470 = vmatprep.subr.bf16.mxu0 0
      %471 = vmatpush1.bf16.msra.mxu0 0
      %472 = vmatprep.subr.bf16.mxu0 0
      %473 = vmatpush1.bf16.msra.mxu0 0
      %474 = vmatprep.subr.bf16.mxu0 0
      %475 = vmatpush1.bf16.msra.mxu0 0
      %476 = vmatprep.subr.bf16.mxu0 0
      %477 = vmatpush1.bf16.msra.mxu0 0
      %478 = vmatprep.subr.bf16.mxu0 0
      %479 = vmatpush1.bf16.msra.mxu0 0
      %480 = vmatprep.subr.bf16.mxu0 0
      %481 = vmatpush1.bf16.msra.mxu0 0
      %482 = vmatprep.subr.bf16.mxu0 0
      %483 = vmatpush1.bf16.msra.mxu0 0
      %484 = vmatprep.subr.bf16.mxu0 0
      %485 = vmatpush1.bf16.msra.mxu0 0
      %486 = vmatprep.subr.bf16.mxu0 0
      %487 = vmatpush1.bf16.msra.mxu0 0
      %488 = vmatprep.subr.bf16.mxu0 0
      %489 = vmatpush1.bf16.msra.mxu0 0
      %490 = vmatprep.subr.bf16.mxu0 0
      %491 = vmatpush1.bf16.msra.mxu0 0
      %492 = vmatprep.mubr.bf16.mxu0 0
      %493 = vmatmul.mubr.bf16.gmra.mrb[0].mxu0 %v455
      %v494 = vpop.f32.mrb[0].mxu0
      %v495 = vadd.f32 0.0, %v494
      %v496 = vpop.f32.mrb[0].mxu0
      %v497 = vpop.f32.mrb[0].mxu0
      %v498 = vpop.f32.mrb[0].mxu0
      %499 = vdwg.mxu0
      %v501 = vsel %vm453, %v315, 0
      %v503 = vsel %vm457, %v314, 0
      %505 = vmatprep.subr.bf16.mxu0 0
      %506 = vmatpush1.bf16.msra.mxu0 %v503
      %507 = vmatprep.subr.bf16.mxu0 0
      %508 = vmatpush1.bf16.msra.mxu0 0
      %509 = vmatprep.subr.bf16.mxu0 0
      %510 = vmatpush1.bf16.msra.mxu0 0
      %511 = vmatprep.subr.bf16.mxu0 0
      %512 = vmatpush1.bf16.msra.mxu0 0
      %513 = vmatprep.subr.bf16.mxu0 0
      %514 = vmatpush1.bf16.msra.mxu0 0
      %515 = vmatprep.subr.bf16.mxu0 0
      %516 = vmatpush1.bf16.msra.mxu0 0
      %517 = vmatprep.subr.bf16.mxu0 0
      %518 = vmatpush1.bf16.msra.mxu0 0
      %519 = vmatprep.subr.bf16.mxu0 0
      %520 = vmatpush1.bf16.msra.mxu0 0
      %521 = vmatprep.subr.bf16.mxu0 0
      %522 = vmatpush1.bf16.msra.mxu0 0
      %523 = vmatprep.subr.bf16.mxu0 0
      %524 = vmatpush1.bf16.msra.mxu0 0
      %525 = vmatprep.subr.bf16.mxu0 0
      %526 = vmatpush1.bf16.msra.mxu0 0
      %527 = vmatprep.subr.bf16.mxu0 0
      %528 = vmatpush1.bf16.msra.mxu0 0
      %529 = vmatprep.subr.bf16.mxu0 0
      %530 = vmatpush1.bf16.msra.mxu0 0
      %531 = vmatprep.subr.bf16.mxu0 0
      %532 = vmatpush1.bf16.msra.mxu0 0
      %533 = vmatprep.subr.bf16.mxu0 0
      %534 = vmatpush1.bf16.msra.mxu0 0
      %535 = vmatprep.subr.bf16.mxu0 0
      %536 = vmatpush1.bf16.msra.mxu0 0
      %537 = vmatprep.mubr.bf16.mxu0 0
      %538 = vmatmul.mubr.bf16.gmra.mrb[0].mxu0 %v501
      %v539 = vpop.f32.mrb[0].mxu0
      %v540 = vadd.f32 %v495, %v539
      %v541 = vpop.f32.mrb[0].mxu0
      %v542 = vpop.f32.mrb[0].mxu0
      %v543 = vpop.f32.mrb[0].mxu0
      %544 = vdwg.mxu0
      %v545 = vld [vmem:[%s165] sm:$0xf]
      %v546 = vld [vmem:[%s165 + $0x4] sm:$0xf]
      %v547 = vld [vmem:[%s165 + $0x8] sm:$0xf]
      %v548 = vld [vmem:[%s165 + $0xc] sm:$0xf]
      %553 = vrot.lane.b32.xlu0 %v545, 127
      %v554 = vpop.permute.xlu0 %553
      %555 = vrot.lane.b32.xlu0 %v546, 127
      %v556 = vpop.permute.xlu0 %555
      %557 = vrot.lane.b32.xlu0 %v547, 127
      %v558 = vpop.permute.xlu0 %557
      %559 = vrot.lane.b32.xlu0 %v548, 127
      %v560 = vpop.permute.xlu0 %559
      %v563 = vpack.i.b16 %v556, %v554
      %v564 = vshrl.u32 %v554, 16
      %v565 = vshrl.u32 %v556, 16
      %v566 = vpack.i.b16 %v565, %v564
      %v569 = vpack.i.b16 %v560, %v558
      %v570 = vshrl.u32 %v558, 16
      %v571 = vshrl.u32 %v560, 16
      %v572 = vpack.i.b16 %v571, %v570
      %v575 = vunpack.c.l.s4 1983009808
      %v576 = vunpack.c.0.s8 %v575
      %v577 = vlaneseq
      %v578 = vshrl.u32 %v577, 7
      %v579 = vsub.s32 %v576, %v578
      %v580 = vrot.slane %v563, %v579
      %v583 = vunpack.c.l.s4 1983009808
      %v584 = vunpack.c.0.s8 %v583
      %v585 = vlaneseq
      %v586 = vshrl.u32 %v585, 7
      %v587 = vsub.s32 %v584, %v586
      %v588 = vrot.slane %v569, %v587
      %v589 = vcombine.low %v580, %v588
      %v590 = vcombine.high %v580, %v588
      %v592 = vunpack.c.l.s4 1934713408
      %v593 = vunpack.c.0.s8 %v592
      %v594 = vlaneseq
      %v595 = vshrl.u32 %v594, 7
      %v596 = vsub.s32 %v593, %v595
      %v597 = vrot.slane %v589, %v596
      %v599 = vunpack.c.l.s4 1934713408
      %v600 = vunpack.c.0.s8 %v599
      %v601 = vlaneseq
      %v602 = vshrl.u32 %v601, 7
      %v603 = vsub.s32 %v600, %v602
      %v604 = vrot.slane %v590, %v603
      %v605 = vcombine.high %v597, 0
      %v606 = vcombine.high %v604, 0
      %v609 = vunpack.c.l.s4 1983009808
      %v610 = vunpack.c.0.s8 %v609
      %v611 = vlaneseq
      %v612 = vshrl.u32 %v611, 7
      %v613 = vsub.s32 %v610, %v612
      %v614 = vrot.slane %v566, %v613
      %v617 = vunpack.c.l.s4 1983009808
      %v618 = vunpack.c.0.s8 %v617
      %v619 = vlaneseq
      %v620 = vshrl.u32 %v619, 7
      %v621 = vsub.s32 %v618, %v620
      %v622 = vrot.slane %v572, %v621
      %v623 = vcombine.low %v614, %v622
      %v624 = vcombine.high %v614, %v622
      %v626 = vunpack.c.l.s4 1934713408
      %v627 = vunpack.c.0.s8 %v626
      %v628 = vlaneseq
      %v629 = vshrl.u32 %v628, 7
      %v630 = vsub.s32 %v627, %v629
      %v631 = vrot.slane %v623, %v630
      %v633 = vunpack.c.l.s4 1934713408
      %v634 = vunpack.c.0.s8 %v633
      %v635 = vlaneseq
      %v636 = vshrl.u32 %v635, 7
      %v637 = vsub.s32 %v634, %v636
      %v638 = vrot.slane %v624, %v637
      %v639 = vcombine.high %v631, 0
      %v640 = vcombine.high %v638, 0
      %v642 = vunpack.c.l.b16 %v631
      %v643 = vpack.c.b16 %v642, %v642
      %644 = vrot.lane.b32.xlu0 %v643, 8
      %v645 = vpop.permute.xlu0 %644
      %v647 = vunpack.c.l.b16 %v605
      %v648 = vpack.c.b16 %v647, %v647
      %649 = vrot.lane.b32.xlu0 %v648, 16
      %v650 = vpop.permute.xlu0 %649
      %v652 = vunpack.c.l.b16 %v639
      %v653 = vpack.c.b16 %v652, %v652
      %654 = vrot.lane.b32.xlu0 %v653, 24
      %v655 = vpop.permute.xlu0 %654
      %v657 = vunpack.c.l.b16 %v604
      %v658 = vpack.c.b16 %v657, %v657
      %659 = vrot.lane.b32.xlu0 %v658, 32
      %v660 = vpop.permute.xlu0 %659
      %v662 = vunpack.c.l.b16 %v638
      %v663 = vpack.c.b16 %v662, %v662
      %664 = vrot.lane.b32.xlu0 %v663, 40
      %v665 = vpop.permute.xlu0 %664
      %v667 = vunpack.c.l.b16 %v606
      %v668 = vpack.c.b16 %v667, %v667
      %669 = vrot.lane.b32.xlu0 %v668, 48
      %v670 = vpop.permute.xlu0 %669
      %v672 = vunpack.c.l.b16 %v640
      %v673 = vpack.c.b16 %v672, %v672
      %674 = vrot.lane.b32.xlu0 %v673, 56
      %v675 = vpop.permute.xlu0 %674
      %v678 = vsel %vm293, %v597, %v645
      %v680 = vsel %vm297, %v678, %v650
      %v682 = vsel %vm300, %v680, %v655
      %v684 = vsel %vm303, %v682, %v660
      %v686 = vsel %vm306, %v684, %v665
      %v688 = vsel %vm309, %v686, %v670
      %v690 = vsel %vm312, %v688, %v675
      %s691 = scalar_lea.vmem %s1, 8
      %v692 = vld [vmem:[%s691] sm:$0xf]
      %v694 = vsel %vm453, %v692, 0
      %v696 = vsel %vm457, %v690, 0
      %698 = vmatprep.subr.bf16.mxu0 0
      %699 = vmatpush1.bf16.msra.mxu0 %v696
      %700 = vmatprep.subr.bf16.mxu0 0
      %701 = vmatpush1.bf16.msra.mxu0 0
      %702 = vmatprep.subr.bf16.mxu0 0
      %703 = vmatpush1.bf16.msra.mxu0 0
      %704 = vmatprep.subr.bf16.mxu0 0
      %705 = vmatpush1.bf16.msra.mxu0 0
      %706 = vmatprep.subr.bf16.mxu0 0
      %707 = vmatpush1.bf16.msra.mxu0 0
      %708 = vmatprep.subr.bf16.mxu0 0
      %709 = vmatpush1.bf16.msra.mxu0 0
      %710 = vmatprep.subr.bf16.mxu0 0
      %711 = vmatpush1.bf16.msra.mxu0 0
      %712 = vmatprep.subr.bf16.mxu0 0
      %713 = vmatpush1.bf16.msra.mxu0 0
      %714 = vmatprep.subr.bf16.mxu0 0
      %715 = vmatpush1.bf16.msra.mxu0 0
      %716 = vmatprep.subr.bf16.mxu0 0
      %717 = vmatpush1.bf16.msra.mxu0 0
      %718 = vmatprep.subr.bf16.mxu0 0
      %719 = vmatpush1.bf16.msra.mxu0 0
      %720 = vmatprep.subr.bf16.mxu0 0
      %721 = vmatpush1.bf16.msra.mxu0 0
      %722 = vmatprep.subr.bf16.mxu0 0
      %723 = vmatpush1.bf16.msra.mxu0 0
      %724 = vmatprep.subr.bf16.mxu0 0
      %725 = vmatpush1.bf16.msra.mxu0 0
      %726 = vmatprep.subr.bf16.mxu0 0
      %727 = vmatpush1.bf16.msra.mxu0 0
      %728 = vmatprep.subr.bf16.mxu0 0
      %729 = vmatpush1.bf16.msra.mxu0 0
      %730 = vmatprep.mubr.bf16.mxu0 0
      %731 = vmatmul.mubr.bf16.gmra.mrb[0].mxu0 %v694
      %v732 = vpop.f32.mrb[0].mxu0
      %v733 = vadd.f32 0.0, %v732
      %v734 = vpop.f32.mrb[0].mxu0
      %v735 = vpop.f32.mrb[0].mxu0
      %v736 = vpop.f32.mrb[0].mxu0
      %737 = vdwg.mxu0
      %v738 = vadd.f32 %v540, %v733
      %s739 = scalar_lea.vmem %s165, 32
      %v740 = vld [vmem:[%s739] sm:$0xf]
      %v741 = vld [vmem:[%s739 + $0x4] sm:$0xf]
      %v742 = vld [vmem:[%s739 + $0x8] sm:$0xf]
      %v743 = vld [vmem:[%s739 + $0xc] sm:$0xf]
      %v746 = vpack.i.b16 %v741, %v740
      %v747 = vshrl.u32 %v740, 16
      %v748 = vshrl.u32 %v741, 16
      %v749 = vpack.i.b16 %v748, %v747
      %v752 = vpack.i.b16 %v743, %v742
      %v753 = vshrl.u32 %v742, 16
      %v754 = vshrl.u32 %v743, 16
      %v755 = vpack.i.b16 %v754, %v753
      %v758 = vunpack.c.l.s4 1983009808
      %v759 = vunpack.c.0.s8 %v758
      %v760 = vlaneseq
      %v761 = vshrl.u32 %v760, 7
      %v762 = vsub.s32 %v759, %v761
      %v763 = vrot.slane %v746, %v762
      %v766 = vunpack.c.l.s4 1983009808
      %v767 = vunpack.c.0.s8 %v766
      %v768 = vlaneseq
      %v769 = vshrl.u32 %v768, 7
      %v770 = vsub.s32 %v767, %v769
      %v771 = vrot.slane %v752, %v770
      %v772 = vcombine.low %v763, %v771
      %v773 = vcombine.high %v763, %v771
      %v775 = vunpack.c.l.s4 1934713408
      %v776 = vunpack.c.0.s8 %v775
      %v777 = vlaneseq
      %v778 = vshrl.u32 %v777, 7
      %v779 = vsub.s32 %v776, %v778
      %v780 = vrot.slane %v772, %v779
      %v782 = vunpack.c.l.s4 1934713408
      %v783 = vunpack.c.0.s8 %v782
      %v784 = vlaneseq
      %v785 = vshrl.u32 %v784, 7
      %v786 = vsub.s32 %v783, %v785
      %v787 = vrot.slane %v773, %v786
      %v788 = vcombine.high %v780, 0
      %v789 = vcombine.high %v787, 0
      %v792 = vunpack.c.l.s4 1983009808
      %v793 = vunpack.c.0.s8 %v792
      %v794 = vlaneseq
      %v795 = vshrl.u32 %v794, 7
      %v796 = vsub.s32 %v793, %v795
      %v797 = vrot.slane %v749, %v796
      %v800 = vunpack.c.l.s4 1983009808
      %v801 = vunpack.c.0.s8 %v800
      %v802 = vlaneseq
      %v803 = vshrl.u32 %v802, 7
      %v804 = vsub.s32 %v801, %v803
      %v805 = vrot.slane %v755, %v804
      %v806 = vcombine.low %v797, %v805
      %v807 = vcombine.high %v797, %v805
      %v809 = vunpack.c.l.s4 1934713408
      %v810 = vunpack.c.0.s8 %v809
      %v811 = vlaneseq
      %v812 = vshrl.u32 %v811, 7
      %v813 = vsub.s32 %v810, %v812
      %v814 = vrot.slane %v806, %v813
      %v816 = vunpack.c.l.s4 1934713408
      %v817 = vunpack.c.0.s8 %v816
      %v818 = vlaneseq
      %v819 = vshrl.u32 %v818, 7
      %v820 = vsub.s32 %v817, %v819
      %v821 = vrot.slane %v807, %v820
      %v822 = vcombine.high %v814, 0
      %v823 = vcombine.high %v821, 0
      %v825 = vunpack.c.l.b16 %v814
      %v826 = vpack.c.b16 %v825, %v825
      %827 = vrot.lane.b32.xlu0 %v826, 8
      %v828 = vpop.permute.xlu0 %827
      %v830 = vunpack.c.l.b16 %v788
      %v831 = vpack.c.b16 %v830, %v830
      %832 = vrot.lane.b32.xlu0 %v831, 16
      %v833 = vpop.permute.xlu0 %832
      %v835 = vunpack.c.l.b16 %v822
      %v836 = vpack.c.b16 %v835, %v835
      %837 = vrot.lane.b32.xlu0 %v836, 24
      %v838 = vpop.permute.xlu0 %837
      %v840 = vunpack.c.l.b16 %v787
      %v841 = vpack.c.b16 %v840, %v840
      %842 = vrot.lane.b32.xlu0 %v841, 32
      %v843 = vpop.permute.xlu0 %842
      %v845 = vunpack.c.l.b16 %v821
      %v846 = vpack.c.b16 %v845, %v845
      %847 = vrot.lane.b32.xlu0 %v846, 40
      %v848 = vpop.permute.xlu0 %847
      %v850 = vunpack.c.l.b16 %v789
      %v851 = vpack.c.b16 %v850, %v850
      %852 = vrot.lane.b32.xlu0 %v851, 48
      %v853 = vpop.permute.xlu0 %852
      %v855 = vunpack.c.l.b16 %v823
      %v856 = vpack.c.b16 %v855, %v855
      %857 = vrot.lane.b32.xlu0 %v856, 56
      %v858 = vpop.permute.xlu0 %857
      %v861 = vsel %vm293, %v780, %v828
      %v863 = vsel %vm297, %v861, %v833
      %v865 = vsel %vm300, %v863, %v838
      %v867 = vsel %vm303, %v865, %v843
      %v869 = vsel %vm306, %v867, %v848
      %v871 = vsel %vm309, %v869, %v853
      %v873 = vsel %vm312, %v871, %v858
      %s874 = scalar_lea.vmem %s1, 12
      %v875 = vld [vmem:[%s874] sm:$0xf]
      %v877 = vsel %vm453, %v875, 0
      %v879 = vsel %vm457, %v873, 0
      %881 = vmatprep.subr.bf16.mxu0 0
      %882 = vmatpush1.bf16.msra.mxu0 %v879
      %883 = vmatprep.subr.bf16.mxu0 0
      %884 = vmatpush1.bf16.msra.mxu0 0
      %885 = vmatprep.subr.bf16.mxu0 0
      %886 = vmatpush1.bf16.msra.mxu0 0
      %887 = vmatprep.subr.bf16.mxu0 0
      %888 = vmatpush1.bf16.msra.mxu0 0
      %889 = vmatprep.subr.bf16.mxu0 0
      %890 = vmatpush1.bf16.msra.mxu0 0
      %891 = vmatprep.subr.bf16.mxu0 0
      %892 = vmatpush1.bf16.msra.mxu0 0
      %893 = vmatprep.subr.bf16.mxu0 0
      %894 = vmatpush1.bf16.msra.mxu0 0
      %895 = vmatprep.subr.bf16.mxu0 0
      %896 = vmatpush1.bf16.msra.mxu0 0
      %897 = vmatprep.subr.bf16.mxu0 0
      %898 = vmatpush1.bf16.msra.mxu0 0
      %899 = vmatprep.subr.bf16.mxu0 0
      %900 = vmatpush1.bf16.msra.mxu0 0
      %901 = vmatprep.subr.bf16.mxu0 0
      %902 = vmatpush1.bf16.msra.mxu0 0
      %903 = vmatprep.subr.bf16.mxu0 0
      %904 = vmatpush1.bf16.msra.mxu0 0
      %905 = vmatprep.subr.bf16.mxu0 0
      %906 = vmatpush1.bf16.msra.mxu0 0
      %907 = vmatprep.subr.bf16.mxu0 0
      %908 = vmatpush1.bf16.msra.mxu0 0
      %909 = vmatprep.subr.bf16.mxu0 0
      %910 = vmatpush1.bf16.msra.mxu0 0
      %911 = vmatprep.subr.bf16.mxu0 0
      %912 = vmatpush1.bf16.msra.mxu0 0
      %913 = vmatprep.mubr.bf16.mxu0 0
      %914 = vmatmul.mubr.bf16.gmra.mrb[0].mxu0 %v877
      %v915 = vpop.f32.mrb[0].mxu0
      %v916 = vadd.f32 0.0, %v915
      %v917 = vpop.f32.mrb[0].mxu0
      %v918 = vpop.f32.mrb[0].mxu0
      %v919 = vpop.f32.mrb[0].mxu0
      %920 = vdwg.mxu0
      %v921 = vadd.f32 %v738, %v916
      %s922 = scalar_lea.vmem %s165, 48
      %v923 = vld [vmem:[%s922] sm:$0xf]
      %v924 = vld [vmem:[%s922 + $0x4] sm:$0xf]
      %v925 = vld [vmem:[%s922 + $0x8] sm:$0xf]
      %v926 = vld [vmem:[%s922 + $0xc] sm:$0xf]
      %v929 = vpack.i.b16 %v924, %v923
      %v930 = vshrl.u32 %v923, 16
      %v931 = vshrl.u32 %v924, 16
      %v932 = vpack.i.b16 %v931, %v930
      %v935 = vpack.i.b16 %v926, %v925
      %v936 = vshrl.u32 %v925, 16
      %v937 = vshrl.u32 %v926, 16
      %v938 = vpack.i.b16 %v937, %v936
      %v941 = vunpack.c.l.s4 1983009808
      %v942 = vunpack.c.0.s8 %v941
      %v943 = vlaneseq
      %v944 = vshrl.u32 %v943, 7
      %v945 = vsub.s32 %v942, %v944
      %v946 = vrot.slane %v929, %v945
      %v949 = vunpack.c.l.s4 1983009808
      %v950 = vunpack.c.0.s8 %v949
      %v951 = vlaneseq
      %v952 = vshrl.u32 %v951, 7
      %v953 = vsub.s32 %v950, %v952
      %v954 = vrot.slane %v935, %v953
      %v955 = vcombine.low %v946, %v954
      %v956 = vcombine.high %v946, %v954
      %v958 = vunpack.c.l.s4 1934713408
      %v959 = vunpack.c.0.s8 %v958
      %v960 = vlaneseq
      %v961 = vshrl.u32 %v960, 7
      %v962 = vsub.s32 %v959, %v961
      %v963 = vrot.slane %v955, %v962
      %v965 = vunpack.c.l.s4 1934713408
      %v966 = vunpack.c.0.s8 %v965
      %v967 = vlaneseq
      %v968 = vshrl.u32 %v967, 7
      %v969 = vsub.s32 %v966, %v968
      %v970 = vrot.slane %v956, %v969
      %v971 = vcombine.high %v963, 0
      %v972 = vcombine.high %v970, 0
      %v975 = vunpack.c.l.s4 1983009808
      %v976 = vunpack.c.0.s8 %v975
      %v977 = vlaneseq
      %v978 = vshrl.u32 %v977, 7
      %v979 = vsub.s32 %v976, %v978
      %v980 = vrot.slane %v932, %v979
      %v983 = vunpack.c.l.s4 1983009808
      %v984 = vunpack.c.0.s8 %v983
      %v985 = vlaneseq
      %v986 = vshrl.u32 %v985, 7
      %v987 = vsub.s32 %v984, %v986
      %v988 = vrot.slane %v938, %v987
      %v989 = vcombine.low %v980, %v988
      %v990 = vcombine.high %v980, %v988
      %v992 = vunpack.c.l.s4 1934713408
      %v993 = vunpack.c.0.s8 %v992
      %v994 = vlaneseq
      %v995 = vshrl.u32 %v994, 7
      %v996 = vsub.s32 %v993, %v995
      %v997 = vrot.slane %v989, %v996
      %v999 = vunpack.c.l.s4 1934713408
      %v1000 = vunpack.c.0.s8 %v999
      %v1001 = vlaneseq
      %v1002 = vshrl.u32 %v1001, 7
      %v1003 = vsub.s32 %v1000, %v1002
      %v1004 = vrot.slane %v990, %v1003
      %v1005 = vcombine.high %v997, 0
      %v1006 = vcombine.high %v1004, 0
      %v1008 = vunpack.c.l.b16 %v997
      %v1009 = vpack.c.b16 %v1008, %v1008
      %1010 = vrot.lane.b32.xlu0 %v1009, 8
      %v1011 = vpop.permute.xlu0 %1010
      %v1013 = vunpack.c.l.b16 %v971
      %v1014 = vpack.c.b16 %v1013, %v1013
      %1015 = vrot.lane.b32.xlu0 %v1014, 16
      %v1016 = vpop.permute.xlu0 %1015
      %v1018 = vunpack.c.l.b16 %v1005
      %v1019 = vpack.c.b16 %v1018, %v1018
      %1020 = vrot.lane.b32.xlu0 %v1019, 24
      %v1021 = vpop.permute.xlu0 %1020
      %v1023 = vunpack.c.l.b16 %v970
      %v1024 = vpack.c.b16 %v1023, %v1023
      %1025 = vrot.lane.b32.xlu0 %v1024, 32
      %v1026 = vpop.permute.xlu0 %1025
      %v1028 = vunpack.c.l.b16 %v1004
      %v1029 = vpack.c.b16 %v1028, %v1028
      %1030 = vrot.lane.b32.xlu0 %v1029, 40
      %v1031 = vpop.permute.xlu0 %1030
      %v1033 = vunpack.c.l.b16 %v972
      %v1034 = vpack.c.b16 %v1033, %v1033
      %1035 = vrot.lane.b32.xlu0 %v1034, 48
      %v1036 = vpop.permute.xlu0 %1035
      %v1038 = vunpack.c.l.b16 %v1006
      %v1039 = vpack.c.b16 %v1038, %v1038
      %1040 = vrot.lane.b32.xlu0 %v1039, 56
      %v1041 = vpop.permute.xlu0 %1040
      %v1044 = vsel %vm293, %v963, %v1011
      %v1046 = vsel %vm297, %v1044, %v1016
      %v1048 = vsel %vm300, %v1046, %v1021
      %v1050 = vsel %vm303, %v1048, %v1026
      %v1052 = vsel %vm306, %v1050, %v1031
      %v1054 = vsel %vm309, %v1052, %v1036
      %v1056 = vsel %vm312, %v1054, %v1041
      %s1057 = scalar_lea.vmem %s1, 16
      %v1058 = vld [vmem:[%s1057] sm:$0xf]
      %v1060 = vsel %vm453, %v1058, 0
      %v1062 = vsel %vm457, %v1056, 0
      %1064 = vmatprep.subr.bf16.mxu0 0
      %1065 = vmatpush1.bf16.msra.mxu0 %v1062
      %1066 = vmatprep.subr.bf16.mxu0 0
      %1067 = vmatpush1.bf16.msra.mxu0 0
      %1068 = vmatprep.subr.bf16.mxu0 0
      %1069 = vmatpush1.bf16.msra.mxu0 0
      %1070 = vmatprep.subr.bf16.mxu0 0
      %1071 = vmatpush1.bf16.msra.mxu0 0
      %1072 = vmatprep.subr.bf16.mxu0 0
      %1073 = vmatpush1.bf16.msra.mxu0 0
      %1074 = vmatprep.subr.bf16.mxu0 0
      %1075 = vmatpush1.bf16.msra.mxu0 0
      %1076 = vmatprep.subr.bf16.mxu0 0
      %1077 = vmatpush1.bf16.msra.mxu0 0
      %1078 = vmatprep.subr.bf16.mxu0 0
      %1079 = vmatpush1.bf16.msra.mxu0 0
      %1080 = vmatprep.subr.bf16.mxu0 0
      %1081 = vmatpush1.bf16.msra.mxu0 0
      %1082 = vmatprep.subr.bf16.mxu0 0
      %1083 = vmatpush1.bf16.msra.mxu0 0
      %1084 = vmatprep.subr.bf16.mxu0 0
      %1085 = vmatpush1.bf16.msra.mxu0 0
      %1086 = vmatprep.subr.bf16.mxu0 0
      %1087 = vmatpush1.bf16.msra.mxu0 0
      %1088 = vmatprep.subr.bf16.mxu0 0
      %1089 = vmatpush1.bf16.msra.mxu0 0
      %1090 = vmatprep.subr.bf16.mxu0 0
      %1091 = vmatpush1.bf16.msra.mxu0 0
      %1092 = vmatprep.subr.bf16.mxu0 0
      %1093 = vmatpush1.bf16.msra.mxu0 0
      %1094 = vmatprep.subr.bf16.mxu0 0
      %1095 = vmatpush1.bf16.msra.mxu0 0
      %1096 = vmatprep.mubr.bf16.mxu0 0
      %1097 = vmatmul.mubr.bf16.gmra.mrb[0].mxu0 %v1060
      %v1098 = vpop.f32.mrb[0].mxu0
      %v1099 = vadd.f32 0.0, %v1098
      %v1100 = vpop.f32.mrb[0].mxu0
      %v1101 = vpop.f32.mrb[0].mxu0
      %v1102 = vpop.f32.mrb[0].mxu0
      %1103 = vdwg.mxu0
      %v1104 = vadd.f32 %v921, %v1099
      %v1105 = vld [vmem:[%s739] sm:$0xf]
      %v1106 = vld [vmem:[%s739 + $0x4] sm:$0xf]
      %v1107 = vld [vmem:[%s739 + $0x8] sm:$0xf]
      %v1108 = vld [vmem:[%s739 + $0xc] sm:$0xf]
      %1113 = vrot.lane.b32.xlu0 %v1105, 127
      %v1114 = vpop.permute.xlu0 %1113
      %1115 = vrot.lane.b32.xlu0 %v1106, 127
      %v1116 = vpop.permute.xlu0 %1115
      %1117 = vrot.lane.b32.xlu0 %v1107, 127
      %v1118 = vpop.permute.xlu0 %1117
      %1119 = vrot.lane.b32.xlu0 %v1108, 127
      %v1120 = vpop.permute.xlu0 %1119
      %v1123 = vpack.i.b16 %v1116, %v1114
      %v1124 = vshrl.u32 %v1114, 16
      %v1125 = vshrl.u32 %v1116, 16
      %v1126 = vpack.i.b16 %v1125, %v1124
      %v1129 = vpack.i.b16 %v1120, %v1118
      %v1130 = vshrl.u32 %v1118, 16
      %v1131 = vshrl.u32 %v1120, 16
      %v1132 = vpack.i.b16 %v1131, %v1130
      %v1135 = vunpack.c.l.s4 1983009808
      %v1136 = vunpack.c.0.s8 %v1135
      %v1137 = vlaneseq
      %v1138 = vshrl.u32 %v1137, 7
      %v1139 = vsub.s32 %v1136, %v1138
      %v1140 = vrot.slane %v1123, %v1139
      %v1143 = vunpack.c.l.s4 1983009808
      %v1144 = vunpack.c.0.s8 %v1143
      %v1145 = vlaneseq
      %v1146 = vshrl.u32 %v1145, 7
      %v1147 = vsub.s32 %v1144, %v1146
      %v1148 = vrot.slane %v1129, %v1147
      %v1149 = vcombine.low %v1140, %v1148
      %v1150 = vcombine.high %v1140, %v1148
      %v1152 = vunpack.c.l.s4 1934713408
      %v1153 = vunpack.c.0.s8 %v1152
      %v1154 = vlaneseq
      %v1155 = vshrl.u32 %v1154, 7
      %v1156 = vsub.s32 %v1153, %v1155
      %v1157 = vrot.slane %v1149, %v1156
      %v1159 = vunpack.c.l.s4 1934713408
      %v1160 = vunpack.c.0.s8 %v1159
      %v1161 = vlaneseq
      %v1162 = vshrl.u32 %v1161, 7
      %v1163 = vsub.s32 %v1160, %v1162
      %v1164 = vrot.slane %v1150, %v1163
      %v1165 = vcombine.high %v1157, 0
      %v1166 = vcombine.high %v1164, 0
      %v1169 = vunpack.c.l.s4 1983009808
      %v1170 = vunpack.c.0.s8 %v1169
      %v1171 = vlaneseq
      %v1172 = vshrl.u32 %v1171, 7
      %v1173 = vsub.s32 %v1170, %v1172
      %v1174 = vrot.slane %v1126, %v1173
      %v1177 = vunpack.c.l.s4 1983009808
      %v1178 = vunpack.c.0.s8 %v1177
      %v1179 = vlaneseq
      %v1180 = vshrl.u32 %v1179, 7
      %v1181 = vsub.s32 %v1178, %v1180
      %v1182 = vrot.slane %v1132, %v1181
      %v1183 = vcombine.low %v1174, %v1182
      %v1184 = vcombine.high %v1174, %v1182
      %v1186 = vunpack.c.l.s4 1934713408
      %v1187 = vunpack.c.0.s8 %v1186
      %v1188 = vlaneseq
      %v1189 = vshrl.u32 %v1188, 7
      %v1190 = vsub.s32 %v1187, %v1189
      %v1191 = vrot.slane %v1183, %v1190
      %v1193 = vunpack.c.l.s4 1934713408
      %v1194 = vunpack.c.0.s8 %v1193
      %v1195 = vlaneseq
      %v1196 = vshrl.u32 %v1195, 7
      %v1197 = vsub.s32 %v1194, %v1196
      %v1198 = vrot.slane %v1184, %v1197
      %v1199 = vcombine.high %v1191, 0
      %v1200 = vcombine.high %v1198, 0
      %v1202 = vunpack.c.l.b16 %v1191
      %v1203 = vpack.c.b16 %v1202, %v1202
      %1204 = vrot.lane.b32.xlu0 %v1203, 8
      %v1205 = vpop.permute.xlu0 %1204
      %v1207 = vunpack.c.l.b16 %v1165
      %v1208 = vpack.c.b16 %v1207, %v1207
      %1209 = vrot.lane.b32.xlu0 %v1208, 16
      %v1210 = vpop.permute.xlu0 %1209
      %v1212 = vunpack.c.l.b16 %v1199
      %v1213 = vpack.c.b16 %v1212, %v1212
      %1214 = vrot.lane.b32.xlu0 %v1213, 24
      %v1215 = vpop.permute.xlu0 %1214
      %v1217 = vunpack.c.l.b16 %v1164
      %v1218 = vpack.c.b16 %v1217, %v1217
      %1219 = vrot.lane.b32.xlu0 %v1218, 32
      %v1220 = vpop.permute.xlu0 %1219
      %v1222 = vunpack.c.l.b16 %v1198
      %v1223 = vpack.c.b16 %v1222, %v1222
      %1224 = vrot.lane.b32.xlu0 %v1223, 40
      %v1225 = vpop.permute.xlu0 %1224
      %v1227 = vunpack.c.l.b16 %v1166
      %v1228 = vpack.c.b16 %v1227, %v1227
      %1229 = vrot.lane.b32.xlu0 %v1228, 48
      %v1230 = vpop.permute.xlu0 %1229
      %v1232 = vunpack.c.l.b16 %v1200
      %v1233 = vpack.c.b16 %v1232, %v1232
      %1234 = vrot.lane.b32.xlu0 %v1233, 56
      %v1235 = vpop.permute.xlu0 %1234
      %v1238 = vsel %vm293, %v1157, %v1205
      %v1240 = vsel %vm297, %v1238, %v1210
      %v1242 = vsel %vm300, %v1240, %v1215
      %v1244 = vsel %vm303, %v1242, %v1220
      %v1246 = vsel %vm306, %v1244, %v1225
      %v1248 = vsel %vm309, %v1246, %v1230
      %v1250 = vsel %vm312, %v1248, %v1235
      %s1251 = scalar_lea.vmem %s1, 20
      %v1252 = vld [vmem:[%s1251] sm:$0xf]
      %v1254 = vsel %vm453, %v1252, 0
      %v1256 = vsel %vm457, %v1250, 0
      %1258 = vmatprep.subr.bf16.mxu0 0
      %1259 = vmatpush1.bf16.msra.mxu0 %v1256
      %1260 = vmatprep.subr.bf16.mxu0 0
      %1261 = vmatpush1.bf16.msra.mxu0 0
      %1262 = vmatprep.subr.bf16.mxu0 0
      %1263 = vmatpush1.bf16.msra.mxu0 0
      %1264 = vmatprep.subr.bf16.mxu0 0
      %1265 = vmatpush1.bf16.msra.mxu0 0
      %1266 = vmatprep.subr.bf16.mxu0 0
      %1267 = vmatpush1.bf16.msra.mxu0 0
      %1268 = vmatprep.subr.bf16.mxu0 0
      %1269 = vmatpush1.bf16.msra.mxu0 0
      %1270 = vmatprep.subr.bf16.mxu0 0
      %1271 = vmatpush1.bf16.msra.mxu0 0
      %1272 = vmatprep.subr.bf16.mxu0 0
      %1273 = vmatpush1.bf16.msra.mxu0 0
      %1274 = vmatprep.subr.bf16.mxu0 0
      %1275 = vmatpush1.bf16.msra.mxu0 0
      %1276 = vmatprep.subr.bf16.mxu0 0
      %1277 = vmatpush1.bf16.msra.mxu0 0
      %1278 = vmatprep.subr.bf16.mxu0 0
      %1279 = vmatpush1.bf16.msra.mxu0 0
      %1280 = vmatprep.subr.bf16.mxu0 0
      %1281 = vmatpush1.bf16.msra.mxu0 0
      %1282 = vmatprep.subr.bf16.mxu0 0
      %1283 = vmatpush1.bf16.msra.mxu0 0
      %1284 = vmatprep.subr.bf16.mxu0 0
      %1285 = vmatpush1.bf16.msra.mxu0 0
      %1286 = vmatprep.subr.bf16.mxu0 0
      %1287 = vmatpush1.bf16.msra.mxu0 0
      %1288 = vmatprep.subr.bf16.mxu0 0
      %1289 = vmatpush1.bf16.msra.mxu0 0
      %1290 = vmatprep.mubr.bf16.mxu0 0
      %1291 = vmatmul.mubr.bf16.gmra.mrb[0].mxu0 %v1254
      %v1292 = vpop.f32.mrb[0].mxu0
      %v1293 = vadd.f32 0.0, %v1292
      %v1294 = vpop.f32.mrb[0].mxu0
      %v1295 = vpop.f32.mrb[0].mxu0
      %v1296 = vpop.f32.mrb[0].mxu0
      %1297 = vdwg.mxu0
      %v1298 = vadd.f32 %v1104, %v1293
      %s1299 = scalar_lea.vmem %s165, 64
      %v1300 = vld [vmem:[%s1299] sm:$0xf]
      %v1301 = vld [vmem:[%s1299 + $0x4] sm:$0xf]
      %v1302 = vld [vmem:[%s1299 + $0x8] sm:$0xf]
      %v1303 = vld [vmem:[%s1299 + $0xc] sm:$0xf]
      %v1306 = vpack.i.b16 %v1301, %v1300
      %v1307 = vshrl.u32 %v1300, 16
      %v1308 = vshrl.u32 %v1301, 16
      %v1309 = vpack.i.b16 %v1308, %v1307
      %v1312 = vpack.i.b16 %v1303, %v1302
      %v1313 = vshrl.u32 %v1302, 16
      %v1314 = vshrl.u32 %v1303, 16
      %v1315 = vpack.i.b16 %v1314, %v1313
      %v1318 = vunpack.c.l.s4 1983009808
      %v1319 = vunpack.c.0.s8 %v1318
      %v1320 = vlaneseq
      %v1321 = vshrl.u32 %v1320, 7
      %v1322 = vsub.s32 %v1319, %v1321
      %v1323 = vrot.slane %v1306, %v1322
      %v1326 = vunpack.c.l.s4 1983009808
      %v1327 = vunpack.c.0.s8 %v1326
      %v1328 = vlaneseq
      %v1329 = vshrl.u32 %v1328, 7
      %v1330 = vsub.s32 %v1327, %v1329
      %v1331 = vrot.slane %v1312, %v1330
      %v1332 = vcombine.low %v1323, %v1331
      %v1333 = vcombine.high %v1323, %v1331
      %v1335 = vunpack.c.l.s4 1934713408
      %v1336 = vunpack.c.0.s8 %v1335
      %v1337 = vlaneseq
      %v1338 = vshrl.u32 %v1337, 7
      %v1339 = vsub.s32 %v1336, %v1338
      %v1340 = vrot.slane %v1332, %v1339
      %v1342 = vunpack.c.l.s4 1934713408
      %v1343 = vunpack.c.0.s8 %v1342
      %v1344 = vlaneseq
      %v1345 = vshrl.u32 %v1344, 7
      %v1346 = vsub.s32 %v1343, %v1345
      %v1347 = vrot.slane %v1333, %v1346
      %v1348 = vcombine.high %v1340, 0
      %v1349 = vcombine.high %v1347, 0
      %v1352 = vunpack.c.l.s4 1983009808
      %v1353 = vunpack.c.0.s8 %v1352
      %v1354 = vlaneseq
      %v1355 = vshrl.u32 %v1354, 7
      %v1356 = vsub.s32 %v1353, %v1355
      %v1357 = vrot.slane %v1309, %v1356
      %v1360 = vunpack.c.l.s4 1983009808
      %v1361 = vunpack.c.0.s8 %v1360
      %v1362 = vlaneseq
      %v1363 = vshrl.u32 %v1362, 7
      %v1364 = vsub.s32 %v1361, %v1363
      %v1365 = vrot.slane %v1315, %v1364
      %v1366 = vcombine.low %v1357, %v1365
      %v1367 = vcombine.high %v1357, %v1365
      %v1369 = vunpack.c.l.s4 1934713408
      %v1370 = vunpack.c.0.s8 %v1369
      %v1371 = vlaneseq
      %v1372 = vshrl.u32 %v1371, 7
      %v1373 = vsub.s32 %v1370, %v1372
      %v1374 = vrot.slane %v1366, %v1373
      %v1376 = vunpack.c.l.s4 1934713408
      %v1377 = vunpack.c.0.s8 %v1376
      %v1378 = vlaneseq
      %v1379 = vshrl.u32 %v1378, 7
      %v1380 = vsub.s32 %v1377, %v1379
      %v1381 = vrot.slane %v1367, %v1380
      %v1382 = vcombine.high %v1374, 0
      %v1383 = vcombine.high %v1381, 0
      %v1385 = vunpack.c.l.b16 %v1374
      %v1386 = vpack.c.b16 %v1385, %v1385
      %1387 = vrot.lane.b32.xlu0 %v1386, 8
      %v1388 = vpop.permute.xlu0 %1387
      %v1390 = vunpack.c.l.b16 %v1348
      %v1391 = vpack.c.b16 %v1390, %v1390
      %1392 = vrot.lane.b32.xlu0 %v1391, 16
      %v1393 = vpop.permute.xlu0 %1392
      %v1395 = vunpack.c.l.b16 %v1382
      %v1396 = vpack.c.b16 %v1395, %v1395
      %1397 = vrot.lane.b32.xlu0 %v1396, 24
      %v1398 = vpop.permute.xlu0 %1397
      %v1400 = vunpack.c.l.b16 %v1347
      %v1401 = vpack.c.b16 %v1400, %v1400
      %1402 = vrot.lane.b32.xlu0 %v1401, 32
      %v1403 = vpop.permute.xlu0 %1402
      %v1405 = vunpack.c.l.b16 %v1381
      %v1406 = vpack.c.b16 %v1405, %v1405
      %1407 = vrot.lane.b32.xlu0 %v1406, 40
      %v1408 = vpop.permute.xlu0 %1407
      %v1410 = vunpack.c.l.b16 %v1349
      %v1411 = vpack.c.b16 %v1410, %v1410
      %1412 = vrot.lane.b32.xlu0 %v1411, 48
      %v1413 = vpop.permute.xlu0 %1412
      %v1415 = vunpack.c.l.b16 %v1383
      %v1416 = vpack.c.b16 %v1415, %v1415
      %1417 = vrot.lane.b32.xlu0 %v1416, 56
      %v1418 = vpop.permute.xlu0 %1417
      %v1421 = vsel %vm293, %v1340, %v1388
      %v1423 = vsel %vm297, %v1421, %v1393
      %v1425 = vsel %vm300, %v1423, %v1398
      %v1427 = vsel %vm303, %v1425, %v1403
      %v1429 = vsel %vm306, %v1427, %v1408
      %v1431 = vsel %vm309, %v1429, %v1413
      %v1433 = vsel %vm312, %v1431, %v1418
      %s1434 = scalar_lea.vmem %s1, 24
      %v1435 = vld [vmem:[%s1434] sm:$0xf]
      %v1437 = vsel %vm453, %v1435, 0
      %v1439 = vsel %vm457, %v1433, 0
      %1441 = vmatprep.subr.bf16.mxu0 0
      %1442 = vmatpush1.bf16.msra.mxu0 %v1439
      %1443 = vmatprep.subr.bf16.mxu0 0
      %1444 = vmatpush1.bf16.msra.mxu0 0
      %1445 = vmatprep.subr.bf16.mxu0 0
      %1446 = vmatpush1.bf16.msra.mxu0 0
      %1447 = vmatprep.subr.bf16.mxu0 0
      %1448 = vmatpush1.bf16.msra.mxu0 0
      %1449 = vmatprep.subr.bf16.mxu0 0
      %1450 = vmatpush1.bf16.msra.mxu0 0
      %1451 = vmatprep.subr.bf16.mxu0 0
      %1452 = vmatpush1.bf16.msra.mxu0 0
      %1453 = vmatprep.subr.bf16.mxu0 0
      %1454 = vmatpush1.bf16.msra.mxu0 0
      %1455 = vmatprep.subr.bf16.mxu0 0
      %1456 = vmatpush1.bf16.msra.mxu0 0
      %1457 = vmatprep.subr.bf16.mxu0 0
      %1458 = vmatpush1.bf16.msra.mxu0 0
      %1459 = vmatprep.subr.bf16.mxu0 0
      %1460 = vmatpush1.bf16.msra.mxu0 0
      %1461 = vmatprep.subr.bf16.mxu0 0
      %1462 = vmatpush1.bf16.msra.mxu0 0
      %1463 = vmatprep.subr.bf16.mxu0 0
      %1464 = vmatpush1.bf16.msra.mxu0 0
      %1465 = vmatprep.subr.bf16.mxu0 0
      %1466 = vmatpush1.bf16.msra.mxu0 0
      %1467 = vmatprep.subr.bf16.mxu0 0
      %1468 = vmatpush1.bf16.msra.mxu0 0
      %1469 = vmatprep.subr.bf16.mxu0 0
      %1470 = vmatpush1.bf16.msra.mxu0 0
      %1471 = vmatprep.subr.bf16.mxu0 0
      %1472 = vmatpush1.bf16.msra.mxu0 0
      %1473 = vmatprep.mubr.bf16.mxu0 0
      %1474 = vmatmul.mubr.bf16.gmra.mrb[0].mxu0 %v1437
      %v1475 = vpop.f32.mrb[0].mxu0
      %v1476 = vadd.f32 0.0, %v1475
      %v1477 = vpop.f32.mrb[0].mxu0
      %v1478 = vpop.f32.mrb[0].mxu0
      %v1479 = vpop.f32.mrb[0].mxu0
      %1480 = vdwg.mxu0
      %v1481 = vadd.f32 %v1298, %v1476
      %s1482 = scalar_lea.vmem %s165, 80
      %v1483 = vld [vmem:[%s1482] sm:$0xf]
      %v1484 = vld [vmem:[%s1482 + $0x4] sm:$0xf]
      %v1485 = vld [vmem:[%s1482 + $0x8] sm:$0xf]
      %v1486 = vld [vmem:[%s1482 + $0xc] sm:$0xf]
      %v1489 = vpack.i.b16 %v1484, %v1483
      %v1490 = vshrl.u32 %v1483, 16
      %v1491 = vshrl.u32 %v1484, 16
      %v1492 = vpack.i.b16 %v1491, %v1490
      %v1495 = vpack.i.b16 %v1486, %v1485
      %v1496 = vshrl.u32 %v1485, 16
      %v1497 = vshrl.u32 %v1486, 16
      %v1498 = vpack.i.b16 %v1497, %v1496
      %v1501 = vunpack.c.l.s4 1983009808
      %v1502 = vunpack.c.0.s8 %v1501
      %v1503 = vlaneseq
      %v1504 = vshrl.u32 %v1503, 7
      %v1505 = vsub.s32 %v1502, %v1504
      %v1506 = vrot.slane %v1489, %v1505
      %v1509 = vunpack.c.l.s4 1983009808
      %v1510 = vunpack.c.0.s8 %v1509
      %v1511 = vlaneseq
      %v1512 = vshrl.u32 %v1511, 7
      %v1513 = vsub.s32 %v1510, %v1512
      %v1514 = vrot.slane %v1495, %v1513
      %v1515 = vcombine.low %v1506, %v1514
      %v1516 = vcombine.high %v1506, %v1514
      %v1518 = vunpack.c.l.s4 1934713408
      %v1519 = vunpack.c.0.s8 %v1518
      %v1520 = vlaneseq
      %v1521 = vshrl.u32 %v1520, 7
      %v1522 = vsub.s32 %v1519, %v1521
      %v1523 = vrot.slane %v1515, %v1522
      %v1525 = vunpack.c.l.s4 1934713408
      %v1526 = vunpack.c.0.s8 %v1525
      %v1527 = vlaneseq
      %v1528 = vshrl.u32 %v1527, 7
      %v1529 = vsub.s32 %v1526, %v1528
      %v1530 = vrot.slane %v1516, %v1529
      %v1531 = vcombine.high %v1523, 0
      %v1532 = vcombine.high %v1530, 0
      %v1535 = vunpack.c.l.s4 1983009808
      %v1536 = vunpack.c.0.s8 %v1535
      %v1537 = vlaneseq
      %v1538 = vshrl.u32 %v1537, 7
      %v1539 = vsub.s32 %v1536, %v1538
      %v1540 = vrot.slane %v1492, %v1539
      %v1543 = vunpack.c.l.s4 1983009808
      %v1544 = vunpack.c.0.s8 %v1543
      %v1545 = vlaneseq
      %v1546 = vshrl.u32 %v1545, 7
      %v1547 = vsub.s32 %v1544, %v1546
      %v1548 = vrot.slane %v1498, %v1547
      %v1549 = vcombine.low %v1540, %v1548
      %v1550 = vcombine.high %v1540, %v1548
      %v1552 = vunpack.c.l.s4 1934713408
      %v1553 = vunpack.c.0.s8 %v1552
      %v1554 = vlaneseq
      %v1555 = vshrl.u32 %v1554, 7
      %v1556 = vsub.s32 %v1553, %v1555
      %v1557 = vrot.slane %v1549, %v1556
      %v1559 = vunpack.c.l.s4 1934713408
      %v1560 = vunpack.c.0.s8 %v1559
      %v1561 = vlaneseq
      %v1562 = vshrl.u32 %v1561, 7
      %v1563 = vsub.s32 %v1560, %v1562
      %v1564 = vrot.slane %v1550, %v1563
      %v1565 = vcombine.high %v1557, 0
      %v1566 = vcombine.high %v1564, 0
      %v1568 = vunpack.c.l.b16 %v1557
      %v1569 = vpack.c.b16 %v1568, %v1568
      %1570 = vrot.lane.b32.xlu0 %v1569, 8
      %v1571 = vpop.permute.xlu0 %1570
      %v1573 = vunpack.c.l.b16 %v1531
      %v1574 = vpack.c.b16 %v1573, %v1573
      %1575 = vrot.lane.b32.xlu0 %v1574, 16
      %v1576 = vpop.permute.xlu0 %1575
      %v1578 = vunpack.c.l.b16 %v1565
      %v1579 = vpack.c.b16 %v1578, %v1578
      %1580 = vrot.lane.b32.xlu0 %v1579, 24
      %v1581 = vpop.permute.xlu0 %1580
      %v1583 = vunpack.c.l.b16 %v1530
      %v1584 = vpack.c.b16 %v1583, %v1583
      %1585 = vrot.lane.b32.xlu0 %v1584, 32
      %v1586 = vpop.permute.xlu0 %1585
      %v1588 = vunpack.c.l.b16 %v1564
      %v1589 = vpack.c.b16 %v1588, %v1588
      %1590 = vrot.lane.b32.xlu0 %v1589, 40
      %v1591 = vpop.permute.xlu0 %1590
      %v1593 = vunpack.c.l.b16 %v1532
      %v1594 = vpack.c.b16 %v1593, %v1593
      %1595 = vrot.lane.b32.xlu0 %v1594, 48
      %v1596 = vpop.permute.xlu0 %1595
      %v1598 = vunpack.c.l.b16 %v1566
      %v1599 = vpack.c.b16 %v1598, %v1598
      %1600 = vrot.lane.b32.xlu0 %v1599, 56
      %v1601 = vpop.permute.xlu0 %1600
      %v1604 = vsel %vm293, %v1523, %v1571
      %v1606 = vsel %vm297, %v1604, %v1576
      %v1608 = vsel %vm300, %v1606, %v1581
      %v1610 = vsel %vm303, %v1608, %v1586
      %v1612 = vsel %vm306, %v1610, %v1591
      %v1614 = vsel %vm309, %v1612, %v1596
      %v1616 = vsel %vm312, %v1614, %v1601
      %s1617 = scalar_lea.vmem %s1, 28
      %v1618 = vld [vmem:[%s1617] sm:$0xf]
      %v1620 = vsel %vm453, %v1618, 0
      %v1622 = vsel %vm457, %v1616, 0
      %1624 = vmatprep.subr.bf16.mxu0 0
      %1625 = vmatpush1.bf16.msra.mxu0 %v1622
      %1626 = vmatprep.subr.bf16.mxu0 0
      %1627 = vmatpush1.bf16.msra.mxu0 0
      %1628 = vmatprep.subr.bf16.mxu0 0
      %1629 = vmatpush1.bf16.msra.mxu0 0
      %1630 = vmatprep.subr.bf16.mxu0 0
      %1631 = vmatpush1.bf16.msra.mxu0 0
      %1632 = vmatprep.subr.bf16.mxu0 0
      %1633 = vmatpush1.bf16.msra.mxu0 0
      %1634 = vmatprep.subr.bf16.mxu0 0
      %1635 = vmatpush1.bf16.msra.mxu0 0
      %1636 = vmatprep.subr.bf16.mxu0 0
      %1637 = vmatpush1.bf16.msra.mxu0 0
      %1638 = vmatprep.subr.bf16.mxu0 0
      %1639 = vmatpush1.bf16.msra.mxu0 0
      %1640 = vmatprep.subr.bf16.mxu0 0
      %1641 = vmatpush1.bf16.msra.mxu0 0
      %1642 = vmatprep.subr.bf16.mxu0 0
      %1643 = vmatpush1.bf16.msra.mxu0 0
      %1644 = vmatprep.subr.bf16.mxu0 0
      %1645 = vmatpush1.bf16.msra.mxu0 0
      %1646 = vmatprep.subr.bf16.mxu0 0
      %1647 = vmatpush1.bf16.msra.mxu0 0
      %1648 = vmatprep.subr.bf16.mxu0 0
      %1649 = vmatpush1.bf16.msra.mxu0 0
      %1650 = vmatprep.subr.bf16.mxu0 0
      %1651 = vmatpush1.bf16.msra.mxu0 0
      %1652 = vmatprep.subr.bf16.mxu0 0
      %1653 = vmatpush1.bf16.msra.mxu0 0
      %1654 = vmatprep.subr.bf16.mxu0 0
      %1655 = vmatpush1.bf16.msra.mxu0 0
      %1656 = vmatprep.mubr.bf16.mxu0 0
      %1657 = vmatmul.mubr.bf16.gmra.mrb[0].mxu0 %v1620
      %v1658 = vpop.f32.mrb[0].mxu0
      %v1659 = vadd.f32 0.0, %v1658
      %v1660 = vpop.f32.mrb[0].mxu0
      %v1661 = vpop.f32.mrb[0].mxu0
      %v1662 = vpop.f32.mrb[0].mxu0
      %1663 = vdwg.mxu0
      %v1664 = vadd.f32 %v1481, %v1659
      %v1665 = vld [vmem:[%s1299] sm:$0xf]
      %v1666 = vld [vmem:[%s1299 + $0x4] sm:$0xf]
      %v1667 = vld [vmem:[%s1299 + $0x8] sm:$0xf]
      %v1668 = vld [vmem:[%s1299 + $0xc] sm:$0xf]
      %1673 = vrot.lane.b32.xlu0 %v1665, 127
      %v1674 = vpop.permute.xlu0 %1673
      %1675 = vrot.lane.b32.xlu0 %v1666, 127
      %v1676 = vpop.permute.xlu0 %1675
      %1677 = vrot.lane.b32.xlu0 %v1667, 127
      %v1678 = vpop.permute.xlu0 %1677
      %1679 = vrot.lane.b32.xlu0 %v1668, 127
      %v1680 = vpop.permute.xlu0 %1679
      %v1683 = vpack.i.b16 %v1676, %v1674
      %v1684 = vshrl.u32 %v1674, 16
      %v1685 = vshrl.u32 %v1676, 16
      %v1686 = vpack.i.b16 %v1685, %v1684
      %v1689 = vpack.i.b16 %v1680, %v1678
      %v1690 = vshrl.u32 %v1678, 16
      %v1691 = vshrl.u32 %v1680, 16
      %v1692 = vpack.i.b16 %v1691, %v1690
      %v1695 = vunpack.c.l.s4 1983009808
      %v1696 = vunpack.c.0.s8 %v1695
      %v1697 = vlaneseq
      %v1698 = vshrl.u32 %v1697, 7
      %v1699 = vsub.s32 %v1696, %v1698
      %v1700 = vrot.slane %v1683, %v1699
      %v1703 = vunpack.c.l.s4 1983009808
      %v1704 = vunpack.c.0.s8 %v1703
      %v1705 = vlaneseq
      %v1706 = vshrl.u32 %v1705, 7
      %v1707 = vsub.s32 %v1704, %v1706
      %v1708 = vrot.slane %v1689, %v1707
      %v1709 = vcombine.low %v1700, %v1708
      %v1710 = vcombine.high %v1700, %v1708
      %v1712 = vunpack.c.l.s4 1934713408
      %v1713 = vunpack.c.0.s8 %v1712
      %v1714 = vlaneseq
      %v1715 = vshrl.u32 %v1714, 7
      %v1716 = vsub.s32 %v1713, %v1715
      %v1717 = vrot.slane %v1709, %v1716
      %v1719 = vunpack.c.l.s4 1934713408
      %v1720 = vunpack.c.0.s8 %v1719
      %v1721 = vlaneseq
      %v1722 = vshrl.u32 %v1721, 7
      %v1723 = vsub.s32 %v1720, %v1722
      %v1724 = vrot.slane %v1710, %v1723
      %v1725 = vcombine.high %v1717, 0
      %v1726 = vcombine.high %v1724, 0
      %v1729 = vunpack.c.l.s4 1983009808
      %v1730 = vunpack.c.0.s8 %v1729
      %v1731 = vlaneseq
      %v1732 = vshrl.u32 %v1731, 7
      %v1733 = vsub.s32 %v1730, %v1732
      %v1734 = vrot.slane %v1686, %v1733
      %v1737 = vunpack.c.l.s4 1983009808
      %v1738 = vunpack.c.0.s8 %v1737
      %v1739 = vlaneseq
      %v1740 = vshrl.u32 %v1739, 7
      %v1741 = vsub.s32 %v1738, %v1740
      %v1742 = vrot.slane %v1692, %v1741
      %v1743 = vcombine.low %v1734, %v1742
      %v1744 = vcombine.high %v1734, %v1742
      %v1746 = vunpack.c.l.s4 1934713408
      %v1747 = vunpack.c.0.s8 %v1746
      %v1748 = vlaneseq
      %v1749 = vshrl.u32 %v1748, 7
      %v1750 = vsub.s32 %v1747, %v1749
      %v1751 = vrot.slane %v1743, %v1750
      %v1753 = vunpack.c.l.s4 1934713408
      %v1754 = vunpack.c.0.s8 %v1753
      %v1755 = vlaneseq
      %v1756 = vshrl.u32 %v1755, 7
      %v1757 = vsub.s32 %v1754, %v1756
      %v1758 = vrot.slane %v1744, %v1757
      %v1759 = vcombine.high %v1751, 0
      %v1760 = vcombine.high %v1758, 0
      %v1762 = vunpack.c.l.b16 %v1751
      %v1763 = vpack.c.b16 %v1762, %v1762
      %1764 = vrot.lane.b32.xlu0 %v1763, 8
      %v1765 = vpop.permute.xlu0 %1764
      %v1767 = vunpack.c.l.b16 %v1725
      %v1768 = vpack.c.b16 %v1767, %v1767
      %1769 = vrot.lane.b32.xlu0 %v1768, 16
      %v1770 = vpop.permute.xlu0 %1769
      %v1772 = vunpack.c.l.b16 %v1759
      %v1773 = vpack.c.b16 %v1772, %v1772
      %1774 = vrot.lane.b32.xlu0 %v1773, 24
      %v1775 = vpop.permute.xlu0 %1774
      %v1777 = vunpack.c.l.b16 %v1724
      %v1778 = vpack.c.b16 %v1777, %v1777
      %1779 = vrot.lane.b32.xlu0 %v1778, 32
      %v1780 = vpop.permute.xlu0 %1779
      %v1782 = vunpack.c.l.b16 %v1758
      %v1783 = vpack.c.b16 %v1782, %v1782
      %1784 = vrot.lane.b32.xlu0 %v1783, 40
      %v1785 = vpop.permute.xlu0 %1784
      %v1787 = vunpack.c.l.b16 %v1726
      %v1788 = vpack.c.b16 %v1787, %v1787
      %1789 = vrot.lane.b32.xlu0 %v1788, 48
      %v1790 = vpop.permute.xlu0 %1789
      %v1792 = vunpack.c.l.b16 %v1760
      %v1793 = vpack.c.b16 %v1792, %v1792
      %1794 = vrot.lane.b32.xlu0 %v1793, 56
      %v1795 = vpop.permute.xlu0 %1794
      %v1798 = vsel %vm293, %v1717, %v1765
      %v1800 = vsel %vm297, %v1798, %v1770
      %v1802 = vsel %vm300, %v1800, %v1775
      %v1804 = vsel %vm303, %v1802, %v1780
      %v1806 = vsel %vm306, %v1804, %v1785
      %v1808 = vsel %vm309, %v1806, %v1790
      %v1810 = vsel %vm312, %v1808, %v1795
      %s1811 = scalar_lea.vmem %s1, 32
      %v1812 = vld [vmem:[%s1811] sm:$0xf]
      %v1814 = vsel %vm453, %v1812, 0
      %v1816 = vsel %vm457, %v1810, 0
      %1818 = vmatprep.subr.bf16.mxu0 0
      %1819 = vmatpush1.bf16.msra.mxu0 %v1816
      %1820 = vmatprep.subr.bf16.mxu0 0
      %1821 = vmatpush1.bf16.msra.mxu0 0
      %1822 = vmatprep.subr.bf16.mxu0 0
      %1823 = vmatpush1.bf16.msra.mxu0 0
      %1824 = vmatprep.subr.bf16.mxu0 0
      %1825 = vmatpush1.bf16.msra.mxu0 0
      %1826 = vmatprep.subr.bf16.mxu0 0
      %1827 = vmatpush1.bf16.msra.mxu0 0
      %1828 = vmatprep.subr.bf16.mxu0 0
      %1829 = vmatpush1.bf16.msra.mxu0 0
      %1830 = vmatprep.subr.bf16.mxu0 0
      %1831 = vmatpush1.bf16.msra.mxu0 0
      %1832 = vmatprep.subr.bf16.mxu0 0
      %1833 = vmatpush1.bf16.msra.mxu0 0
      %1834 = vmatprep.subr.bf16.mxu0 0
      %1835 = vmatpush1.bf16.msra.mxu0 0
      %1836 = vmatprep.subr.bf16.mxu0 0
      %1837 = vmatpush1.bf16.msra.mxu0 0
      %1838 = vmatprep.subr.bf16.mxu0 0
      %1839 = vmatpush1.bf16.msra.mxu0 0
      %1840 = vmatprep.subr.bf16.mxu0 0
      %1841 = vmatpush1.bf16.msra.mxu0 0
      %1842 = vmatprep.subr.bf16.mxu0 0
      %1843 = vmatpush1.bf16.msra.mxu0 0
      %1844 = vmatprep.subr.bf16.mxu0 0
      %1845 = vmatpush1.bf16.msra.mxu0 0
      %1846 = vmatprep.subr.bf16.mxu0 0
      %1847 = vmatpush1.bf16.msra.mxu0 0
      %1848 = vmatprep.subr.bf16.mxu0 0
      %1849 = vmatpush1.bf16.msra.mxu0 0
      %1850 = vmatprep.mubr.bf16.mxu0 0
      %1851 = vmatmul.mubr.bf16.gmra.mrb[0].mxu0 %v1814
      %v1852 = vpop.f32.mrb[0].mxu0
      %v1853 = vadd.f32 0.0, %v1852
      %v1854 = vpop.f32.mrb[0].mxu0
      %v1855 = vpop.f32.mrb[0].mxu0
      %v1856 = vpop.f32.mrb[0].mxu0
      %1857 = vdwg.mxu0
      %v1858 = vadd.f32 %v1664, %v1853
      %vm1859 = vcmask 523264
      %v1860 = vsel %vm1859, %v1858, 0.0
      %1861 = vadd.xlane.f32.xlu0 %v1860
      %v1862 = vpop.xlane.xlu0 %1861
      %v1863 = vmul.f32 %v1858, %v1858
      %v1864 = vsel %vm1859, %v1863, 0.0
      %1865 = vadd.xlane.f32.xlu0 %v1864
      %v1866 = vpop.xlane.xlu0 %1865
      %vm1867 = vcmask 7168
      %v1868 = vsel %vm1867, %v1862, %v1866
      %vm1869 = vcmask 15360
      %1870 = vst.msk [vmem:[%s172] sm:$0xff] %vm1869, %v1868
      %p1871 = scmp.lt.s32.totalorder %s17, 1
      %s1872 = scalar_select %p1871, %s17, 1
      %p1873 = scmp.lt.s32.totalorder %s18, 0
      %s1874 = scalar_select %p1873, %s18, 0
      %s1875 = sadd.s32 %s1874, %s1872
      %s1876 = smul.addr %s1875, 8
      %s1877 = scalar_lea.vmem %s2, %s1876
      // Predicated region
      $region29: #{encoder_forward.2} parent=27 // pred_check
        %p1878 = pneg %p94
      $region30: #{encoder_forward.2} parent=27 // pred_check_branch
        %1880 = sbr.rel (%p1878) target = $region32
      $region31: #{encoder_forward.2} parent=27 // pred_region
        _
      $region32: #{encoder_forward.2} parent=27 // pred_fallthru
        _
    $region28: #{encoder_forward.2} parent=5 // pred_fallthru
      _
    %p1881 = scmp.le.s32.totalorder 2, %s8
    // Predicated region
    $region33: #{encoder_forward.2} parent=5 // pred_check
      %p1882 = pneg %p1881
    $region34: #{encoder_forward.2} parent=5 // pred_check_branch
      %1884 = sbr.rel (%p1882) target = $region36
    $region35: #{encoder_forward.2} parent=5 // pred_region
      %s1885 = ssub.s32 %s8, 2
      // Predicated region
      $region37: #{encoder_forward.2} parent=35 // pred_check
        %p1886 = pneg %p100
      $region38: #{encoder_forward.2} parent=35 // pred_check_branch
        %1888 = sbr.rel (%p1886) target = $region40
      $region39: #{encoder_forward.2} parent=35 // pred_region
        %p1889 = scmp.lt.s32.totalorder %s19, 1
        %s1890 = scalar_select %p1889, %s19, 1
        %p1891 = scmp.lt.s32.totalorder %s20, 0
        %s1892 = scalar_select %p1891, %s20, 0
        %s1893 = sadd.s32 %s1892, %s1890
        %s1894 = smul.addr %s1893, 8
        %s1895 = scalar_lea.vmem %s2, %s1894
      $region40: #{encoder_forward.2} parent=35 // pred_fallthru
        _
    $region36: #{encoder_forward.2} parent=5 // pred_fallthru
      _
  $region6: #{encoder_forward.2} parent=0 // loop_footer
    %s12 = sadd.s32 1, %s8
  $region7: #{encoder_forward.2} parent=0 // loop_footer_branch
    %7 = sbr.rel target = $region3
  $region8: #{encoder_forward.2} parent=0 // loop_exit
    _

// kernel: encoder_forward.3
$region0: #{encoder_forward.3}
  #allocation0 [shape = 'u32[]', space=smem, size = 0x4, offset = 0x4, fixed_abs, tag = 'smem constant byte address 0x4 - core index']
  #allocation1 [shape = 'u32[144,128]{1,0:T(1,128)}', space=vmem, size = 0x12000, scoped, tag = 'internal scratch']
  %s0 = inlined_call_operand.vmem [shape: bf16[2,24,8,9], index: 0, kind: input, shape index: {}]
  %s1 = inlined_call_operand.vmem [shape: bf16[9,8,4], index: 1, kind: input, shape index: {}]
  %s2 = inlined_call_operand.vmem [shape: f32[8,1], index: 2, kind: input, shape index: {}]
  %s3 = inlined_call_operand.vmem [shape: f32[8,1], index: 3, kind: input, shape index: {}]
  %s4 = inlined_call_operand.vmem [shape: f32[2,8,64], index: 4, kind: output, shape index: {}]
  %s5 = sld [smem:[#allocation0]]
  $region49: #{encoder_forward.3} parent=0
    _
  %s7 = ssub.s32 1, %s5
  %s8 = scalar_select 0, %s7, %s5
  loop: start=0, step=1, limit=4
  $region2: #{encoder_forward.3} parent=0 // loop_pre_header
    _
  $region3: #{encoder_forward.3} parent=0 // loop_header
    %s10 = sphi 0, %s14
    %p11 = scmp.ge.s32.totalorder %s10, 4
    %s17 = sphi 0, %s29
    %s18 = sphi 0, %s25
    %s19 = sphi 0, %s17
    %s20 = sphi 0, %s18
    %s21 = sphi 0, %s19
    %s22 = sphi 0, %s20
    %s34 = sphi 0, %s36
    %s37 = sphi 0, %s34
    %s38 = sphi 0, %s37
    %s54 = sphi 0, %s38
    %s58 = sphi 0, %s58
    %s60 = sphi 0, %s58
    %s61 = sphi 0, %s60
    %s75 = sphi 0, %s61
    %s79 = sphi 0, %s79
    %s81 = sphi 0, %s79
    %s82 = sphi 0, %s81
    %s96 = sphi 0, %s82
    %s100 = sphi 0, %s100
    %s102 = sphi 0, %s100
    %s103 = sphi 0, %s102
    %s117 = sphi 0, %s103
    %s125 = sphi 0, %s127
    %s128 = sphi 0, %s125
    %s129 = sphi 0, %s128
    %s145 = sphi 0, %s129
  $region4: #{encoder_forward.3} parent=0 // loop_header_branch
    %13 = sbr.rel (%p11) target = $region8
  $region5: #{encoder_forward.3} parent=0 // loop_body
    %s15 = ssub.s32 %s10, 1
    %s16 = ssub.s32 %s10, 2
    %s23 = sadd.s32 1, %s18
    %p24 = scmp.ge.s32.totalorder %s23, 1
    %s25 = scalar_select %p24, 0, %s23
    %s26 = sadd.s32 1, %s17
    %s27 = scalar_select %p24, %s26, %s17
    %p28 = scmp.ge.s32.totalorder %s27, 2
    %s29 = scalar_select %p28, 0, %s27
    %s30 = ssub.s32 %s17, %s29
    %s31 = ssub.s32 %s18, %s25
    %s32 = sor.u32 %s30, %s31
    %p33 = scmp.eq.s32.totalorder %s32, 0
    %s35 = sadd.s32 %s34, 1
    %s36 = scalar_select %p33, %s34, %s35
    %p39 = pneg %p33
    %p40 = scmp.eq.s32.totalorder %s10, 1
    %p41 = por %p39, %p40
    %p42 = scmp.ne.s32.totalorder %s34, %s37
    %p43 = scmp.eq.s32.totalorder %s10, 0
    %p44 = por %p42, %p43
    %p45 = scmp.ne.s32.totalorder %s34, %s37
    %p46 = scmp.eq.s32.totalorder %s15, 1
    %p47 = por %p45, %p46
    %p48 = scmp.ne.s32.totalorder %s37, %s38
    %p49 = scmp.eq.s32.totalorder %s15, 0
    %p50 = por %p48, %p49
    %p51 = scmp.ne.s32.totalorder %s37, %s38
    %p52 = scmp.eq.s32.totalorder %s16, 1
    %p53 = por %p51, %p52
    %p55 = scmp.ne.s32.totalorder %s38, %s54
    %p56 = scmp.eq.s32.totalorder %s16, 0
    %p57 = por %p55, %p56
    %s59 = sadd.s32 %s58, 1
    %p62 = scmp.eq.s32.totalorder %s10, 1
    %p63 = scmp.ne.s32.totalorder %s58, %s60
    %p64 = scmp.eq.s32.totalorder %s10, 0
    %p65 = por %p63, %p64
    %p66 = scmp.ne.s32.totalorder %s58, %s60
    %p67 = scmp.eq.s32.totalorder %s15, 1
    %p68 = por %p66, %p67
    %p69 = scmp.ne.s32.totalorder %s60, %s61
    %p70 = scmp.eq.s32.totalorder %s15, 0
    %p71 = por %p69, %p70
    %p72 = scmp.ne.s32.totalorder %s60, %s61
    %p73 = scmp.eq.s32.totalorder %s16, 1
    %p74 = por %p72, %p73
    %p76 = scmp.ne.s32.totalorder %s61, %s75
    %p77 = scmp.eq.s32.totalorder %s16, 0
    %p78 = por %p76, %p77
    %s80 = sadd.s32 %s79, 1
    %p83 = scmp.eq.s32.totalorder %s10, 1
    %p84 = scmp.ne.s32.totalorder %s79, %s81
    %p85 = scmp.eq.s32.totalorder %s10, 0
    %p86 = por %p84, %p85
    %p87 = scmp.ne.s32.totalorder %s79, %s81
    %p88 = scmp.eq.s32.totalorder %s15, 1
    %p89 = por %p87, %p88
    %p90 = scmp.ne.s32.totalorder %s81, %s82
    %p91 = scmp.eq.s32.totalorder %s15, 0
    %p92 = por %p90, %p91
    %p93 = scmp.ne.s32.totalorder %s81, %s82
    %p94 = scmp.eq.s32.totalorder %s16, 1
    %p95 = por %p93, %p94
    %p97 = scmp.ne.s32.totalorder %s82, %s96
    %p98 = scmp.eq.s32.totalorder %s16, 0
    %p99 = por %p97, %p98
    %s101 = sadd.s32 %s100, 1
    %p104 = scmp.eq.s32.totalorder %s10, 1
    %p105 = scmp.ne.s32.totalorder %s100, %s102
    %p106 = scmp.eq.s32.totalorder %s10, 0
    %p107 = por %p105, %p106
    %p108 = scmp.ne.s32.totalorder %s100, %s102
    %p109 = scmp.eq.s32.totalorder %s15, 1
    %p110 = por %p108, %p109
    %p111 = scmp.ne.s32.totalorder %s102, %s103
    %p112 = scmp.eq.s32.totalorder %s15, 0
    %p113 = por %p111, %p112
    %p114 = scmp.ne.s32.totalorder %s102, %s103
    %p115 = scmp.eq.s32.totalorder %s16, 1
    %p116 = por %p114, %p115
    %p118 = scmp.ne.s32.totalorder %s103, %s117
    %p119 = scmp.eq.s32.totalorder %s16, 0
    %p120 = por %p118, %p119
    %s121 = ssub.s32 %s17, %s29
    %s122 = ssub.s32 %s18, %s25
    %s123 = sor.u32 %s121, %s122
    %p124 = scmp.eq.s32.totalorder %s123, 0
    %s126 = sadd.s32 %s125, 1
    %s127 = scalar_select %p124, %s125, %s126
    %p130 = pneg %p124
    %p131 = scmp.eq.s32.totalorder %s10, 1
    %p132 = por %p130, %p131
    %p133 = scmp.ne.s32.totalorder %s125, %s128
    %p134 = scmp.eq.s32.totalorder %s10, 0
    %p135 = por %p133, %p134
    %p136 = scmp.ne.s32.totalorder %s125, %s128
    %p137 = scmp.eq.s32.totalorder %s15, 1
    %p138 = por %p136, %p137
    %p139 = scmp.ne.s32.totalorder %s128, %s129
    %p140 = scmp.eq.s32.totalorder %s15, 0
    %p141 = por %p139, %p140
    %p142 = scmp.ne.s32.totalorder %s128, %s129
    %p143 = scmp.eq.s32.totalorder %s16, 1
    %p144 = por %p142, %p143
    %p146 = scmp.ne.s32.totalorder %s129, %s145
    %p147 = scmp.eq.s32.totalorder %s16, 0
    %p148 = por %p146, %p147
    %p149 = scmp.le.s32.totalorder 1, %s10
    %p150 = scmp.lt.s32.totalorder %s10, 3
    %p151 = pnand %p149, %p150
    %p152 = pneg %p151
    // Predicated region
    $region9: #{encoder_forward.3} parent=5 // pred_check
      _
    $region10: #{encoder_forward.3} parent=5 // pred_check_branch
      %154 = sbr.rel (%p151) target = $region12
    $region11: #{encoder_forward.3} parent=5 // pred_region
      %s155 = ssub.s32 %s10, 1
      // Predicated region
      $region13: #{encoder_forward.3} parent=11 // pred_check
        %p156 = pneg %p71
      $region14: #{encoder_forward.3} parent=11 // pred_check_branch
        %158 = sbr.rel (%p156) target = $region16
      $region15: #{encoder_forward.3} parent=11 // pred_region
        _
      $region16: #{encoder_forward.3} parent=11 // pred_fallthru
        _
      // Predicated region
      $region17: #{encoder_forward.3} parent=11 // pred_check
        %p159 = pneg %p92
      $region18: #{encoder_forward.3} parent=11 // pred_check_branch
        %161 = sbr.rel (%p159) target = $region20
      $region19: #{encoder_forward.3} parent=11 // pred_region
        _
      $region20: #{encoder_forward.3} parent=11 // pred_fallthru
        _
      // Predicated region
      $region21: #{encoder_forward.3} parent=11 // pred_check
        %p162 = pneg %p113
      $region22: #{encoder_forward.3} parent=11 // pred_check_branch
        %164 = sbr.rel (%p162) target = $region24
      $region23: #{encoder_forward.3} parent=11 // pred_region
        _
      $region24: #{encoder_forward.3} parent=11 // pred_fallthru
        _
    $region12: #{encoder_forward.3} parent=5 // pred_fallthru
      _
    %p165 = scmp.lt.s32.totalorder %s10, 2
    // Predicated region
    $region25: #{encoder_forward.3} parent=5 // pred_check
      %p166 = pneg %p165
    $region26: #{encoder_forward.3} parent=5 // pred_check_branch
      %168 = sbr.rel (%p166) target = $region28
    $region27: #{encoder_forward.3} parent=5 // pred_region
      // Predicated region
      $region29: #{encoder_forward.3} parent=27 // pred_check
        %p169 = pneg %p44
      $region30: #{encoder_forward.3} parent=27 // pred_check_branch
        %171 = sbr.rel (%p169) target = $region32
      $region31: #{encoder_forward.3} parent=27 // pred_region
        %p172 = scmp.lt.s32.totalorder %s17, 1
        %s173 = scalar_select %p172, %s17, 1
        %p174 = scmp.lt.s32.totalorder %s18, 0
        %s175 = scalar_select %p174, %s18, 0
        %s176 = smul.addr %s173, 24
        %s177 = sadd.s32 %s175, %s176
        %s178 = smul.addr %s177, 4
        %s179 = scalar_lea.vmem %s0, %s178
      $region32: #{encoder_forward.3} parent=27 // pred_fallthru
        _
    $region28: #{encoder_forward.3} parent=5 // pred_fallthru
      _
    %p180 = scmp.le.s32.totalorder 1, %s10
    %p181 = scmp.lt.s32.totalorder %s10, 3
    %p182 = pnand %p180, %p181
    %p183 = pneg %p182
    // Predicated region
    $region33: #{encoder_forward.3} parent=5 // pred_check
      _
    $region34: #{encoder_forward.3} parent=5 // pred_check_branch
      %185 = sbr.rel (%p182) target = $region36
    $region35: #{encoder_forward.3} parent=5 // pred_region
      %s186 = ssub.s32 %s10, 1
      %p187 = scmp.lt.s32.totalorder %s19, 1
      %s188 = scalar_select %p187, %s19, 1
      %p189 = scmp.lt.s32.totalorder %s20, 0
      %s190 = scalar_select %p189, %s20, 0
      %s191 = smul.addr %s188, 24
      %s192 = sadd.s32 %s190, %s191
      %s193 = smul.addr %s192, 4
      %s194 = scalar_lea.vmem %s0, %s193
      %p195 = pneg %p50
      %p196 = pneg %p47
      %p197 = pneg %p71
      %p198 = pneg %p68
      %p199 = pneg %p92
      %p200 = pneg %p89
      %p201 = pneg %p113
      %p202 = pneg %p110
      %p203 = pneg %p141
      %p204 = pneg %p138
      %p205 = scmp.lt.s32.totalorder %s19, 1
      %s206 = scalar_select %p205, %s19, 1
      %p207 = scmp.lt.s32.totalorder %s20, 0
      %s208 = scalar_select %p207, %s20, 0
      %s209 = sadd.s32 %s208, %s206
      %s210 = smul.addr %s209, 8
      %s211 = scalar_lea.vmem %s4, %s210
      %p212 = scmp.lt.s32.totalorder %s19, 1
      %s213 = scalar_select %p212, %s19, 1
      %p214 = scmp.lt.s32.totalorder %s20, 0
      %s215 = scalar_select %p214, %s20, 0
      %s216 = smul.addr %s213, 24
      %s217 = sadd.s32 %s215, %s216
      %s218 = smul.addr %s217, 4
      %s219 = scalar_lea.vmem %s0, %s218
      %p220 = scmp.lt.s32.totalorder %s19, 1
      %s221 = scalar_select %p220, %s19, 1
      %p222 = scmp.lt.s32.totalorder %s20, 0
      %s223 = scalar_select %p222, %s20, 0
      %s224 = sadd.s32 %s223, %s221
      %s225 = smul.addr %s224, 8
      %s226 = scalar_lea.vmem %s4, %s225
      %v228 = vld [vmem:[%s219] sm:$0xf]
      %v229 = vld [vmem:[%s219 + $0x4] sm:$0xf]
      %v230 = vld [vmem:[%s219 + $0x8] sm:$0xf]
      %v231 = vld [vmem:[%s219 + $0xc] sm:$0xf]
      %v234 = vpack.i.b16 %v229, %v228
      %v235 = vshrl.u32 %v228, 16
      %v236 = vshrl.u32 %v229, 16
      %v237 = vpack.i.b16 %v236, %v235
      %v240 = vpack.i.b16 %v231, %v230
      %v241 = vshrl.u32 %v230, 16
      %v242 = vshrl.u32 %v231, 16
      %v243 = vpack.i.b16 %v242, %v241
      %v246 = vunpack.c.l.s4 1983009808
      %v247 = vunpack.c.0.s8 %v246
      %v248 = vlaneseq
      %v249 = vshrl.u32 %v248, 7
      %v250 = vsub.s32 %v247, %v249
      %v251 = vrot.slane %v234, %v250
      %v254 = vunpack.c.l.s4 1983009808
      %v255 = vunpack.c.0.s8 %v254
      %v256 = vlaneseq
      %v257 = vshrl.u32 %v256, 7
      %v258 = vsub.s32 %v255, %v257
      %v259 = vrot.slane %v240, %v258
      %v260 = vcombine.low %v251, %v259
      %v261 = vcombine.high %v251, %v259
      %v263 = vunpack.c.l.s4 1934713408
      %v264 = vunpack.c.0.s8 %v263
      %v265 = vlaneseq
      %v266 = vshrl.u32 %v265, 7
      %v267 = vsub.s32 %v264, %v266
      %v268 = vrot.slane %v260, %v267
      %v270 = vunpack.c.l.s4 1934713408
      %v271 = vunpack.c.0.s8 %v270
      %v272 = vlaneseq
      %v273 = vshrl.u32 %v272, 7
      %v274 = vsub.s32 %v271, %v273
      %v275 = vrot.slane %v261, %v274
      %v276 = vcombine.high %v268, 0
      %v277 = vcombine.high %v275, 0
      %v280 = vunpack.c.l.s4 1983009808
      %v281 = vunpack.c.0.s8 %v280
      %v282 = vlaneseq
      %v283 = vshrl.u32 %v282, 7
      %v284 = vsub.s32 %v281, %v283
      %v285 = vrot.slane %v237, %v284
      %v288 = vunpack.c.l.s4 1983009808
      %v289 = vunpack.c.0.s8 %v288
      %v290 = vlaneseq
      %v291 = vshrl.u32 %v290, 7
      %v292 = vsub.s32 %v289, %v291
      %v293 = vrot.slane %v243, %v292
      %v294 = vcombine.low %v285, %v293
      %v295 = vcombine.high %v285, %v293
      %v297 = vunpack.c.l.s4 1934713408
      %v298 = vunpack.c.0.s8 %v297
      %v299 = vlaneseq
      %v300 = vshrl.u32 %v299, 7
      %v301 = vsub.s32 %v298, %v300
      %v302 = vrot.slane %v294, %v301
      %v304 = vunpack.c.l.s4 1934713408
      %v305 = vunpack.c.0.s8 %v304
      %v306 = vlaneseq
      %v307 = vshrl.u32 %v306, 7
      %v308 = vsub.s32 %v305, %v307
      %v309 = vrot.slane %v295, %v308
      %v310 = vcombine.high %v302, 0
      %v311 = vcombine.high %v309, 0
      %v313 = vunpack.c.l.b16 %v302
      %v314 = vpack.c.b16 %v313, %v313
      %315 = vrot.lane.b32.xlu0 %v314, 8
      %v316 = vpop.permute.xlu0 %315
      %v318 = vunpack.c.l.b16 %v276
      %v319 = vpack.c.b16 %v318, %v318
      %320 = vrot.lane.b32.xlu0 %v319, 16
      %v321 = vpop.permute.xlu0 %320
      %v323 = vunpack.c.l.b16 %v310
      %v324 = vpack.c.b16 %v323, %v323
      %325 = vrot.lane.b32.xlu0 %v324, 24
      %v326 = vpop.permute.xlu0 %325
      %v328 = vunpack.c.l.b16 %v275
      %v329 = vpack.c.b16 %v328, %v328
      %330 = vrot.lane.b32.xlu0 %v329, 32
      %v331 = vpop.permute.xlu0 %330
      %v333 = vunpack.c.l.b16 %v309
      %v334 = vpack.c.b16 %v333, %v333
      %335 = vrot.lane.b32.xlu0 %v334, 40
      %v336 = vpop.permute.xlu0 %335
      %v338 = vunpack.c.l.b16 %v277
      %v339 = vpack.c.b16 %v338, %v338
      %340 = vrot.lane.b32.xlu0 %v339, 48
      %v341 = vpop.permute.xlu0 %340
      %v343 = vunpack.c.l.b16 %v311
      %v344 = vpack.c.b16 %v343, %v343
      %345 = vrot.lane.b32.xlu0 %v344, 56
      %v346 = vpop.permute.xlu0 %345
      %vm347 = vcmask 64512
      %v350 = vsel %vm347, %v268, %v316
      %vm351 = vcmask 130048
      %v353 = vsel %vm351, %v350, %v321
      %vm354 = vcmask 195584
      %v356 = vsel %vm354, %v353, %v326
      %vm357 = vcmask 261120
      %v359 = vsel %vm357, %v356, %v331
      %vm360 = vcmask 326656
      %v362 = vsel %vm360, %v359, %v336
      %vm363 = vcmask 392192
      %v365 = vsel %vm363, %v362, %v341
      %vm366 = vcmask 457728
      %v368 = vsel %vm366, %v365, %v346
      %v369 = vld [vmem:[%s1] sm:$0xf]
      %s370 = scalar_lea.vmem %s219, 16
      %v371 = vld [vmem:[%s370] sm:$0xf]
      %v372 = vld [vmem:[%s370 + $0x4] sm:$0xf]
      %v373 = vld [vmem:[%s370 + $0x8] sm:$0xf]
      %v374 = vld [vmem:[%s370 + $0xc] sm:$0xf]
      %v377 = vpack.i.b16 %v372, %v371
      %v378 = vshrl.u32 %v371, 16
      %v379 = vshrl.u32 %v372, 16
      %v380 = vpack.i.b16 %v379, %v378
      %v383 = vpack.i.b16 %v374, %v373
      %v384 = vshrl.u32 %v373, 16
      %v385 = vshrl.u32 %v374, 16
      %v386 = vpack.i.b16 %v385, %v384
      %v389 = vunpack.c.l.s4 1983009808
      %v390 = vunpack.c.0.s8 %v389
      %v391 = vlaneseq
      %v392 = vshrl.u32 %v391, 7
      %v393 = vsub.s32 %v390, %v392
      %v394 = vrot.slane %v377, %v393
      %v397 = vunpack.c.l.s4 1983009808
      %v398 = vunpack.c.0.s8 %v397
      %v399 = vlaneseq
      %v400 = vshrl.u32 %v399, 7
      %v401 = vsub.s32 %v398, %v400
      %v402 = vrot.slane %v383, %v401
      %v403 = vcombine.low %v394, %v402
      %v404 = vcombine.high %v394, %v402
      %v406 = vunpack.c.l.s4 1934713408
      %v407 = vunpack.c.0.s8 %v406
      %v408 = vlaneseq
      %v409 = vshrl.u32 %v408, 7
      %v410 = vsub.s32 %v407, %v409
      %v411 = vrot.slane %v403, %v410
      %v413 = vunpack.c.l.s4 1934713408
      %v414 = vunpack.c.0.s8 %v413
      %v415 = vlaneseq
      %v416 = vshrl.u32 %v415, 7
      %v417 = vsub.s32 %v414, %v416
      %v418 = vrot.slane %v404, %v417
      %v419 = vcombine.high %v411, 0
      %v420 = vcombine.high %v418, 0
      %v423 = vunpack.c.l.s4 1983009808
      %v424 = vunpack.c.0.s8 %v423
      %v425 = vlaneseq
      %v426 = vshrl.u32 %v425, 7
      %v427 = vsub.s32 %v424, %v426
      %v428 = vrot.slane %v380, %v427
      %v431 = vunpack.c.l.s4 1983009808
      %v432 = vunpack.c.0.s8 %v431
      %v433 = vlaneseq
      %v434 = vshrl.u32 %v433, 7
      %v435 = vsub.s32 %v432, %v434
      %v436 = vrot.slane %v386, %v435
      %v437 = vcombine.low %v428, %v436
      %v438 = vcombine.high %v428, %v436
      %v440 = vunpack.c.l.s4 1934713408
      %v441 = vunpack.c.0.s8 %v440
      %v442 = vlaneseq
      %v443 = vshrl.u32 %v442, 7
      %v444 = vsub.s32 %v441, %v443
      %v445 = vrot.slane %v437, %v444
      %v447 = vunpack.c.l.s4 1934713408
      %v448 = vunpack.c.0.s8 %v447
      %v449 = vlaneseq
      %v450 = vshrl.u32 %v449, 7
      %v451 = vsub.s32 %v448, %v450
      %v452 = vrot.slane %v438, %v451
      %v453 = vcombine.high %v445, 0
      %v454 = vcombine.high %v452, 0
      %v456 = vunpack.c.l.b16 %v445
      %v457 = vpack.c.b16 %v456, %v456
      %458 = vrot.lane.b32.xlu0 %v457, 8
      %v459 = vpop.permute.xlu0 %458
      %v461 = vunpack.c.l.b16 %v419
      %v462 = vpack.c.b16 %v461, %v461
      %463 = vrot.lane.b32.xlu0 %v462, 16
      %v464 = vpop.permute.xlu0 %463
      %v466 = vunpack.c.l.b16 %v453
      %v467 = vpack.c.b16 %v466, %v466
      %468 = vrot.lane.b32.xlu0 %v467, 24
      %v469 = vpop.permute.xlu0 %468
      %v471 = vunpack.c.l.b16 %v418
      %v472 = vpack.c.b16 %v471, %v471
      %473 = vrot.lane.b32.xlu0 %v472, 32
      %v474 = vpop.permute.xlu0 %473
      %v476 = vunpack.c.l.b16 %v452
      %v477 = vpack.c.b16 %v476, %v476
      %478 = vrot.lane.b32.xlu0 %v477, 40
      %v479 = vpop.permute.xlu0 %478
      %v481 = vunpack.c.l.b16 %v420
      %v482 = vpack.c.b16 %v481, %v481
      %483 = vrot.lane.b32.xlu0 %v482, 48
      %v484 = vpop.permute.xlu0 %483
      %v486 = vunpack.c.l.b16 %v454
      %v487 = vpack.c.b16 %v486, %v486
      %488 = vrot.lane.b32.xlu0 %v487, 56
      %v489 = vpop.permute.xlu0 %488
      %v492 = vsel %vm347, %v411, %v459
      %v494 = vsel %vm351, %v492, %v464
      %v496 = vsel %vm354, %v494, %v469
      %v498 = vsel %vm357, %v496, %v474
      %v500 = vsel %vm360, %v498, %v479
      %v502 = vsel %vm363, %v500, %v484
      %v504 = vsel %vm366, %v502, %v489
      %s505 = scalar_lea.vmem %s1, 4
      %v506 = vld [vmem:[%s505] sm:$0xf]
      %vm507 = vcmask 31744
      %v509 = vsel %vm507, %v506, 0
      %vm511 = vcmask 1041408
      %v512 = vsel %vm511, %v504, 0
      %514 = vmatprep.subr.bf16.mxu0 0
      %515 = vmatpush1.bf16.msra.mxu0 %v512
      %516 = vmatprep.subr.bf16.mxu0 0
      %517 = vmatpush1.bf16.msra.mxu0 0
      %518 = vmatprep.subr.bf16.mxu0 0
      %519 = vmatpush1.bf16.msra.mxu0 0
      %520 = vmatprep.subr.bf16.mxu0 0
      %521 = vmatpush1.bf16.msra.mxu0 0
      %522 = vmatprep.subr.bf16.mxu0 0
      %523 = vmatpush1.bf16.msra.mxu0 0
      %524 = vmatprep.subr.bf16.mxu0 0
      %525 = vmatpush1.bf16.msra.mxu0 0
      %526 = vmatprep.subr.bf16.mxu0 0
      %527 = vmatpush1.bf16.msra.mxu0 0
      %528 = vmatprep.subr.bf16.mxu0 0
      %529 = vmatpush1.bf16.msra.mxu0 0
      %530 = vmatprep.subr.bf16.mxu0 0
      %531 = vmatpush1.bf16.msra.mxu0 0
      %532 = vmatprep.subr.bf16.mxu0 0
      %533 = vmatpush1.bf16.msra.mxu0 0
      %534 = vmatprep.subr.bf16.mxu0 0
      %535 = vmatpush1.bf16.msra.mxu0 0
      %536 = vmatprep.subr.bf16.mxu0 0
      %537 = vmatpush1.bf16.msra.mxu0 0
      %538 = vmatprep.subr.bf16.mxu0 0
      %539 = vmatpush1.bf16.msra.mxu0 0
      %540 = vmatprep.subr.bf16.mxu0 0
      %541 = vmatpush1.bf16.msra.mxu0 0
      %542 = vmatprep.subr.bf16.mxu0 0
      %543 = vmatpush1.bf16.msra.mxu0 0
      %544 = vmatprep.subr.bf16.mxu0 0
      %545 = vmatpush1.bf16.msra.mxu0 0
      %546 = vmatprep.mubr.bf16.mxu0 0
      %547 = vmatmul.mubr.bf16.gmra.mrb[0].mxu0 %v509
      %v548 = vpop.f32.mrb[0].mxu0
      %v549 = vadd.f32 0.0, %v548
      %v550 = vpop.f32.mrb[0].mxu0
      %v551 = vpop.f32.mrb[0].mxu0
      %v552 = vpop.f32.mrb[0].mxu0
      %553 = vdwg.mxu0
      %v555 = vsel %vm507, %v369, 0
      %v557 = vsel %vm511, %v368, 0
      %559 = vmatprep.subr.bf16.mxu0 0
      %560 = vmatpush1.bf16.msra.mxu0 %v557
      %561 = vmatprep.subr.bf16.mxu0 0
      %562 = vmatpush1.bf16.msra.mxu0 0
      %563 = vmatprep.subr.bf16.mxu0 0
      %564 = vmatpush1.bf16.msra.mxu0 0
      %565 = vmatprep.subr.bf16.mxu0 0
      %566 = vmatpush1.bf16.msra.mxu0 0
      %567 = vmatprep.subr.bf16.mxu0 0
      %568 = vmatpush1.bf16.msra.mxu0 0
      %569 = vmatprep.subr.bf16.mxu0 0
      %570 = vmatpush1.bf16.msra.mxu0 0
      %571 = vmatprep.subr.bf16.mxu0 0
      %572 = vmatpush1.bf16.msra.mxu0 0
      %573 = vmatprep.subr.bf16.mxu0 0
      %574 = vmatpush1.bf16.msra.mxu0 0
      %575 = vmatprep.subr.bf16.mxu0 0
      %576 = vmatpush1.bf16.msra.mxu0 0
      %577 = vmatprep.subr.bf16.mxu0 0
      %578 = vmatpush1.bf16.msra.mxu0 0
      %579 = vmatprep.subr.bf16.mxu0 0
      %580 = vmatpush1.bf16.msra.mxu0 0
      %581 = vmatprep.subr.bf16.mxu0 0
      %582 = vmatpush1.bf16.msra.mxu0 0
      %583 = vmatprep.subr.bf16.mxu0 0
      %584 = vmatpush1.bf16.msra.mxu0 0
      %585 = vmatprep.subr.bf16.mxu0 0
      %586 = vmatpush1.bf16.msra.mxu0 0
      %587 = vmatprep.subr.bf16.mxu0 0
      %588 = vmatpush1.bf16.msra.mxu0 0
      %589 = vmatprep.subr.bf16.mxu0 0
      %590 = vmatpush1.bf16.msra.mxu0 0
      %591 = vmatprep.mubr.bf16.mxu0 0
      %592 = vmatmul.mubr.bf16.gmra.mrb[0].mxu0 %v555
      %v593 = vpop.f32.mrb[0].mxu0
      %v594 = vadd.f32 %v549, %v593
      %v595 = vpop.f32.mrb[0].mxu0
      %v596 = vpop.f32.mrb[0].mxu0
      %v597 = vpop.f32.mrb[0].mxu0
      %598 = vdwg.mxu0
      %v599 = vld [vmem:[%s219] sm:$0xf]
      %v600 = vld [vmem:[%s219 + $0x4] sm:$0xf]
      %v601 = vld [vmem:[%s219 + $0x8] sm:$0xf]
      %v602 = vld [vmem:[%s219 + $0xc] sm:$0xf]
      %607 = vrot.lane.b32.xlu0 %v599, 127
      %v608 = vpop.permute.xlu0 %607
      %609 = vrot.lane.b32.xlu0 %v600, 127
      %v610 = vpop.permute.xlu0 %609
      %611 = vrot.lane.b32.xlu0 %v601, 127
      %v612 = vpop.permute.xlu0 %611
      %613 = vrot.lane.b32.xlu0 %v602, 127
      %v614 = vpop.permute.xlu0 %613
      %v617 = vpack.i.b16 %v610, %v608
      %v618 = vshrl.u32 %v608, 16
      %v619 = vshrl.u32 %v610, 16
      %v620 = vpack.i.b16 %v619, %v618
      %v623 = vpack.i.b16 %v614, %v612
      %v624 = vshrl.u32 %v612, 16
      %v625 = vshrl.u32 %v614, 16
      %v626 = vpack.i.b16 %v625, %v624
      %v629 = vunpack.c.l.s4 1983009808
      %v630 = vunpack.c.0.s8 %v629
      %v631 = vlaneseq
      %v632 = vshrl.u32 %v631, 7
      %v633 = vsub.s32 %v630, %v632
      %v634 = vrot.slane %v617, %v633
      %v637 = vunpack.c.l.s4 1983009808
      %v638 = vunpack.c.0.s8 %v637
      %v639 = vlaneseq
      %v640 = vshrl.u32 %v639, 7
      %v641 = vsub.s32 %v638, %v640
      %v642 = vrot.slane %v623, %v641
      %v643 = vcombine.low %v634, %v642
      %v644 = vcombine.high %v634, %v642
      %v646 = vunpack.c.l.s4 1934713408
      %v647 = vunpack.c.0.s8 %v646
      %v648 = vlaneseq
      %v649 = vshrl.u32 %v648, 7
      %v650 = vsub.s32 %v647, %v649
      %v651 = vrot.slane %v643, %v650
      %v653 = vunpack.c.l.s4 1934713408
      %v654 = vunpack.c.0.s8 %v653
      %v655 = vlaneseq
      %v656 = vshrl.u32 %v655, 7
      %v657 = vsub.s32 %v654, %v656
      %v658 = vrot.slane %v644, %v657
      %v659 = vcombine.high %v651, 0
      %v660 = vcombine.high %v658, 0
      %v663 = vunpack.c.l.s4 1983009808
      %v664 = vunpack.c.0.s8 %v663
      %v665 = vlaneseq
      %v666 = vshrl.u32 %v665, 7
      %v667 = vsub.s32 %v664, %v666
      %v668 = vrot.slane %v620, %v667
      %v671 = vunpack.c.l.s4 1983009808
      %v672 = vunpack.c.0.s8 %v671
      %v673 = vlaneseq
      %v674 = vshrl.u32 %v673, 7
      %v675 = vsub.s32 %v672, %v674
      %v676 = vrot.slane %v626, %v675
      %v677 = vcombine.low %v668, %v676
      %v678 = vcombine.high %v668, %v676
      %v680 = vunpack.c.l.s4 1934713408
      %v681 = vunpack.c.0.s8 %v680
      %v682 = vlaneseq
      %v683 = vshrl.u32 %v682, 7
      %v684 = vsub.s32 %v681, %v683
      %v685 = vrot.slane %v677, %v684
      %v687 = vunpack.c.l.s4 1934713408
      %v688 = vunpack.c.0.s8 %v687
      %v689 = vlaneseq
      %v690 = vshrl.u32 %v689, 7
      %v691 = vsub.s32 %v688, %v690
      %v692 = vrot.slane %v678, %v691
      %v693 = vcombine.high %v685, 0
      %v694 = vcombine.high %v692, 0
      %v696 = vunpack.c.l.b16 %v685
      %v697 = vpack.c.b16 %v696, %v696
      %698 = vrot.lane.b32.xlu0 %v697, 8
      %v699 = vpop.permute.xlu0 %698
      %v701 = vunpack.c.l.b16 %v659
      %v702 = vpack.c.b16 %v701, %v701
      %703 = vrot.lane.b32.xlu0 %v702, 16
      %v704 = vpop.permute.xlu0 %703
      %v706 = vunpack.c.l.b16 %v693
      %v707 = vpack.c.b16 %v706, %v706
      %708 = vrot.lane.b32.xlu0 %v707, 24
      %v709 = vpop.permute.xlu0 %708
      %v711 = vunpack.c.l.b16 %v658
      %v712 = vpack.c.b16 %v711, %v711
      %713 = vrot.lane.b32.xlu0 %v712, 32
      %v714 = vpop.permute.xlu0 %713
      %v716 = vunpack.c.l.b16 %v692
      %v717 = vpack.c.b16 %v716, %v716
      %718 = vrot.lane.b32.xlu0 %v717, 40
      %v719 = vpop.permute.xlu0 %718
      %v721 = vunpack.c.l.b16 %v660
      %v722 = vpack.c.b16 %v721, %v721
      %723 = vrot.lane.b32.xlu0 %v722, 48
      %v724 = vpop.permute.xlu0 %723
      %v726 = vunpack.c.l.b16 %v694
      %v727 = vpack.c.b16 %v726, %v726
      %728 = vrot.lane.b32.xlu0 %v727, 56
      %v729 = vpop.permute.xlu0 %728
      %v732 = vsel %vm347, %v651, %v699
      %v734 = vsel %vm351, %v732, %v704
      %v736 = vsel %vm354, %v734, %v709
      %v738 = vsel %vm357, %v736, %v714
      %v740 = vsel %vm360, %v738, %v719
      %v742 = vsel %vm363, %v740, %v724
      %v744 = vsel %vm366, %v742, %v729
      %s745 = scalar_lea.vmem %s1, 8
      %v746 = vld [vmem:[%s745] sm:$0xf]
      %v748 = vsel %vm507, %v746, 0
      %v750 = vsel %vm511, %v744, 0
      %752 = vmatprep.subr.bf16.mxu0 0
      %753 = vmatpush1.bf16.msra.mxu0 %v750
      %754 = vmatprep.subr.bf16.mxu0 0
      %755 = vmatpush1.bf16.msra.mxu0 0
      %756 = vmatprep.subr.bf16.mxu0 0
      %757 = vmatpush1.bf16.msra.mxu0 0
      %758 = vmatprep.subr.bf16.mxu0 0
      %759 = vmatpush1.bf16.msra.mxu0 0
      %760 = vmatprep.subr.bf16.mxu0 0
      %761 = vmatpush1.bf16.msra.mxu0 0
      %762 = vmatprep.subr.bf16.mxu0 0
      %763 = vmatpush1.bf16.msra.mxu0 0
      %764 = vmatprep.subr.bf16.mxu0 0
      %765 = vmatpush1.bf16.msra.mxu0 0
      %766 = vmatprep.subr.bf16.mxu0 0
      %767 = vmatpush1.bf16.msra.mxu0 0
      %768 = vmatprep.subr.bf16.mxu0 0
      %769 = vmatpush1.bf16.msra.mxu0 0
      %770 = vmatprep.subr.bf16.mxu0 0
      %771 = vmatpush1.bf16.msra.mxu0 0
      %772 = vmatprep.subr.bf16.mxu0 0
      %773 = vmatpush1.bf16.msra.mxu0 0
      %774 = vmatprep.subr.bf16.mxu0 0
      %775 = vmatpush1.bf16.msra.mxu0 0
      %776 = vmatprep.subr.bf16.mxu0 0
      %777 = vmatpush1.bf16.msra.mxu0 0
      %778 = vmatprep.subr.bf16.mxu0 0
      %779 = vmatpush1.bf16.msra.mxu0 0
      %780 = vmatprep.subr.bf16.mxu0 0
      %781 = vmatpush1.bf16.msra.mxu0 0
      %782 = vmatprep.subr.bf16.mxu0 0
      %783 = vmatpush1.bf16.msra.mxu0 0
      %784 = vmatprep.mubr.bf16.mxu0 0
      %785 = vmatmul.mubr.bf16.gmra.mrb[0].mxu0 %v748
      %v786 = vpop.f32.mrb[0].mxu0
      %v787 = vadd.f32 0.0, %v786
      %v788 = vpop.f32.mrb[0].mxu0
      %v789 = vpop.f32.mrb[0].mxu0
      %v790 = vpop.f32.mrb[0].mxu0
      %791 = vdwg.mxu0
      %v792 = vadd.f32 %v594, %v787
      %s793 = scalar_lea.vmem %s219, 32
      %v794 = vld [vmem:[%s793] sm:$0xf]
      %v795 = vld [vmem:[%s793 + $0x4] sm:$0xf]
      %v796 = vld [vmem:[%s793 + $0x8] sm:$0xf]
      %v797 = vld [vmem:[%s793 + $0xc] sm:$0xf]
      %v800 = vpack.i.b16 %v795, %v794
      %v801 = vshrl.u32 %v794, 16
      %v802 = vshrl.u32 %v795, 16
      %v803 = vpack.i.b16 %v802, %v801
      %v806 = vpack.i.b16 %v797, %v796
      %v807 = vshrl.u32 %v796, 16
      %v808 = vshrl.u32 %v797, 16
      %v809 = vpack.i.b16 %v808, %v807
      %v812 = vunpack.c.l.s4 1983009808
      %v813 = vunpack.c.0.s8 %v812
      %v814 = vlaneseq
      %v815 = vshrl.u32 %v814, 7
      %v816 = vsub.s32 %v813, %v815
      %v817 = vrot.slane %v800, %v816
      %v820 = vunpack.c.l.s4 1983009808
      %v821 = vunpack.c.0.s8 %v820
      %v822 = vlaneseq
      %v823 = vshrl.u32 %v822, 7
      %v824 = vsub.s32 %v821, %v823
      %v825 = vrot.slane %v806, %v824
      %v826 = vcombine.low %v817, %v825
      %v827 = vcombine.high %v817, %v825
      %v829 = vunpack.c.l.s4 1934713408
      %v830 = vunpack.c.0.s8 %v829
      %v831 = vlaneseq
      %v832 = vshrl.u32 %v831, 7
      %v833 = vsub.s32 %v830, %v832
      %v834 = vrot.slane %v826, %v833
      %v836 = vunpack.c.l.s4 1934713408
      %v837 = vunpack.c.0.s8 %v836
      %v838 = vlaneseq
      %v839 = vshrl.u32 %v838, 7
      %v840 = vsub.s32 %v837, %v839
      %v841 = vrot.slane %v827, %v840
      %v842 = vcombine.high %v834, 0
      %v843 = vcombine.high %v841, 0
      %v846 = vunpack.c.l.s4 1983009808
      %v847 = vunpack.c.0.s8 %v846
      %v848 = vlaneseq
      %v849 = vshrl.u32 %v848, 7
      %v850 = vsub.s32 %v847, %v849
      %v851 = vrot.slane %v803, %v850
      %v854 = vunpack.c.l.s4 1983009808
      %v855 = vunpack.c.0.s8 %v854
      %v856 = vlaneseq
      %v857 = vshrl.u32 %v856, 7
      %v858 = vsub.s32 %v855, %v857
      %v859 = vrot.slane %v809, %v858
      %v860 = vcombine.low %v851, %v859
      %v861 = vcombine.high %v851, %v859
      %v863 = vunpack.c.l.s4 1934713408
      %v864 = vunpack.c.0.s8 %v863
      %v865 = vlaneseq
      %v866 = vshrl.u32 %v865, 7
      %v867 = vsub.s32 %v864, %v866
      %v868 = vrot.slane %v860, %v867
      %v870 = vunpack.c.l.s4 1934713408
      %v871 = vunpack.c.0.s8 %v870
      %v872 = vlaneseq
      %v873 = vshrl.u32 %v872, 7
      %v874 = vsub.s32 %v871, %v873
      %v875 = vrot.slane %v861, %v874
      %v876 = vcombine.high %v868, 0
      %v877 = vcombine.high %v875, 0
      %v879 = vunpack.c.l.b16 %v868
      %v880 = vpack.c.b16 %v879, %v879
      %881 = vrot.lane.b32.xlu0 %v880, 8
      %v882 = vpop.permute.xlu0 %881
      %v884 = vunpack.c.l.b16 %v842
      %v885 = vpack.c.b16 %v884, %v884
      %886 = vrot.lane.b32.xlu0 %v885, 16
      %v887 = vpop.permute.xlu0 %886
      %v889 = vunpack.c.l.b16 %v876
      %v890 = vpack.c.b16 %v889, %v889
      %891 = vrot.lane.b32.xlu0 %v890, 24
      %v892 = vpop.permute.xlu0 %891
      %v894 = vunpack.c.l.b16 %v841
      %v895 = vpack.c.b16 %v894, %v894
      %896 = vrot.lane.b32.xlu0 %v895, 32
      %v897 = vpop.permute.xlu0 %896
      %v899 = vunpack.c.l.b16 %v875
      %v900 = vpack.c.b16 %v899, %v899
      %901 = vrot.lane.b32.xlu0 %v900, 40
      %v902 = vpop.permute.xlu0 %901
      %v904 = vunpack.c.l.b16 %v843
      %v905 = vpack.c.b16 %v904, %v904
      %906 = vrot.lane.b32.xlu0 %v905, 48
      %v907 = vpop.permute.xlu0 %906
      %v909 = vunpack.c.l.b16 %v877
      %v910 = vpack.c.b16 %v909, %v909
      %911 = vrot.lane.b32.xlu0 %v910, 56
      %v912 = vpop.permute.xlu0 %911
      %v915 = vsel %vm347, %v834, %v882
      %v917 = vsel %vm351, %v915, %v887
      %v919 = vsel %vm354, %v917, %v892
      %v921 = vsel %vm357, %v919, %v897
      %v923 = vsel %vm360, %v921, %v902
      %v925 = vsel %vm363, %v923, %v907
      %v927 = vsel %vm366, %v925, %v912
      %s928 = scalar_lea.vmem %s1, 12
      %v929 = vld [vmem:[%s928] sm:$0xf]
      %v931 = vsel %vm507, %v929, 0
      %v933 = vsel %vm511, %v927, 0
      %935 = vmatprep.subr.bf16.mxu0 0
      %936 = vmatpush1.bf16.msra.mxu0 %v933
      %937 = vmatprep.subr.bf16.mxu0 0
      %938 = vmatpush1.bf16.msra.mxu0 0
      %939 = vmatprep.subr.bf16.mxu0 0
      %940 = vmatpush1.bf16.msra.mxu0 0
      %941 = vmatprep.subr.bf16.mxu0 0
      %942 = vmatpush1.bf16.msra.mxu0 0
      %943 = vmatprep.subr.bf16.mxu0 0
      %944 = vmatpush1.bf16.msra.mxu0 0
      %945 = vmatprep.subr.bf16.mxu0 0
      %946 = vmatpush1.bf16.msra.mxu0 0
      %947 = vmatprep.subr.bf16.mxu0 0
      %948 = vmatpush1.bf16.msra.mxu0 0
      %949 = vmatprep.subr.bf16.mxu0 0
      %950 = vmatpush1.bf16.msra.mxu0 0
      %951 = vmatprep.subr.bf16.mxu0 0
      %952 = vmatpush1.bf16.msra.mxu0 0
      %953 = vmatprep.subr.bf16.mxu0 0
      %954 = vmatpush1.bf16.msra.mxu0 0
      %955 = vmatprep.subr.bf16.mxu0 0
      %956 = vmatpush1.bf16.msra.mxu0 0
      %957 = vmatprep.subr.bf16.mxu0 0
      %958 = vmatpush1.bf16.msra.mxu0 0
      %959 = vmatprep.subr.bf16.mxu0 0
      %960 = vmatpush1.bf16.msra.mxu0 0
      %961 = vmatprep.subr.bf16.mxu0 0
      %962 = vmatpush1.bf16.msra.mxu0 0
      %963 = vmatprep.subr.bf16.mxu0 0
      %964 = vmatpush1.bf16.msra.mxu0 0
      %965 = vmatprep.subr.bf16.mxu0 0
      %966 = vmatpush1.bf16.msra.mxu0 0
      %967 = vmatprep.mubr.bf16.mxu0 0
      %968 = vmatmul.mubr.bf16.gmra.mrb[0].mxu0 %v931
      %v969 = vpop.f32.mrb[0].mxu0
      %v970 = vadd.f32 0.0, %v969
      %v971 = vpop.f32.mrb[0].mxu0
      %v972 = vpop.f32.mrb[0].mxu0
      %v973 = vpop.f32.mrb[0].mxu0
      %974 = vdwg.mxu0
      %v975 = vadd.f32 %v792, %v970
      %s976 = scalar_lea.vmem %s219, 48
      %v977 = vld [vmem:[%s976] sm:$0xf]
      %v978 = vld [vmem:[%s976 + $0x4] sm:$0xf]
      %v979 = vld [vmem:[%s976 + $0x8] sm:$0xf]
      %v980 = vld [vmem:[%s976 + $0xc] sm:$0xf]
      %v983 = vpack.i.b16 %v978, %v977
      %v984 = vshrl.u32 %v977, 16
      %v985 = vshrl.u32 %v978, 16
      %v986 = vpack.i.b16 %v985, %v984
      %v989 = vpack.i.b16 %v980, %v979
      %v990 = vshrl.u32 %v979, 16
      %v991 = vshrl.u32 %v980, 16
      %v992 = vpack.i.b16 %v991, %v990
      %v995 = vunpack.c.l.s4 1983009808
      %v996 = vunpack.c.0.s8 %v995
      %v997 = vlaneseq
      %v998 = vshrl.u32 %v997, 7
      %v999 = vsub.s32 %v996, %v998
      %v1000 = vrot.slane %v983, %v999
      %v1003 = vunpack.c.l.s4 1983009808
      %v1004 = vunpack.c.0.s8 %v1003
      %v1005 = vlaneseq
      %v1006 = vshrl.u32 %v1005, 7
      %v1007 = vsub.s32 %v1004, %v1006
      %v1008 = vrot.slane %v989, %v1007
      %v1009 = vcombine.low %v1000, %v1008
      %v1010 = vcombine.high %v1000, %v1008
      %v1012 = vunpack.c.l.s4 1934713408
      %v1013 = vunpack.c.0.s8 %v1012
      %v1014 = vlaneseq
      %v1015 = vshrl.u32 %v1014, 7
      %v1016 = vsub.s32 %v1013, %v1015
      %v1017 = vrot.slane %v1009, %v1016
      %v1019 = vunpack.c.l.s4 1934713408
      %v1020 = vunpack.c.0.s8 %v1019
      %v1021 = vlaneseq
      %v1022 = vshrl.u32 %v1021, 7
      %v1023 = vsub.s32 %v1020, %v1022
      %v1024 = vrot.slane %v1010, %v1023
      %v1025 = vcombine.high %v1017, 0
      %v1026 = vcombine.high %v1024, 0
      %v1029 = vunpack.c.l.s4 1983009808
      %v1030 = vunpack.c.0.s8 %v1029
      %v1031 = vlaneseq
      %v1032 = vshrl.u32 %v1031, 7
      %v1033 = vsub.s32 %v1030, %v1032
      %v1034 = vrot.slane %v986, %v1033
      %v1037 = vunpack.c.l.s4 1983009808
      %v1038 = vunpack.c.0.s8 %v1037
      %v1039 = vlaneseq
      %v1040 = vshrl.u32 %v1039, 7
      %v1041 = vsub.s32 %v1038, %v1040
      %v1042 = vrot.slane %v992, %v1041
      %v1043 = vcombine.low %v1034, %v1042
      %v1044 = vcombine.high %v1034, %v1042
      %v1046 = vunpack.c.l.s4 1934713408
      %v1047 = vunpack.c.0.s8 %v1046
      %v1048 = vlaneseq
      %v1049 = vshrl.u32 %v1048, 7
      %v1050 = vsub.s32 %v1047, %v1049
      %v1051 = vrot.slane %v1043, %v1050
      %v1053 = vunpack.c.l.s4 1934713408
      %v1054 = vunpack.c.0.s8 %v1053
      %v1055 = vlaneseq
      %v1056 = vshrl.u32 %v1055, 7
      %v1057 = vsub.s32 %v1054, %v1056
      %v1058 = vrot.slane %v1044, %v1057
      %v1059 = vcombine.high %v1051, 0
      %v1060 = vcombine.high %v1058, 0
      %v1062 = vunpack.c.l.b16 %v1051
      %v1063 = vpack.c.b16 %v1062, %v1062
      %1064 = vrot.lane.b32.xlu0 %v1063, 8
      %v1065 = vpop.permute.xlu0 %1064
      %v1067 = vunpack.c.l.b16 %v1025
      %v1068 = vpack.c.b16 %v1067, %v1067
      %1069 = vrot.lane.b32.xlu0 %v1068, 16
      %v1070 = vpop.permute.xlu0 %1069
      %v1072 = vunpack.c.l.b16 %v1059
      %v1073 = vpack.c.b16 %v1072, %v1072
      %1074 = vrot.lane.b32.xlu0 %v1073, 24
      %v1075 = vpop.permute.xlu0 %1074
      %v1077 = vunpack.c.l.b16 %v1024
      %v1078 = vpack.c.b16 %v1077, %v1077
      %1079 = vrot.lane.b32.xlu0 %v1078, 32
      %v1080 = vpop.permute.xlu0 %1079
      %v1082 = vunpack.c.l.b16 %v1058
      %v1083 = vpack.c.b16 %v1082, %v1082
      %1084 = vrot.lane.b32.xlu0 %v1083, 40
      %v1085 = vpop.permute.xlu0 %1084
      %v1087 = vunpack.c.l.b16 %v1026
      %v1088 = vpack.c.b16 %v1087, %v1087
      %1089 = vrot.lane.b32.xlu0 %v1088, 48
      %v1090 = vpop.permute.xlu0 %1089
      %v1092 = vunpack.c.l.b16 %v1060
      %v1093 = vpack.c.b16 %v1092, %v1092
      %1094 = vrot.lane.b32.xlu0 %v1093, 56
      %v1095 = vpop.permute.xlu0 %1094
      %v1098 = vsel %vm347, %v1017, %v1065
      %v1100 = vsel %vm351, %v1098, %v1070
      %v1102 = vsel %vm354, %v1100, %v1075
      %v1104 = vsel %vm357, %v1102, %v1080
      %v1106 = vsel %vm360, %v1104, %v1085
      %v1108 = vsel %vm363, %v1106, %v1090
      %v1110 = vsel %vm366, %v1108, %v1095
      %s1111 = scalar_lea.vmem %s1, 16
      %v1112 = vld [vmem:[%s1111] sm:$0xf]
      %v1114 = vsel %vm507, %v1112, 0
      %v1116 = vsel %vm511, %v1110, 0
      %1118 = vmatprep.subr.bf16.mxu0 0
      %1119 = vmatpush1.bf16.msra.mxu0 %v1116
      %1120 = vmatprep.subr.bf16.mxu0 0
      %1121 = vmatpush1.bf16.msra.mxu0 0
      %1122 = vmatprep.subr.bf16.mxu0 0
      %1123 = vmatpush1.bf16.msra.mxu0 0
      %1124 = vmatprep.subr.bf16.mxu0 0
      %1125 = vmatpush1.bf16.msra.mxu0 0
      %1126 = vmatprep.subr.bf16.mxu0 0
      %1127 = vmatpush1.bf16.msra.mxu0 0
      %1128 = vmatprep.subr.bf16.mxu0 0
      %1129 = vmatpush1.bf16.msra.mxu0 0
      %1130 = vmatprep.subr.bf16.mxu0 0
      %1131 = vmatpush1.bf16.msra.mxu0 0
      %1132 = vmatprep.subr.bf16.mxu0 0
      %1133 = vmatpush1.bf16.msra.mxu0 0
      %1134 = vmatprep.subr.bf16.mxu0 0
      %1135 = vmatpush1.bf16.msra.mxu0 0
      %1136 = vmatprep.subr.bf16.mxu0 0
      %1137 = vmatpush1.bf16.msra.mxu0 0
      %1138 = vmatprep.subr.bf16.mxu0 0
      %1139 = vmatpush1.bf16.msra.mxu0 0
      %1140 = vmatprep.subr.bf16.mxu0 0
      %1141 = vmatpush1.bf16.msra.mxu0 0
      %1142 = vmatprep.subr.bf16.mxu0 0
      %1143 = vmatpush1.bf16.msra.mxu0 0
      %1144 = vmatprep.subr.bf16.mxu0 0
      %1145 = vmatpush1.bf16.msra.mxu0 0
      %1146 = vmatprep.subr.bf16.mxu0 0
      %1147 = vmatpush1.bf16.msra.mxu0 0
      %1148 = vmatprep.subr.bf16.mxu0 0
      %1149 = vmatpush1.bf16.msra.mxu0 0
      %1150 = vmatprep.mubr.bf16.mxu0 0
      %1151 = vmatmul.mubr.bf16.gmra.mrb[0].mxu0 %v1114
      %v1152 = vpop.f32.mrb[0].mxu0
      %v1153 = vadd.f32 0.0, %v1152
      %v1154 = vpop.f32.mrb[0].mxu0
      %v1155 = vpop.f32.mrb[0].mxu0
      %v1156 = vpop.f32.mrb[0].mxu0
      %1157 = vdwg.mxu0
      %v1158 = vadd.f32 %v975, %v1153
      %v1159 = vld [vmem:[%s793] sm:$0xf]
      %v1160 = vld [vmem:[%s793 + $0x4] sm:$0xf]
      %v1161 = vld [vmem:[%s793 + $0x8] sm:$0xf]
      %v1162 = vld [vmem:[%s793 + $0xc] sm:$0xf]
      %1167 = vrot.lane.b32.xlu0 %v1159, 127
      %v1168 = vpop.permute.xlu0 %1167
      %1169 = vrot.lane.b32.xlu0 %v1160, 127
      %v1170 = vpop.permute.xlu0 %1169
      %1171 = vrot.lane.b32.xlu0 %v1161, 127
      %v1172 = vpop.permute.xlu0 %1171
      %1173 = vrot.lane.b32.xlu0 %v1162, 127
      %v1174 = vpop.permute.xlu0 %1173
      %v1177 = vpack.i.b16 %v1170, %v1168
      %v1178 = vshrl.u32 %v1168, 16
      %v1179 = vshrl.u32 %v1170, 16
      %v1180 = vpack.i.b16 %v1179, %v1178
      %v1183 = vpack.i.b16 %v1174, %v1172
      %v1184 = vshrl.u32 %v1172, 16
      %v1185 = vshrl.u32 %v1174, 16
      %v1186 = vpack.i.b16 %v1185, %v1184
      %v1189 = vunpack.c.l.s4 1983009808
      %v1190 = vunpack.c.0.s8 %v1189
      %v1191 = vlaneseq
      %v1192 = vshrl.u32 %v1191, 7
      %v1193 = vsub.s32 %v1190, %v1192
      %v1194 = vrot.slane %v1177, %v1193
      %v1197 = vunpack.c.l.s4 1983009808
      %v1198 = vunpack.c.0.s8 %v1197
      %v1199 = vlaneseq
      %v1200 = vshrl.u32 %v1199, 7
      %v1201 = vsub.s32 %v1198, %v1200
      %v1202 = vrot.slane %v1183, %v1201
      %v1203 = vcombine.low %v1194, %v1202
      %v1204 = vcombine.high %v1194, %v1202
      %v1206 = vunpack.c.l.s4 1934713408
      %v1207 = vunpack.c.0.s8 %v1206
      %v1208 = vlaneseq
      %v1209 = vshrl.u32 %v1208, 7
      %v1210 = vsub.s32 %v1207, %v1209
      %v1211 = vrot.slane %v1203, %v1210
      %v1213 = vunpack.c.l.s4 1934713408
      %v1214 = vunpack.c.0.s8 %v1213
      %v1215 = vlaneseq
      %v1216 = vshrl.u32 %v1215, 7
      %v1217 = vsub.s32 %v1214, %v1216
      %v1218 = vrot.slane %v1204, %v1217
      %v1219 = vcombine.high %v1211, 0
      %v1220 = vcombine.high %v1218, 0
      %v1223 = vunpack.c.l.s4 1983009808
      %v1224 = vunpack.c.0.s8 %v1223
      %v1225 = vlaneseq
      %v1226 = vshrl.u32 %v1225, 7
      %v1227 = vsub.s32 %v1224, %v1226
      %v1228 = vrot.slane %v1180, %v1227
      %v1231 = vunpack.c.l.s4 1983009808
      %v1232 = vunpack.c.0.s8 %v1231
      %v1233 = vlaneseq
      %v1234 = vshrl.u32 %v1233, 7
      %v1235 = vsub.s32 %v1232, %v1234
      %v1236 = vrot.slane %v1186, %v1235
      %v1237 = vcombine.low %v1228, %v1236
      %v1238 = vcombine.high %v1228, %v1236
      %v1240 = vunpack.c.l.s4 1934713408
      %v1241 = vunpack.c.0.s8 %v1240
      %v1242 = vlaneseq
      %v1243 = vshrl.u32 %v1242, 7
      %v1244 = vsub.s32 %v1241, %v1243
      %v1245 = vrot.slane %v1237, %v1244
      %v1247 = vunpack.c.l.s4 1934713408
      %v1248 = vunpack.c.0.s8 %v1247
      %v1249 = vlaneseq
      %v1250 = vshrl.u32 %v1249, 7
      %v1251 = vsub.s32 %v1248, %v1250
      %v1252 = vrot.slane %v1238, %v1251
      %v1253 = vcombine.high %v1245, 0
      %v1254 = vcombine.high %v1252, 0
      %v1256 = vunpack.c.l.b16 %v1245
      %v1257 = vpack.c.b16 %v1256, %v1256
      %1258 = vrot.lane.b32.xlu0 %v1257, 8
      %v1259 = vpop.permute.xlu0 %1258
      %v1261 = vunpack.c.l.b16 %v1219
      %v1262 = vpack.c.b16 %v1261, %v1261
      %1263 = vrot.lane.b32.xlu0 %v1262, 16
      %v1264 = vpop.permute.xlu0 %1263
      %v1266 = vunpack.c.l.b16 %v1253
      %v1267 = vpack.c.b16 %v1266, %v1266
      %1268 = vrot.lane.b32.xlu0 %v1267, 24
      %v1269 = vpop.permute.xlu0 %1268
      %v1271 = vunpack.c.l.b16 %v1218
      %v1272 = vpack.c.b16 %v1271, %v1271
      %1273 = vrot.lane.b32.xlu0 %v1272, 32
      %v1274 = vpop.permute.xlu0 %1273
      %v1276 = vunpack.c.l.b16 %v1252
      %v1277 = vpack.c.b16 %v1276, %v1276
      %1278 = vrot.lane.b32.xlu0 %v1277, 40
      %v1279 = vpop.permute.xlu0 %1278
      %v1281 = vunpack.c.l.b16 %v1220
      %v1282 = vpack.c.b16 %v1281, %v1281
      %1283 = vrot.lane.b32.xlu0 %v1282, 48
      %v1284 = vpop.permute.xlu0 %1283
      %v1286 = vunpack.c.l.b16 %v1254
      %v1287 = vpack.c.b16 %v1286, %v1286
      %1288 = vrot.lane.b32.xlu0 %v1287, 56
      %v1289 = vpop.permute.xlu0 %1288
      %v1292 = vsel %vm347, %v1211, %v1259
      %v1294 = vsel %vm351, %v1292, %v1264
      %v1296 = vsel %vm354, %v1294, %v1269
      %v1298 = vsel %vm357, %v1296, %v1274
      %v1300 = vsel %vm360, %v1298, %v1279
      %v1302 = vsel %vm363, %v1300, %v1284
      %v1304 = vsel %vm366, %v1302, %v1289
      %s1305 = scalar_lea.vmem %s1, 20
      %v1306 = vld [vmem:[%s1305] sm:$0xf]
      %v1308 = vsel %vm507, %v1306, 0
      %v1310 = vsel %vm511, %v1304, 0
      %1312 = vmatprep.subr.bf16.mxu0 0
      %1313 = vmatpush1.bf16.msra.mxu0 %v1310
      %1314 = vmatprep.subr.bf16.mxu0 0
      %1315 = vmatpush1.bf16.msra.mxu0 0
      %1316 = vmatprep.subr.bf16.mxu0 0
      %1317 = vmatpush1.bf16.msra.mxu0 0
      %1318 = vmatprep.subr.bf16.mxu0 0
      %1319 = vmatpush1.bf16.msra.mxu0 0
      %1320 = vmatprep.subr.bf16.mxu0 0
      %1321 = vmatpush1.bf16.msra.mxu0 0
      %1322 = vmatprep.subr.bf16.mxu0 0
      %1323 = vmatpush1.bf16.msra.mxu0 0
      %1324 = vmatprep.subr.bf16.mxu0 0
      %1325 = vmatpush1.bf16.msra.mxu0 0
      %1326 = vmatprep.subr.bf16.mxu0 0
      %1327 = vmatpush1.bf16.msra.mxu0 0
      %1328 = vmatprep.subr.bf16.mxu0 0
      %1329 = vmatpush1.bf16.msra.mxu0 0
      %1330 = vmatprep.subr.bf16.mxu0 0
      %1331 = vmatpush1.bf16.msra.mxu0 0
      %1332 = vmatprep.subr.bf16.mxu0 0
      %1333 = vmatpush1.bf16.msra.mxu0 0
      %1334 = vmatprep.subr.bf16.mxu0 0
      %1335 = vmatpush1.bf16.msra.mxu0 0
      %1336 = vmatprep.subr.bf16.mxu0 0
      %1337 = vmatpush1.bf16.msra.mxu0 0
      %1338 = vmatprep.subr.bf16.mxu0 0
      %1339 = vmatpush1.bf16.msra.mxu0 0
      %1340 = vmatprep.subr.bf16.mxu0 0
      %1341 = vmatpush1.bf16.msra.mxu0 0
      %1342 = vmatprep.subr.bf16.mxu0 0
      %1343 = vmatpush1.bf16.msra.mxu0 0
      %1344 = vmatprep.mubr.bf16.mxu0 0
      %1345 = vmatmul.mubr.bf16.gmra.mrb[0].mxu0 %v1308
      %v1346 = vpop.f32.mrb[0].mxu0
      %v1347 = vadd.f32 0.0, %v1346
      %v1348 = vpop.f32.mrb[0].mxu0
      %v1349 = vpop.f32.mrb[0].mxu0
      %v1350 = vpop.f32.mrb[0].mxu0
      %1351 = vdwg.mxu0
      %v1352 = vadd.f32 %v1158, %v1347
      %s1353 = scalar_lea.vmem %s219, 64
      %v1354 = vld [vmem:[%s1353] sm:$0xf]
      %v1355 = vld [vmem:[%s1353 + $0x4] sm:$0xf]
      %v1356 = vld [vmem:[%s1353 + $0x8] sm:$0xf]
      %v1357 = vld [vmem:[%s1353 + $0xc] sm:$0xf]
      %v1360 = vpack.i.b16 %v1355, %v1354
      %v1361 = vshrl.u32 %v1354, 16
      %v1362 = vshrl.u32 %v1355, 16
      %v1363 = vpack.i.b16 %v1362, %v1361
      %v1366 = vpack.i.b16 %v1357, %v1356
      %v1367 = vshrl.u32 %v1356, 16
      %v1368 = vshrl.u32 %v1357, 16
      %v1369 = vpack.i.b16 %v1368, %v1367
      %v1372 = vunpack.c.l.s4 1983009808
      %v1373 = vunpack.c.0.s8 %v1372
      %v1374 = vlaneseq
      %v1375 = vshrl.u32 %v1374, 7
      %v1376 = vsub.s32 %v1373, %v1375
      %v1377 = vrot.slane %v1360, %v1376
      %v1380 = vunpack.c.l.s4 1983009808
      %v1381 = vunpack.c.0.s8 %v1380
      %v1382 = vlaneseq
      %v1383 = vshrl.u32 %v1382, 7
      %v1384 = vsub.s32 %v1381, %v1383
      %v1385 = vrot.slane %v1366, %v1384
      %v1386 = vcombine.low %v1377, %v1385
      %v1387 = vcombine.high %v1377, %v1385
      %v1389 = vunpack.c.l.s4 1934713408
      %v1390 = vunpack.c.0.s8 %v1389
      %v1391 = vlaneseq
      %v1392 = vshrl.u32 %v1391, 7
      %v1393 = vsub.s32 %v1390, %v1392
      %v1394 = vrot.slane %v1386, %v1393
      %v1396 = vunpack.c.l.s4 1934713408
      %v1397 = vunpack.c.0.s8 %v1396
      %v1398 = vlaneseq
      %v1399 = vshrl.u32 %v1398, 7
      %v1400 = vsub.s32 %v1397, %v1399
      %v1401 = vrot.slane %v1387, %v1400
      %v1402 = vcombine.high %v1394, 0
      %v1403 = vcombine.high %v1401, 0
      %v1406 = vunpack.c.l.s4 1983009808
      %v1407 = vunpack.c.0.s8 %v1406
      %v1408 = vlaneseq
      %v1409 = vshrl.u32 %v1408, 7
      %v1410 = vsub.s32 %v1407, %v1409
      %v1411 = vrot.slane %v1363, %v1410
      %v1414 = vunpack.c.l.s4 1983009808
      %v1415 = vunpack.c.0.s8 %v1414
      %v1416 = vlaneseq
      %v1417 = vshrl.u32 %v1416, 7
      %v1418 = vsub.s32 %v1415, %v1417
      %v1419 = vrot.slane %v1369, %v1418
      %v1420 = vcombine.low %v1411, %v1419
      %v1421 = vcombine.high %v1411, %v1419
      %v1423 = vunpack.c.l.s4 1934713408
      %v1424 = vunpack.c.0.s8 %v1423
      %v1425 = vlaneseq
      %v1426 = vshrl.u32 %v1425, 7
      %v1427 = vsub.s32 %v1424, %v1426
      %v1428 = vrot.slane %v1420, %v1427
      %v1430 = vunpack.c.l.s4 1934713408
      %v1431 = vunpack.c.0.s8 %v1430
      %v1432 = vlaneseq
      %v1433 = vshrl.u32 %v1432, 7
      %v1434 = vsub.s32 %v1431, %v1433
      %v1435 = vrot.slane %v1421, %v1434
      %v1436 = vcombine.high %v1428, 0
      %v1437 = vcombine.high %v1435, 0
      %v1439 = vunpack.c.l.b16 %v1428
      %v1440 = vpack.c.b16 %v1439, %v1439
      %1441 = vrot.lane.b32.xlu0 %v1440, 8
      %v1442 = vpop.permute.xlu0 %1441
      %v1444 = vunpack.c.l.b16 %v1402
      %v1445 = vpack.c.b16 %v1444, %v1444
      %1446 = vrot.lane.b32.xlu0 %v1445, 16
      %v1447 = vpop.permute.xlu0 %1446
      %v1449 = vunpack.c.l.b16 %v1436
      %v1450 = vpack.c.b16 %v1449, %v1449
      %1451 = vrot.lane.b32.xlu0 %v1450, 24
      %v1452 = vpop.permute.xlu0 %1451
      %v1454 = vunpack.c.l.b16 %v1401
      %v1455 = vpack.c.b16 %v1454, %v1454
      %1456 = vrot.lane.b32.xlu0 %v1455, 32
      %v1457 = vpop.permute.xlu0 %1456
      %v1459 = vunpack.c.l.b16 %v1435
      %v1460 = vpack.c.b16 %v1459, %v1459
      %1461 = vrot.lane.b32.xlu0 %v1460, 40
      %v1462 = vpop.permute.xlu0 %1461
      %v1464 = vunpack.c.l.b16 %v1403
      %v1465 = vpack.c.b16 %v1464, %v1464
      %1466 = vrot.lane.b32.xlu0 %v1465, 48
      %v1467 = vpop.permute.xlu0 %1466
      %v1469 = vunpack.c.l.b16 %v1437
      %v1470 = vpack.c.b16 %v1469, %v1469
      %1471 = vrot.lane.b32.xlu0 %v1470, 56
      %v1472 = vpop.permute.xlu0 %1471
      %v1475 = vsel %vm347, %v1394, %v1442
      %v1477 = vsel %vm351, %v1475, %v1447
      %v1479 = vsel %vm354, %v1477, %v1452
      %v1481 = vsel %vm357, %v1479, %v1457
      %v1483 = vsel %vm360, %v1481, %v1462
      %v1485 = vsel %vm363, %v1483, %v1467
      %v1487 = vsel %vm366, %v1485, %v1472
      %s1488 = scalar_lea.vmem %s1, 24
      %v1489 = vld [vmem:[%s1488] sm:$0xf]
      %v1491 = vsel %vm507, %v1489, 0
      %v1493 = vsel %vm511, %v1487, 0
      %1495 = vmatprep.subr.bf16.mxu0 0
      %1496 = vmatpush1.bf16.msra.mxu0 %v1493
      %1497 = vmatprep.subr.bf16.mxu0 0
      %1498 = vmatpush1.bf16.msra.mxu0 0
      %1499 = vmatprep.subr.bf16.mxu0 0
      %1500 = vmatpush1.bf16.msra.mxu0 0
      %1501 = vmatprep.subr.bf16.mxu0 0
      %1502 = vmatpush1.bf16.msra.mxu0 0
      %1503 = vmatprep.subr.bf16.mxu0 0
      %1504 = vmatpush1.bf16.msra.mxu0 0
      %1505 = vmatprep.subr.bf16.mxu0 0
      %1506 = vmatpush1.bf16.msra.mxu0 0
      %1507 = vmatprep.subr.bf16.mxu0 0
      %1508 = vmatpush1.bf16.msra.mxu0 0
      %1509 = vmatprep.subr.bf16.mxu0 0
      %1510 = vmatpush1.bf16.msra.mxu0 0
      %1511 = vmatprep.subr.bf16.mxu0 0
      %1512 = vmatpush1.bf16.msra.mxu0 0
      %1513 = vmatprep.subr.bf16.mxu0 0
      %1514 = vmatpush1.bf16.msra.mxu0 0
      %1515 = vmatprep.subr.bf16.mxu0 0
      %1516 = vmatpush1.bf16.msra.mxu0 0
      %1517 = vmatprep.subr.bf16.mxu0 0
      %1518 = vmatpush1.bf16.msra.mxu0 0
      %1519 = vmatprep.subr.bf16.mxu0 0
      %1520 = vmatpush1.bf16.msra.mxu0 0
      %1521 = vmatprep.subr.bf16.mxu0 0
      %1522 = vmatpush1.bf16.msra.mxu0 0
      %1523 = vmatprep.subr.bf16.mxu0 0
      %1524 = vmatpush1.bf16.msra.mxu0 0
      %1525 = vmatprep.subr.bf16.mxu0 0
      %1526 = vmatpush1.bf16.msra.mxu0 0
      %1527 = vmatprep.mubr.bf16.mxu0 0
      %1528 = vmatmul.mubr.bf16.gmra.mrb[0].mxu0 %v1491
      %v1529 = vpop.f32.mrb[0].mxu0
      %v1530 = vadd.f32 0.0, %v1529
      %v1531 = vpop.f32.mrb[0].mxu0
      %v1532 = vpop.f32.mrb[0].mxu0
      %v1533 = vpop.f32.mrb[0].mxu0
      %1534 = vdwg.mxu0
      %v1535 = vadd.f32 %v1352, %v1530
      %s1536 = scalar_lea.vmem %s219, 80
      %v1537 = vld [vmem:[%s1536] sm:$0xf]
      %v1538 = vld [vmem:[%s1536 + $0x4] sm:$0xf]
      %v1539 = vld [vmem:[%s1536 + $0x8] sm:$0xf]
      %v1540 = vld [vmem:[%s1536 + $0xc] sm:$0xf]
      %v1543 = vpack.i.b16 %v1538, %v1537
      %v1544 = vshrl.u32 %v1537, 16
      %v1545 = vshrl.u32 %v1538, 16
      %v1546 = vpack.i.b16 %v1545, %v1544
      %v1549 = vpack.i.b16 %v1540, %v1539
      %v1550 = vshrl.u32 %v1539, 16
      %v1551 = vshrl.u32 %v1540, 16
      %v1552 = vpack.i.b16 %v1551, %v1550
      %v1555 = vunpack.c.l.s4 1983009808
      %v1556 = vunpack.c.0.s8 %v1555
      %v1557 = vlaneseq
      %v1558 = vshrl.u32 %v1557, 7
      %v1559 = vsub.s32 %v1556, %v1558
      %v1560 = vrot.slane %v1543, %v1559
      %v1563 = vunpack.c.l.s4 1983009808
      %v1564 = vunpack.c.0.s8 %v1563
      %v1565 = vlaneseq
      %v1566 = vshrl.u32 %v1565, 7
      %v1567 = vsub.s32 %v1564, %v1566
      %v1568 = vrot.slane %v1549, %v1567
      %v1569 = vcombine.low %v1560, %v1568
      %v1570 = vcombine.high %v1560, %v1568
      %v1572 = vunpack.c.l.s4 1934713408
      %v1573 = vunpack.c.0.s8 %v1572
      %v1574 = vlaneseq
      %v1575 = vshrl.u32 %v1574, 7
      %v1576 = vsub.s32 %v1573, %v1575
      %v1577 = vrot.slane %v1569, %v1576
      %v1579 = vunpack.c.l.s4 1934713408
      %v1580 = vunpack.c.0.s8 %v1579
      %v1581 = vlaneseq
      %v1582 = vshrl.u32 %v1581, 7
      %v1583 = vsub.s32 %v1580, %v1582
      %v1584 = vrot.slane %v1570, %v1583
      %v1585 = vcombine.high %v1577, 0
      %v1586 = vcombine.high %v1584, 0
      %v1589 = vunpack.c.l.s4 1983009808
      %v1590 = vunpack.c.0.s8 %v1589
      %v1591 = vlaneseq
      %v1592 = vshrl.u32 %v1591, 7
      %v1593 = vsub.s32 %v1590, %v1592
      %v1594 = vrot.slane %v1546, %v1593
      %v1597 = vunpack.c.l.s4 1983009808
      %v1598 = vunpack.c.0.s8 %v1597
      %v1599 = vlaneseq
      %v1600 = vshrl.u32 %v1599, 7
      %v1601 = vsub.s32 %v1598, %v1600
      %v1602 = vrot.slane %v1552, %v1601
      %v1603 = vcombine.low %v1594, %v1602
      %v1604 = vcombine.high %v1594, %v1602
      %v1606 = vunpack.c.l.s4 1934713408
      %v1607 = vunpack.c.0.s8 %v1606
      %v1608 = vlaneseq
      %v1609 = vshrl.u32 %v1608, 7
      %v1610 = vsub.s32 %v1607, %v1609
      %v1611 = vrot.slane %v1603, %v1610
      %v1613 = vunpack.c.l.s4 1934713408
      %v1614 = vunpack.c.0.s8 %v1613
      %v1615 = vlaneseq
      %v1616 = vshrl.u32 %v1615, 7
      %v1617 = vsub.s32 %v1614, %v1616
      %v1618 = vrot.slane %v1604, %v1617
      %v1619 = vcombine.high %v1611, 0
      %v1620 = vcombine.high %v1618, 0
      %v1622 = vunpack.c.l.b16 %v1611
      %v1623 = vpack.c.b16 %v1622, %v1622
      %1624 = vrot.lane.b32.xlu0 %v1623, 8
      %v1625 = vpop.permute.xlu0 %1624
      %v1627 = vunpack.c.l.b16 %v1585
      %v1628 = vpack.c.b16 %v1627, %v1627
      %1629 = vrot.lane.b32.xlu0 %v1628, 16
      %v1630 = vpop.permute.xlu0 %1629
      %v1632 = vunpack.c.l.b16 %v1619
      %v1633 = vpack.c.b16 %v1632, %v1632
      %1634 = vrot.lane.b32.xlu0 %v1633, 24
      %v1635 = vpop.permute.xlu0 %1634
      %v1637 = vunpack.c.l.b16 %v1584
      %v1638 = vpack.c.b16 %v1637, %v1637
      %1639 = vrot.lane.b32.xlu0 %v1638, 32
      %v1640 = vpop.permute.xlu0 %1639
      %v1642 = vunpack.c.l.b16 %v1618
      %v1643 = vpack.c.b16 %v1642, %v1642
      %1644 = vrot.lane.b32.xlu0 %v1643, 40
      %v1645 = vpop.permute.xlu0 %1644
      %v1647 = vunpack.c.l.b16 %v1586
      %v1648 = vpack.c.b16 %v1647, %v1647
      %1649 = vrot.lane.b32.xlu0 %v1648, 48
      %v1650 = vpop.permute.xlu0 %1649
      %v1652 = vunpack.c.l.b16 %v1620
      %v1653 = vpack.c.b16 %v1652, %v1652
      %1654 = vrot.lane.b32.xlu0 %v1653, 56
      %v1655 = vpop.permute.xlu0 %1654
      %v1658 = vsel %vm347, %v1577, %v1625
      %v1660 = vsel %vm351, %v1658, %v1630
      %v1662 = vsel %vm354, %v1660, %v1635
      %v1664 = vsel %vm357, %v1662, %v1640
      %v1666 = vsel %vm360, %v1664, %v1645
      %v1668 = vsel %vm363, %v1666, %v1650
      %v1670 = vsel %vm366, %v1668, %v1655
      %s1671 = scalar_lea.vmem %s1, 28
      %v1672 = vld [vmem:[%s1671] sm:$0xf]
      %v1674 = vsel %vm507, %v1672, 0
      %v1676 = vsel %vm511, %v1670, 0
      %1678 = vmatprep.subr.bf16.mxu0 0
      %1679 = vmatpush1.bf16.msra.mxu0 %v1676
      %1680 = vmatprep.subr.bf16.mxu0 0
      %1681 = vmatpush1.bf16.msra.mxu0 0
      %1682 = vmatprep.subr.bf16.mxu0 0
      %1683 = vmatpush1.bf16.msra.mxu0 0
      %1684 = vmatprep.subr.bf16.mxu0 0
      %1685 = vmatpush1.bf16.msra.mxu0 0
      %1686 = vmatprep.subr.bf16.mxu0 0
      %1687 = vmatpush1.bf16.msra.mxu0 0
      %1688 = vmatprep.subr.bf16.mxu0 0
      %1689 = vmatpush1.bf16.msra.mxu0 0
      %1690 = vmatprep.subr.bf16.mxu0 0
      %1691 = vmatpush1.bf16.msra.mxu0 0
      %1692 = vmatprep.subr.bf16.mxu0 0
      %1693 = vmatpush1.bf16.msra.mxu0 0
      %1694 = vmatprep.subr.bf16.mxu0 0
      %1695 = vmatpush1.bf16.msra.mxu0 0
      %1696 = vmatprep.subr.bf16.mxu0 0
      %1697 = vmatpush1.bf16.msra.mxu0 0
      %1698 = vmatprep.subr.bf16.mxu0 0
      %1699 = vmatpush1.bf16.msra.mxu0 0
      %1700 = vmatprep.subr.bf16.mxu0 0
      %1701 = vmatpush1.bf16.msra.mxu0 0
      %1702 = vmatprep.subr.bf16.mxu0 0
      %1703 = vmatpush1.bf16.msra.mxu0 0
      %1704 = vmatprep.subr.bf16.mxu0 0
      %1705 = vmatpush1.bf16.msra.mxu0 0
      %1706 = vmatprep.subr.bf16.mxu0 0
      %1707 = vmatpush1.bf16.msra.mxu0 0
      %1708 = vmatprep.subr.bf16.mxu0 0
      %1709 = vmatpush1.bf16.msra.mxu0 0
      %1710 = vmatprep.mubr.bf16.mxu0 0
      %1711 = vmatmul.mubr.bf16.gmra.mrb[0].mxu0 %v1674
      %v1712 = vpop.f32.mrb[0].mxu0
      %v1713 = vadd.f32 0.0, %v1712
      %v1714 = vpop.f32.mrb[0].mxu0
      %v1715 = vpop.f32.mrb[0].mxu0
      %v1716 = vpop.f32.mrb[0].mxu0
      %1717 = vdwg.mxu0
      %v1718 = vadd.f32 %v1535, %v1713
      %v1719 = vld [vmem:[%s1353] sm:$0xf]
      %v1720 = vld [vmem:[%s1353 + $0x4] sm:$0xf]
      %v1721 = vld [vmem:[%s1353 + $0x8] sm:$0xf]
      %v1722 = vld [vmem:[%s1353 + $0xc] sm:$0xf]
      %1727 = vrot.lane.b32.xlu0 %v1719, 127
      %v1728 = vpop.permute.xlu0 %1727
      %1729 = vrot.lane.b32.xlu0 %v1720, 127
      %v1730 = vpop.permute.xlu0 %1729
      %1731 = vrot.lane.b32.xlu0 %v1721, 127
      %v1732 = vpop.permute.xlu0 %1731
      %1733 = vrot.lane.b32.xlu0 %v1722, 127
      %v1734 = vpop.permute.xlu0 %1733
      %v1737 = vpack.i.b16 %v1730, %v1728
      %v1738 = vshrl.u32 %v1728, 16
      %v1739 = vshrl.u32 %v1730, 16
      %v1740 = vpack.i.b16 %v1739, %v1738
      %v1743 = vpack.i.b16 %v1734, %v1732
      %v1744 = vshrl.u32 %v1732, 16
      %v1745 = vshrl.u32 %v1734, 16
      %v1746 = vpack.i.b16 %v1745, %v1744
      %v1749 = vunpack.c.l.s4 1983009808
      %v1750 = vunpack.c.0.s8 %v1749
      %v1751 = vlaneseq
      %v1752 = vshrl.u32 %v1751, 7
      %v1753 = vsub.s32 %v1750, %v1752
      %v1754 = vrot.slane %v1737, %v1753
      %v1757 = vunpack.c.l.s4 1983009808
      %v1758 = vunpack.c.0.s8 %v1757
      %v1759 = vlaneseq
      %v1760 = vshrl.u32 %v1759, 7
      %v1761 = vsub.s32 %v1758, %v1760
      %v1762 = vrot.slane %v1743, %v1761
      %v1763 = vcombine.low %v1754, %v1762
      %v1764 = vcombine.high %v1754, %v1762
      %v1766 = vunpack.c.l.s4 1934713408
      %v1767 = vunpack.c.0.s8 %v1766
      %v1768 = vlaneseq
      %v1769 = vshrl.u32 %v1768, 7
      %v1770 = vsub.s32 %v1767, %v1769
      %v1771 = vrot.slane %v1763, %v1770
      %v1773 = vunpack.c.l.s4 1934713408
      %v1774 = vunpack.c.0.s8 %v1773
      %v1775 = vlaneseq
      %v1776 = vshrl.u32 %v1775, 7
      %v1777 = vsub.s32 %v1774, %v1776
      %v1778 = vrot.slane %v1764, %v1777
      %v1779 = vcombine.high %v1771, 0
      %v1780 = vcombine.high %v1778, 0
      %v1783 = vunpack.c.l.s4 1983009808
      %v1784 = vunpack.c.0.s8 %v1783
      %v1785 = vlaneseq
      %v1786 = vshrl.u32 %v1785, 7
      %v1787 = vsub.s32 %v1784, %v1786
      %v1788 = vrot.slane %v1740, %v1787
      %v1791 = vunpack.c.l.s4 1983009808
      %v1792 = vunpack.c.0.s8 %v1791
      %v1793 = vlaneseq
      %v1794 = vshrl.u32 %v1793, 7
      %v1795 = vsub.s32 %v1792, %v1794
      %v1796 = vrot.slane %v1746, %v1795
      %v1797 = vcombine.low %v1788, %v1796
      %v1798 = vcombine.high %v1788, %v1796
      %v1800 = vunpack.c.l.s4 1934713408
      %v1801 = vunpack.c.0.s8 %v1800
      %v1802 = vlaneseq
      %v1803 = vshrl.u32 %v1802, 7
      %v1804 = vsub.s32 %v1801, %v1803
      %v1805 = vrot.slane %v1797, %v1804
      %v1807 = vunpack.c.l.s4 1934713408
      %v1808 = vunpack.c.0.s8 %v1807
      %v1809 = vlaneseq
      %v1810 = vshrl.u32 %v1809, 7
      %v1811 = vsub.s32 %v1808, %v1810
      %v1812 = vrot.slane %v1798, %v1811
      %v1813 = vcombine.high %v1805, 0
      %v1814 = vcombine.high %v1812, 0
      %v1816 = vunpack.c.l.b16 %v1805
      %v1817 = vpack.c.b16 %v1816, %v1816
      %1818 = vrot.lane.b32.xlu0 %v1817, 8
      %v1819 = vpop.permute.xlu0 %1818
      %v1821 = vunpack.c.l.b16 %v1779
      %v1822 = vpack.c.b16 %v1821, %v1821
      %1823 = vrot.lane.b32.xlu0 %v1822, 16
      %v1824 = vpop.permute.xlu0 %1823
      %v1826 = vunpack.c.l.b16 %v1813
      %v1827 = vpack.c.b16 %v1826, %v1826
      %1828 = vrot.lane.b32.xlu0 %v1827, 24
      %v1829 = vpop.permute.xlu0 %1828
      %v1831 = vunpack.c.l.b16 %v1778
      %v1832 = vpack.c.b16 %v1831, %v1831
      %1833 = vrot.lane.b32.xlu0 %v1832, 32
      %v1834 = vpop.permute.xlu0 %1833
      %v1836 = vunpack.c.l.b16 %v1812
      %v1837 = vpack.c.b16 %v1836, %v1836
      %1838 = vrot.lane.b32.xlu0 %v1837, 40
      %v1839 = vpop.permute.xlu0 %1838
      %v1841 = vunpack.c.l.b16 %v1780
      %v1842 = vpack.c.b16 %v1841, %v1841
      %1843 = vrot.lane.b32.xlu0 %v1842, 48
      %v1844 = vpop.permute.xlu0 %1843
      %v1846 = vunpack.c.l.b16 %v1814
      %v1847 = vpack.c.b16 %v1846, %v1846
      %1848 = vrot.lane.b32.xlu0 %v1847, 56
      %v1849 = vpop.permute.xlu0 %1848
      %v1852 = vsel %vm347, %v1771, %v1819
      %v1854 = vsel %vm351, %v1852, %v1824
      %v1856 = vsel %vm354, %v1854, %v1829
      %v1858 = vsel %vm357, %v1856, %v1834
      %v1860 = vsel %vm360, %v1858, %v1839
      %v1862 = vsel %vm363, %v1860, %v1844
      %v1864 = vsel %vm366, %v1862, %v1849
      %s1865 = scalar_lea.vmem %s1, 32
      %v1866 = vld [vmem:[%s1865] sm:$0xf]
      %v1868 = vsel %vm507, %v1866, 0
      %v1870 = vsel %vm511, %v1864, 0
      %1872 = vmatprep.subr.bf16.mxu0 0
      %1873 = vmatpush1.bf16.msra.mxu0 %v1870
      %1874 = vmatprep.subr.bf16.mxu0 0
      %1875 = vmatpush1.bf16.msra.mxu0 0
      %1876 = vmatprep.subr.bf16.mxu0 0
      %1877 = vmatpush1.bf16.msra.mxu0 0
      %1878 = vmatprep.subr.bf16.mxu0 0
      %1879 = vmatpush1.bf16.msra.mxu0 0
      %1880 = vmatprep.subr.bf16.mxu0 0
      %1881 = vmatpush1.bf16.msra.mxu0 0
      %1882 = vmatprep.subr.bf16.mxu0 0
      %1883 = vmatpush1.bf16.msra.mxu0 0
      %1884 = vmatprep.subr.bf16.mxu0 0
      %1885 = vmatpush1.bf16.msra.mxu0 0
      %1886 = vmatprep.subr.bf16.mxu0 0
      %1887 = vmatpush1.bf16.msra.mxu0 0
      %1888 = vmatprep.subr.bf16.mxu0 0
      %1889 = vmatpush1.bf16.msra.mxu0 0
      %1890 = vmatprep.subr.bf16.mxu0 0
      %1891 = vmatpush1.bf16.msra.mxu0 0
      %1892 = vmatprep.subr.bf16.mxu0 0
      %1893 = vmatpush1.bf16.msra.mxu0 0
      %1894 = vmatprep.subr.bf16.mxu0 0
      %1895 = vmatpush1.bf16.msra.mxu0 0
      %1896 = vmatprep.subr.bf16.mxu0 0
      %1897 = vmatpush1.bf16.msra.mxu0 0
      %1898 = vmatprep.subr.bf16.mxu0 0
      %1899 = vmatpush1.bf16.msra.mxu0 0
      %1900 = vmatprep.subr.bf16.mxu0 0
      %1901 = vmatpush1.bf16.msra.mxu0 0
      %1902 = vmatprep.subr.bf16.mxu0 0
      %1903 = vmatpush1.bf16.msra.mxu0 0
      %1904 = vmatprep.mubr.bf16.mxu0 0
      %1905 = vmatmul.mubr.bf16.gmra.mrb[0].mxu0 %v1868
      %v1906 = vpop.f32.mrb[0].mxu0
      %v1907 = vadd.f32 0.0, %v1906
      %v1908 = vpop.f32.mrb[0].mxu0
      %v1909 = vpop.f32.mrb[0].mxu0
      %v1910 = vpop.f32.mrb[0].mxu0
      %1911 = vdwg.mxu0
      %v1912 = vadd.f32 %v1718, %v1907
      %v1913 = vld [vmem:[%s2] sm:$0xff]
      %1915 = vset.pattern.permute.xlu0 0
      %1916 = vperm.xlu0 %1915, %v1913
      %v1917 = vpop.permute.xlu0 %1916
      %v1919 = vmul.f32 %v1912, %v1917
      %v1920 = vld [vmem:[%s3] sm:$0xff]
      %1922 = vset.pattern.permute.xlu0 0
      %1923 = vperm.xlu0 %1922, %v1920
      %v1924 = vpop.permute.xlu0 %1923
      %v1926 = vadd.f32 %v1919, %v1924
      %v1927 = vmax.f32 %v1926, 0.0
      %vm1928 = vcmask 523264
      %1929 = vst.msk [vmem:[%s226] sm:$0xff] %vm1928, %v1927
      %p1930 = scmp.lt.s32.totalorder %s19, 1
      %s1931 = scalar_select %p1930, %s19, 1
      %p1932 = scmp.lt.s32.totalorder %s20, 0
      %s1933 = scalar_select %p1932, %s20, 0
      %s1934 = sadd.s32 %s1933, %s1931
      %s1935 = smul.addr %s1934, 8
      %s1936 = scalar_lea.vmem %s4, %s1935
      // Predicated region
      $region37: #{encoder_forward.3} parent=35 // pred_check
        %p1937 = pneg %p138
      $region38: #{encoder_forward.3} parent=35 // pred_check_branch
        %1939 = sbr.rel (%p1937) target = $region40
      $region39: #{encoder_forward.3} parent=35 // pred_region
        _
      $region40: #{encoder_forward.3} parent=35 // pred_fallthru
        _
    $region36: #{encoder_forward.3} parent=5 // pred_fallthru
      _
    %p1940 = scmp.le.s32.totalorder 2, %s10
    // Predicated region
    $region41: #{encoder_forward.3} parent=5 // pred_check
      %p1941 = pneg %p1940
    $region42: #{encoder_forward.3} parent=5 // pred_check_branch
      %1943 = sbr.rel (%p1941) target = $region44
    $region43: #{encoder_forward.3} parent=5 // pred_region
      %s1944 = ssub.s32 %s10, 2
      // Predicated region
      $region45: #{encoder_forward.3} parent=43 // pred_check
        %p1945 = pneg %p144
      $region46: #{encoder_forward.3} parent=43 // pred_check_branch
        %1947 = sbr.rel (%p1945) target = $region48
      $region47: #{encoder_forward.3} parent=43 // pred_region
        %p1948 = scmp.lt.s32.totalorder %s21, 1
        %s1949 = scalar_select %p1948, %s21, 1
        %p1950 = scmp.lt.s32.totalorder %s22, 0
        %s1951 = scalar_select %p1950, %s22, 0
        %s1952 = sadd.s32 %s1951, %s1949
        %s1953 = smul.addr %s1952, 8
        %s1954 = scalar_lea.vmem %s4, %s1953
      $region48: #{encoder_forward.3} parent=43 // pred_fallthru
        _
    $region44: #{encoder_forward.3} parent=5 // pred_fallthru
      _
  $region6: #{encoder_forward.3} parent=0 // loop_footer
    %s14 = sadd.s32 1, %s10
  $region7: #{encoder_forward.3} parent=0 // loop_footer_branch
    %9 = sbr.rel target = $region3
  $region8: #{encoder_forward.3} parent=0 // loop_exit
    _

</llo_original>
